<compile_context>
chip_gen: v7x
topology: tpu7x:2x2x1
jax: 0.10.0
libtpu: 0.0.40
codegen_flags: <defaults>
</compile_context>

<pallas_src>
import jax
import jax.numpy as jnp
from jax.experimental import pallas as pl
from jax.experimental.pallas import tpu as pltpu

NEG_SLOPE = 0.01  # nn.LeakyReLU() default


def _leaky(x):
    return jnp.where(x > 0, x, NEG_SLOPE * x)


def hyperspa_kernel(ad_ref, x_ref, resT_ref, nrep_ref, rep_ref, wf_ref, o_ref):
    # ad_ref  : (btt, H, N)   adj_dynamics for this tile of flattened (b,t)
    # x_ref   : (btt, N, D)   input node features (eb) for this tile
    # resT_ref: (D, btt*N)    residual + per-node bias, pre-transposed (lane-dense)
    # nrep_ref: (N, E*D)      node_embeddings[n,e] replicated D times along lanes
    # rep_ref : (D, E*D)      0/1 lane-replication matrix (eye(D) tiled E times)
    # wf_ref  : (E*D, D)      weights_pool reshaped (e-major, i-minor)
    # o_ref   : (D, btt*N)    lane-dense output slab
    ad = ad_ref[...]
    x = x_ref[...]
    btt, n, d = x.shape

    # hyperEmbeds / retEmbeds: batched contractions over the whole tile.
    # The second einsum contracts H with a transposed LHS, so no adT operand.
    hyper = _leaky(jnp.einsum("bhn,bnd->bhd", ad, x,
                              preferred_element_type=jnp.float32))        # (btt,H,D)
    ret = _leaky(jnp.einsum("bhn,bhd->bnd", ad, hyper,
                            preferred_element_type=jnp.float32))          # (btt,N,D)

    # Fused per-node projection ("Z trick"):
    #   out[(b,n),o] = sum_{e,i} ret[b,n,i] * node_emb[n,e] * weights_pool[e,i,o]
    ret2 = ret.reshape(btt * n, d)                                         # leading-dim merge (layout-free)
    ret_rep = jnp.dot(ret2, rep_ref[...],
                      preferred_element_type=jnp.float32)                  # (btt*N, E*D) lane replication on MXU
    # Broadcast the (N, E*D) node replication over the leading btt axis:
    # leading-dim split -> multiply -> leading-dim merge (all layout-free).
    z = (ret_rep.reshape(btt, n, -1) * nrep_ref[...]).reshape(btt * n, -1)  # (btt*N, E*D)

    # Projection emitted directly transposed (replaces the eye-matmul transpose):
    #   outT[o,(b,n)] = sum_{ei} wf[ei,o] * z[(b,n),ei]
    outT = jax.lax.dot_general(wf_ref[...], z, (((0,), (1,)), ((), ())),
                               preferred_element_type=jnp.float32)          # (D, btt*N)

    # Residual + bias already transposed from the wrapper; lane-dense store.
    o_ref[...] = _leaky(outT + resT_ref[...]).astype(o_ref.dtype)


def _num_tensorcores_per_chip():
    try:
        kind = jax.devices()[0].device_kind.lower()
    except Exception:
        return 1
    return 2 if "v7" in kind else 1


def _forward_impl(eb, node_embeddings, time_eb, adj, weights_pool, bias_pool, *, grid):
    B, T, N, D = eb.shape
    E = node_embeddings.shape[1]
    H = adj.shape[1]
    BT = B * T
    btt = BT // grid

    eb3 = eb.reshape(BT, N, D)
    time2 = time_eb.reshape(BT, E)

    # adj_dynamics stays in the (jitted, fused) wrapper: one small (BT,E)@(E,H*N)
    # einsum, ~KiB-scale HBM traffic.
    # TODO(synk): fusing it in-kernel needs a (btt, H*N) -> (btt, H, N)
    # lane-splitting reshape (or a rank-3 dot_general), both Mosaic lowering
    # corner cases at these shapes; deferred to keep the kernel robust.
    adj_dyn = jnp.einsum("bk,khn->bhn", time2, adj)                        # (BT, H, N)

    # Per-node bias folded into the transposed residual: zero extra operands.
    bias = node_embeddings @ bias_pool                                     # (N, D)
    resT = (eb3 + bias[None, :, :]).reshape(BT * N, D).T                   # (D, BT*N)

    # Grid-invariant operands of the fused projection (passed once, not tiled).
    nrep = jnp.repeat(node_embeddings, D, axis=1)                          # (N, E*D)
    rep = jnp.tile(jnp.eye(D, dtype=eb.dtype), (1, E))                     # (D, E*D)
    wf = weights_pool.reshape(E * D, D)                                    # (E*D, D)

    in_specs = [
        pl.BlockSpec((btt, H, N), lambda i: (i, 0, 0)),      # adj_dyn tile
        pl.BlockSpec((btt, N, D), lambda i: (i, 0, 0)),      # eb tile
        pl.BlockSpec((D, btt * N), lambda i: (0, i)),        # residual+bias (transposed)
        pl.BlockSpec((N, E * D), lambda i: (0, 0)),          # node replication (once)
        pl.BlockSpec((D, E * D), lambda i: (0, 0)),          # lane-replication matrix
        pl.BlockSpec((E * D, D), lambda i: (0, 0)),          # weights_pool (flat)
    ]
    # TODO(synk): on v7x (grid=2) the three grid-invariant operands could use
    # pipeline_mode=pl.Buffered(1) to skip pointless double-buffering; left at
    # the default here since the whole footprint is well under 1 MiB.

    out_t = pl.pallas_call(
        hyperspa_kernel,
        out_shape=jax.ShapeDtypeStruct((D, BT * N), eb.dtype),
        grid_spec=pltpu.PrefetchScalarGridSpec(
            num_scalar_prefetch=0,
            grid=(grid,),
            in_specs=in_specs,
            out_specs=pl.BlockSpec((D, btt * N), lambda i: (0, i)),  # lane-dense slab
        ),
        compiler_params=pltpu.CompilerParams(
            dimension_semantics=("parallel",)),
    )(adj_dyn, eb3, resT, nrep, rep, wf)

    # (D, BT*N) -> (B, T, N, D)
    return out_t.T.reshape(B, T, N, D)


_forward_jit = jax.jit(_forward_impl, static_argnames=("grid",))


def hyperspa_forward(eb, node_embeddings, time_eb, adj, weights_pool, bias_pool):
    B, T, N, _ = eb.shape
    BT = B * T
    # 2 parallel grid steps only on 2-TensorCore chips (v7x), and only if the
    # per-step lane-dense output block stays a multiple of 128 lanes; otherwise
    # a single step avoids the ~0.35 us/step overhead on single-TC v5e/v6e.
    grid = 1
    if _num_tensorcores_per_chip() >= 2 and BT % 2 == 0 and ((BT // 2) * N) % 128 == 0:
        grid = 2
    return _forward_jit(eb, node_embeddings, time_eb, adj, weights_pool,
                        bias_pool, grid=grid)


def hyperspa_ref(eb, node_embeddings, time_eb, adj, weights_pool, bias_pool):
    """Pure-JAX reference mirroring the PyTorch forward (permute bug = no-op)."""
    adj_dyn = jnp.einsum("btk,khn->bthn", time_eb, adj)
    hyper = _leaky(jnp.einsum("bthn,btnd->bthd", adj_dyn, eb))
    ret = _leaky(
        jnp.einsum("btnh,bthd->btnd", jnp.swapaxes(adj_dyn, -1, -2), hyper)
    )
    weights = jnp.einsum("ne,eio->nio", node_embeddings, weights_pool)
    bias = node_embeddings @ bias_pool
    out = jnp.einsum("btni,nio->btno", ret, weights) + bias
    return _leaky(out + eb)


if __name__ == "__main__":
    # Module config: num_node=N, dim_in=dim_out=D, embed_dim=E, HS_Spa=H
    B, T, N, D, E, H = 2, 8, 16, 32, 8, 8

    key = jax.random.PRNGKey(0)
    k_eb, k_node, k_time, k_adj, k_w, k_b = jax.random.split(key, 6)

    # Inputs
    eb = jax.random.normal(k_eb, (B, T, N, D), dtype=jnp.float32)
    node_embeddings = jax.random.normal(k_node, (N, E), dtype=jnp.float32)
    time_eb = jax.random.normal(k_time, (B, T, E), dtype=jnp.float32)

    # Parameters (torch.FloatTensor pools are uninitialized in the reference, so
    # they are simply initialized with small normals here).
    adj = jax.random.normal(k_adj, (E, H, N), dtype=jnp.float32)
    weights_pool = 0.1 * jax.random.normal(k_w, (E, D, D), dtype=jnp.float32)
    bias_pool = 0.1 * jax.random.normal(k_b, (E, D), dtype=jnp.float32)

    out = hyperspa_forward(eb, node_embeddings, time_eb, adj, weights_pool, bias_pool)
    out = jax.block_until_ready(out)

    ref = hyperspa_ref(eb, node_embeddings, time_eb, adj, weights_pool, bias_pool)
    assert out.shape == (B, T, N, D)
    assert jnp.allclose(out, ref, rtol=1e-3, atol=1e-3), "Pallas kernel mismatch vs reference"

    print("KERNEL_OK")
</pallas_src>

<mosaic_0001>
module attributes {stable_mosaic.version = 11 : i64} {
  func.func @hyperspa_kernel(%arg0: i32, %arg1: memref<16x8x16xf32, #tpu.memory_space<vmem>>, %arg2: memref<16x16x32xf32, #tpu.memory_space<vmem>>, %arg3: memref<32x256xf32, #tpu.memory_space<vmem>>, %arg4: memref<16x256xf32, #tpu.memory_space<vmem>>, %arg5: memref<32x256xf32, #tpu.memory_space<vmem>>, %arg6: memref<256x32xf32, #tpu.memory_space<vmem>>, %arg7: memref<32x256xf32, #tpu.memory_space<vmem>>) attributes {dimension_semantics = [#tpu.dimension_semantics<parallel>], iteration_bounds = array<i64: 1>, scalar_prefetch = 0 : i64, scratch_operands = 0 : i64, tpu.core_type = #tpu.core_type<tc>, window_params = [{transform_indices = @transform_0, window_bounds = array<i64: 16, 8, 16>}, {transform_indices = @transform_1, window_bounds = array<i64: 16, 16, 32>}, {transform_indices = @transform_2, window_bounds = array<i64: 32, 256>}, {pipeline_mode = #tpu.pipeline_mode<synchronous>, transform_indices = @transform_3, window_bounds = array<i64: 16, 256>}, {pipeline_mode = #tpu.pipeline_mode<synchronous>, transform_indices = @transform_4, window_bounds = array<i64: 32, 256>}, {pipeline_mode = #tpu.pipeline_mode<synchronous>, transform_indices = @transform_5, window_bounds = array<i64: 256, 32>}, {transform_indices = @transform_6, window_bounds = array<i64: 32, 256>}]} {
    %c0 = arith.constant 0 : index
    %c0_0 = arith.constant 0 : index
    %c0_1 = arith.constant 0 : index
    %0 = vector.load %arg1[%c0, %c0_0, %c0_1] : memref<16x8x16xf32, #tpu.memory_space<vmem>>, vector<16x8x16xf32>
    %c0_2 = arith.constant 0 : index
    %c0_3 = arith.constant 0 : index
    %c0_4 = arith.constant 0 : index
    %1 = vector.load %arg2[%c0_2, %c0_3, %c0_4] : memref<16x16x32xf32, #tpu.memory_space<vmem>>, vector<16x16x32xf32>
    "tpu.trace_start"() <{level = 10 : i32, message = "bhn,bnd->bhd"}> : () -> ()
    %cst = arith.constant dense<0.000000e+00> : vector<16x8x32xf32>
    %2 = tpu.matmul %0, %1, %cst {dimension_numbers = #tpu.dot_dimension_numbers<[2], [1], [1], [2], [0, 0, 0, 1, 1, 2], [0], [0]>} : vector<16x8x16xf32>, vector<16x16x32xf32>, vector<16x8x32xf32> -> vector<16x8x32xf32>
    %cst_5 = arith.constant 0.000000e+00 : f32
    "tpu.trace_stop"() : () -> ()
    %3 = vector.broadcast %cst_5 : f32 to vector<16x8x32xf32>
    %4 = arith.cmpf ogt, %2, %3 : vector<16x8x32xf32>
    %cst_6 = arith.constant 0.00999999977 : f32
    %5 = vector.broadcast %cst_6 : f32 to vector<16x8x32xf32>
    %6 = arith.mulf %5, %2 : vector<16x8x32xf32>
    %7 = arith.select %4, %2, %6 : vector<16x8x32xi1>, vector<16x8x32xf32>
    "tpu.trace_start"() <{level = 10 : i32, message = "bhn,bhd->bnd"}> : () -> ()
    %cst_7 = arith.constant dense<0.000000e+00> : vector<16x16x32xf32>
    %8 = tpu.matmul %0, %7, %cst_7 {dimension_numbers = #tpu.dot_dimension_numbers<[1], [1], [2], [2], [0, 0, 0, 2, 1, 2], [0], [0]>} : vector<16x8x16xf32>, vector<16x8x32xf32>, vector<16x16x32xf32> -> vector<16x16x32xf32>
    %cst_8 = arith.constant 0.000000e+00 : f32
    "tpu.trace_stop"() : () -> ()
    %9 = vector.broadcast %cst_8 : f32 to vector<16x16x32xf32>
    %10 = arith.cmpf ogt, %8, %9 : vector<16x16x32xf32>
    %cst_9 = arith.constant 0.00999999977 : f32
    %11 = vector.broadcast %cst_9 : f32 to vector<16x16x32xf32>
    %12 = arith.mulf %11, %8 : vector<16x16x32xf32>
    %13 = arith.select %10, %8, %12 : vector<16x16x32xi1>, vector<16x16x32xf32>
    %14 = vector.shape_cast %13 : vector<16x16x32xf32> to vector<256x32xf32>
    %c0_10 = arith.constant 0 : index
    %c0_11 = arith.constant 0 : index
    %15 = vector.load %arg5[%c0_10, %c0_11] : memref<32x256xf32, #tpu.memory_space<vmem>>, vector<32x256xf32>
    %cst_12 = arith.constant dense<0.000000e+00> : vector<256x256xf32>
    %16 = tpu.matmul %14, %15, %cst_12 {dimension_numbers = #tpu.dot_dimension_numbers<[1], [0], [0], [1], [0, 0, 1, 1], [], []>} : vector<256x32xf32>, vector<32x256xf32>, vector<256x256xf32> -> vector<256x256xf32>
    %17 = vector.shape_cast %16 : vector<256x256xf32> to vector<16x16x256xf32>
    %c0_13 = arith.constant 0 : index
    %c0_14 = arith.constant 0 : index
    %18 = vector.load %arg4[%c0_13, %c0_14] : memref<16x256xf32, #tpu.memory_space<vmem>>, vector<16x256xf32>
    %19 = vector.shape_cast %18 : vector<16x256xf32> to vector<1x16x256xf32>
    %20 = vector.broadcast %19 : vector<1x16x256xf32> to vector<16x16x256xf32>
    %21 = arith.mulf %17, %20 : vector<16x16x256xf32>
    %22 = vector.shape_cast %21 : vector<16x16x256xf32> to vector<256x256xf32>
    %c0_15 = arith.constant 0 : index
    %c0_16 = arith.constant 0 : index
    %23 = vector.load %arg6[%c0_15, %c0_16] : memref<256x32xf32, #tpu.memory_space<vmem>>, vector<256x32xf32>
    %cst_17 = arith.constant dense<0.000000e+00> : vector<32x256xf32>
    %24 = tpu.matmul %23, %22, %cst_17 {dimension_numbers = #tpu.dot_dimension_numbers<[0], [1], [1], [0], [0, 1, 1, 0], [], []>} : vector<256x32xf32>, vector<256x256xf32>, vector<32x256xf32> -> vector<32x256xf32>
    %c0_18 = arith.constant 0 : index
    %c0_19 = arith.constant 0 : index
    %25 = vector.load %arg3[%c0_18, %c0_19] : memref<32x256xf32, #tpu.memory_space<vmem>>, vector<32x256xf32>
    %26 = arith.addf %24, %25 : vector<32x256xf32>
    %cst_20 = arith.constant 0.000000e+00 : f32
    %27 = vector.broadcast %cst_20 : f32 to vector<32x256xf32>
    %28 = arith.cmpf ogt, %26, %27 : vector<32x256xf32>
    %cst_21 = arith.constant 0.00999999977 : f32
    %29 = vector.broadcast %cst_21 : f32 to vector<32x256xf32>
    %30 = arith.mulf %29, %26 : vector<32x256xf32>
    %31 = arith.select %28, %26, %30 : vector<32x256xi1>, vector<32x256xf32>
    %c0_22 = arith.constant 0 : index
    %c0_23 = arith.constant 0 : index
    %32 = vector.load %arg7[%c0_22, %c0_23] : memref<32x256xf32, #tpu.memory_space<vmem>>, vector<32x256xf32>
    tpu.vector_store %arg7[%c0_22, %c0_23], %31 {strides = array<i32>} : memref<32x256xf32, #tpu.memory_space<vmem>>, vector<32x256xf32>,
    return
  }
  func.func @transform_0(%arg0: i32) -> (i32, i32, i32) {
    %c0_i32 = arith.constant 0 : i32
    %c0_i32_0 = arith.constant 0 : i32
    %c0_i32_1 = arith.constant 0 : i32
    return %arg0, %c0_i32, %c0_i32_0 : i32, i32, i32
  }
  func.func @transform_1(%arg0: i32) -> (i32, i32, i32) {
    %c0_i32 = arith.constant 0 : i32
    %c0_i32_0 = arith.constant 0 : i32
    %c0_i32_1 = arith.constant 0 : i32
    return %arg0, %c0_i32, %c0_i32_0 : i32, i32, i32
  }
  func.func @transform_2(%arg0: i32) -> (i32, i32) {
    %c0_i32 = arith.constant 0 : i32
    %c0_i32_0 = arith.constant 0 : i32
    return %c0_i32, %arg0 : i32, i32
  }
  func.func @transform_3(%arg0: i32) -> (i32, i32) {
    %c0_i32 = arith.constant 0 : i32
    %c0_i32_0 = arith.constant 0 : i32
    %c0_i32_1 = arith.constant 0 : i32
    return %c0_i32, %c0_i32_0 : i32, i32
  }
  func.func @transform_4(%arg0: i32) -> (i32, i32) {
    %c0_i32 = arith.constant 0 : i32
    %c0_i32_0 = arith.constant 0 : i32
    %c0_i32_1 = arith.constant 0 : i32
    return %c0_i32, %c0_i32_0 : i32, i32
  }
  func.func @transform_5(%arg0: i32) -> (i32, i32) {
    %c0_i32 = arith.constant 0 : i32
    %c0_i32_0 = arith.constant 0 : i32
    %c0_i32_1 = arith.constant 0 : i32
    return %c0_i32, %c0_i32_0 : i32, i32
  }
  func.func @transform_6(%arg0: i32) -> (i32, i32) {
    %c0_i32 = arith.constant 0 : i32
    %c0_i32_0 = arith.constant 0 : i32
    return %c0_i32, %arg0 : i32, i32
  }
}

</mosaic_0001>

<llo_original>
// kernel: tile.9
$region0: #{tile.9}
  %s0 = inlined_call_operand.vmem [shape: f32[32,8,32], index: 0, kind: input, shape index: {}]
  %s1 = inlined_call_operand.vmem [shape: f32[32,256], index: 1, kind: output, shape index: {}]
  %v2 = vld [vmem:[%s0] ss:$4 sm:$0xff]
  %vm3 = vcmask 261120
  %4 = vst.msk [vmem:[%s1] ss:$8 sm:$0x3] %vm3, %v2
  %s5 = scalar_lea.vmem %s1, 4294967281
  %6 = vst.msk [vmem:[%s5] ss:$8 sm:$0xc] %vm3, %v2
  %s7 = scalar_lea.vmem %s1, 4294967266
  %8 = vst.msk [vmem:[%s7] ss:$8 sm:$0x30] %vm3, %v2
  %s9 = scalar_lea.vmem %s1, 4294967251
  %10 = vst.msk [vmem:[%s9] ss:$8 sm:$0xc0] %vm3, %v2
  %s11 = scalar_lea.vmem %s0, 32
  %v12 = vld [vmem:[%s11] ss:$4 sm:$0xff]
  %vm13 = vcmask 261120
  %s14 = scalar_lea.vmem %s1, 4
  %15 = vst.msk [vmem:[%s14] ss:$8 sm:$0x3] %vm13, %v12
  %s16 = scalar_lea.vmem %s1, 4294967285
  %17 = vst.msk [vmem:[%s16] ss:$8 sm:$0xc] %vm13, %v12
  %s18 = scalar_lea.vmem %s1, 4294967270
  %19 = vst.msk [vmem:[%s18] ss:$8 sm:$0x30] %vm13, %v12
  %s20 = scalar_lea.vmem %s1, 4294967255
  %21 = vst.msk [vmem:[%s20] ss:$8 sm:$0xc0] %vm13, %v12
  %s22 = scalar_lea.vmem %s0, 64
  %v23 = vld [vmem:[%s22] ss:$4 sm:$0xff]
  %vm24 = vcmask 261120
  %s25 = scalar_lea.vmem %s1, 16
  %26 = vst.msk [vmem:[%s25] ss:$8 sm:$0x3] %vm24, %v23
  %s27 = scalar_lea.vmem %s1, 1
  %28 = vst.msk [vmem:[%s27] ss:$8 sm:$0xc] %vm24, %v23
  %s29 = scalar_lea.vmem %s1, 4294967282
  %30 = vst.msk [vmem:[%s29] ss:$8 sm:$0x30] %vm24, %v23
  %s31 = scalar_lea.vmem %s1, 4294967267
  %32 = vst.msk [vmem:[%s31] ss:$8 sm:$0xc0] %vm24, %v23
  %s33 = scalar_lea.vmem %s0, 96
  %v34 = vld [vmem:[%s33] ss:$4 sm:$0xff]
  %vm35 = vcmask 261120
  %s36 = scalar_lea.vmem %s1, 20
  %37 = vst.msk [vmem:[%s36] ss:$8 sm:$0x3] %vm35, %v34
  %s38 = scalar_lea.vmem %s1, 5
  %39 = vst.msk [vmem:[%s38] ss:$8 sm:$0xc] %vm35, %v34
  %s40 = scalar_lea.vmem %s1, 4294967286
  %41 = vst.msk [vmem:[%s40] ss:$8 sm:$0x30] %vm35, %v34
  %s42 = scalar_lea.vmem %s1, 4294967271
  %43 = vst.msk [vmem:[%s42] ss:$8 sm:$0xc0] %vm35, %v34
  %s44 = scalar_lea.vmem %s0, 128
  %v45 = vld [vmem:[%s44] ss:$4 sm:$0xff]
  %vm46 = vcmask 261120
  %s47 = scalar_lea.vmem %s1, 32
  %48 = vst.msk [vmem:[%s47] ss:$8 sm:$0x3] %vm46, %v45
  %s49 = scalar_lea.vmem %s1, 17
  %50 = vst.msk [vmem:[%s49] ss:$8 sm:$0xc] %vm46, %v45
  %s51 = scalar_lea.vmem %s1, 2
  %52 = vst.msk [vmem:[%s51] ss:$8 sm:$0x30] %vm46, %v45
  %s53 = scalar_lea.vmem %s1, 4294967283
  %54 = vst.msk [vmem:[%s53] ss:$8 sm:$0xc0] %vm46, %v45
  %s55 = scalar_lea.vmem %s0, 160
  %v56 = vld [vmem:[%s55] ss:$4 sm:$0xff]
  %vm57 = vcmask 261120
  %s58 = scalar_lea.vmem %s1, 36
  %59 = vst.msk [vmem:[%s58] ss:$8 sm:$0x3] %vm57, %v56
  %s60 = scalar_lea.vmem %s1, 21
  %61 = vst.msk [vmem:[%s60] ss:$8 sm:$0xc] %vm57, %v56
  %s62 = scalar_lea.vmem %s1, 6
  %63 = vst.msk [vmem:[%s62] ss:$8 sm:$0x30] %vm57, %v56
  %s64 = scalar_lea.vmem %s1, 4294967287
  %65 = vst.msk [vmem:[%s64] ss:$8 sm:$0xc0] %vm57, %v56
  %s66 = scalar_lea.vmem %s0, 192
  %v67 = vld [vmem:[%s66] ss:$4 sm:$0xff]
  %vm68 = vcmask 261120
  %s69 = scalar_lea.vmem %s1, 48
  %70 = vst.msk [vmem:[%s69] ss:$8 sm:$0x3] %vm68, %v67
  %s71 = scalar_lea.vmem %s1, 33
  %72 = vst.msk [vmem:[%s71] ss:$8 sm:$0xc] %vm68, %v67
  %s73 = scalar_lea.vmem %s1, 18
  %74 = vst.msk [vmem:[%s73] ss:$8 sm:$0x30] %vm68, %v67
  %s75 = scalar_lea.vmem %s1, 3
  %76 = vst.msk [vmem:[%s75] ss:$8 sm:$0xc0] %vm68, %v67
  %s77 = scalar_lea.vmem %s0, 224
  %v78 = vld [vmem:[%s77] ss:$4 sm:$0xff]
  %vm79 = vcmask 261120
  %s80 = scalar_lea.vmem %s1, 52
  %81 = vst.msk [vmem:[%s80] ss:$8 sm:$0x3] %vm79, %v78
  %s82 = scalar_lea.vmem %s1, 37
  %83 = vst.msk [vmem:[%s82] ss:$8 sm:$0xc] %vm79, %v78
  %s84 = scalar_lea.vmem %s1, 22
  %85 = vst.msk [vmem:[%s84] ss:$8 sm:$0x30] %vm79, %v78
  %s86 = scalar_lea.vmem %s1, 7
  %87 = vst.msk [vmem:[%s86] ss:$8 sm:$0xc0] %vm79, %v78
  %s88 = scalar_lea.vmem %s0, 3
  %v89 = vld [vmem:[%s88] ss:$8 sm:$0xf]
  %s90 = scalar_lea.vmem %s0, 3
  %v91 = vld [vmem:[%s90] ss:$8 sm:$0xf0]
  %vm92 = vcmask 1047556
  %v93 = vsel %vm92, %v91, %v89
  %94 = vrot.lane.b32.xlu0 %v93, 96
  %v95 = vpop.permute.xlu0 %94
  %vm96 = vcmask 1048320
  %97 = vst.msk [vmem:[%s1] sm:$0xff] %vm96, %v95
  %s98 = scalar_lea.vmem %s0, 131
  %v99 = vld [vmem:[%s98] ss:$8 sm:$0xf]
  %s100 = scalar_lea.vmem %s0, 131
  %v101 = vld [vmem:[%s100] ss:$8 sm:$0xf0]
  %vm102 = vcmask 1047556
  %v103 = vsel %vm102, %v101, %v99
  %104 = vrot.lane.b32.xlu0 %v103, 96
  %v105 = vpop.permute.xlu0 %104
  %vm106 = vcmask 1048320
  %s107 = scalar_lea.vmem %s1, 32
  %108 = vst.msk [vmem:[%s107] sm:$0xff] %vm106, %v105
  %s109 = scalar_lea.vmem %s0, 7
  %v110 = vld [vmem:[%s109] ss:$8 sm:$0xf]
  %s111 = scalar_lea.vmem %s0, 7
  %v112 = vld [vmem:[%s111] ss:$8 sm:$0xf0]
  %vm113 = vcmask 1047556
  %v114 = vsel %vm113, %v112, %v110
  %115 = vrot.lane.b32.xlu0 %v114, 96
  %v116 = vpop.permute.xlu0 %115
  %vm117 = vcmask 1048320
  %s118 = scalar_lea.vmem %s1, 8
  %119 = vst.msk [vmem:[%s118] sm:$0xff] %vm117, %v116
  %s120 = scalar_lea.vmem %s0, 135
  %v121 = vld [vmem:[%s120] ss:$8 sm:$0xf]
  %s122 = scalar_lea.vmem %s0, 135
  %v123 = vld [vmem:[%s122] ss:$8 sm:$0xf0]
  %vm124 = vcmask 1047556
  %v125 = vsel %vm124, %v123, %v121
  %126 = vrot.lane.b32.xlu0 %v125, 96
  %v127 = vpop.permute.xlu0 %126
  %vm128 = vcmask 1048320
  %s129 = scalar_lea.vmem %s1, 40
  %130 = vst.msk [vmem:[%s129] sm:$0xff] %vm128, %v127
  %s131 = scalar_lea.vmem %s0, 67
  %v132 = vld [vmem:[%s131] ss:$8 sm:$0xf]
  %s133 = scalar_lea.vmem %s0, 67
  %v134 = vld [vmem:[%s133] ss:$8 sm:$0xf0]
  %vm135 = vcmask 1047556
  %v136 = vsel %vm135, %v134, %v132
  %137 = vrot.lane.b32.xlu0 %v136, 96
  %v138 = vpop.permute.xlu0 %137
  %vm139 = vcmask 1048320
  %s140 = scalar_lea.vmem %s1, 16
  %141 = vst.msk [vmem:[%s140] sm:$0xff] %vm139, %v138
  %s142 = scalar_lea.vmem %s0, 195
  %v143 = vld [vmem:[%s142] ss:$8 sm:$0xf]
  %s144 = scalar_lea.vmem %s0, 195
  %v145 = vld [vmem:[%s144] ss:$8 sm:$0xf0]
  %vm146 = vcmask 1047556
  %v147 = vsel %vm146, %v145, %v143
  %148 = vrot.lane.b32.xlu0 %v147, 96
  %v149 = vpop.permute.xlu0 %148
  %vm150 = vcmask 1048320
  %s151 = scalar_lea.vmem %s1, 48
  %152 = vst.msk [vmem:[%s151] sm:$0xff] %vm150, %v149
  %s153 = scalar_lea.vmem %s0, 71
  %v154 = vld [vmem:[%s153] ss:$8 sm:$0xf]
  %s155 = scalar_lea.vmem %s0, 71
  %v156 = vld [vmem:[%s155] ss:$8 sm:$0xf0]
  %vm157 = vcmask 1047556
  %v158 = vsel %vm157, %v156, %v154
  %159 = vrot.lane.b32.xlu0 %v158, 96
  %v160 = vpop.permute.xlu0 %159
  %vm161 = vcmask 1048320
  %s162 = scalar_lea.vmem %s1, 24
  %163 = vst.msk [vmem:[%s162] sm:$0xff] %vm161, %v160
  %s164 = scalar_lea.vmem %s0, 199
  %v165 = vld [vmem:[%s164] ss:$8 sm:$0xf]
  %s166 = scalar_lea.vmem %s0, 199
  %v167 = vld [vmem:[%s166] ss:$8 sm:$0xf0]
  %vm168 = vcmask 1047556
  %v169 = vsel %vm168, %v167, %v165
  %170 = vrot.lane.b32.xlu0 %v169, 96
  %v171 = vpop.permute.xlu0 %170
  %vm172 = vcmask 1048320
  %s173 = scalar_lea.vmem %s1, 56
  %174 = vst.msk [vmem:[%s173] sm:$0xff] %vm172, %v171
  %s175 = scalar_lea.vmem %s0, 2
  %v176 = vld [vmem:[%s175] ss:$8 sm:$0xf]
  %s177 = scalar_lea.vmem %s0, 2
  %v178 = vld [vmem:[%s177] ss:$8 sm:$0xf0]
  %vm179 = vcmask 1047556
  %v180 = vsel %vm179, %v178, %v176
  %181 = vrot.lane.b32.xlu0 %v180, 64
  %v182 = vpop.permute.xlu0 %181
  %vm183 = vcmask 785920
  %184 = vst.msk [vmem:[%s1] sm:$0xff] %vm183, %v182
  %s185 = scalar_lea.vmem %s0, 130
  %v186 = vld [vmem:[%s185] ss:$8 sm:$0xf]
  %s187 = scalar_lea.vmem %s0, 130
  %v188 = vld [vmem:[%s187] ss:$8 sm:$0xf0]
  %vm189 = vcmask 1047556
  %v190 = vsel %vm189, %v188, %v186
  %191 = vrot.lane.b32.xlu0 %v190, 64
  %v192 = vpop.permute.xlu0 %191
  %vm193 = vcmask 785920
  %s194 = scalar_lea.vmem %s1, 32
  %195 = vst.msk [vmem:[%s194] sm:$0xff] %vm193, %v192
  %s196 = scalar_lea.vmem %s0, 6
  %v197 = vld [vmem:[%s196] ss:$8 sm:$0xf]
  %s198 = scalar_lea.vmem %s0, 6
  %v199 = vld [vmem:[%s198] ss:$8 sm:$0xf0]
  %vm200 = vcmask 1047556
  %v201 = vsel %vm200, %v199, %v197
  %202 = vrot.lane.b32.xlu0 %v201, 64
  %v203 = vpop.permute.xlu0 %202
  %vm204 = vcmask 785920
  %s205 = scalar_lea.vmem %s1, 8
  %206 = vst.msk [vmem:[%s205] sm:$0xff] %vm204, %v203
  %s207 = scalar_lea.vmem %s0, 134
  %v208 = vld [vmem:[%s207] ss:$8 sm:$0xf]
  %s209 = scalar_lea.vmem %s0, 134
  %v210 = vld [vmem:[%s209] ss:$8 sm:$0xf0]
  %vm211 = vcmask 1047556
  %v212 = vsel %vm211, %v210, %v208
  %213 = vrot.lane.b32.xlu0 %v212, 64
  %v214 = vpop.permute.xlu0 %213
  %vm215 = vcmask 785920
  %s216 = scalar_lea.vmem %s1, 40
  %217 = vst.msk [vmem:[%s216] sm:$0xff] %vm215, %v214
  %s218 = scalar_lea.vmem %s0, 66
  %v219 = vld [vmem:[%s218] ss:$8 sm:$0xf]
  %s220 = scalar_lea.vmem %s0, 66
  %v221 = vld [vmem:[%s220] ss:$8 sm:$0xf0]
  %vm222 = vcmask 1047556
  %v223 = vsel %vm222, %v221, %v219
  %224 = vrot.lane.b32.xlu0 %v223, 64
  %v225 = vpop.permute.xlu0 %224
  %vm226 = vcmask 785920
  %s227 = scalar_lea.vmem %s1, 16
  %228 = vst.msk [vmem:[%s227] sm:$0xff] %vm226, %v225
  %s229 = scalar_lea.vmem %s0, 194
  %v230 = vld [vmem:[%s229] ss:$8 sm:$0xf]
  %s231 = scalar_lea.vmem %s0, 194
  %v232 = vld [vmem:[%s231] ss:$8 sm:$0xf0]
  %vm233 = vcmask 1047556
  %v234 = vsel %vm233, %v232, %v230
  %235 = vrot.lane.b32.xlu0 %v234, 64
  %v236 = vpop.permute.xlu0 %235
  %vm237 = vcmask 785920
  %s238 = scalar_lea.vmem %s1, 48
  %239 = vst.msk [vmem:[%s238] sm:$0xff] %vm237, %v236
  %s240 = scalar_lea.vmem %s0, 70
  %v241 = vld [vmem:[%s240] ss:$8 sm:$0xf]
  %s242 = scalar_lea.vmem %s0, 70
  %v243 = vld [vmem:[%s242] ss:$8 sm:$0xf0]
  %vm244 = vcmask 1047556
  %v245 = vsel %vm244, %v243, %v241
  %246 = vrot.lane.b32.xlu0 %v245, 64
  %v247 = vpop.permute.xlu0 %246
  %vm248 = vcmask 785920
  %s249 = scalar_lea.vmem %s1, 24
  %250 = vst.msk [vmem:[%s249] sm:$0xff] %vm248, %v247
  %s251 = scalar_lea.vmem %s0, 198
  %v252 = vld [vmem:[%s251] ss:$8 sm:$0xf]
  %s253 = scalar_lea.vmem %s0, 198
  %v254 = vld [vmem:[%s253] ss:$8 sm:$0xf0]
  %vm255 = vcmask 1047556
  %v256 = vsel %vm255, %v254, %v252
  %257 = vrot.lane.b32.xlu0 %v256, 64
  %v258 = vpop.permute.xlu0 %257
  %vm259 = vcmask 785920
  %s260 = scalar_lea.vmem %s1, 56
  %261 = vst.msk [vmem:[%s260] sm:$0xff] %vm259, %v258
  %s262 = scalar_lea.vmem %s0, 1
  %v263 = vld [vmem:[%s262] ss:$8 sm:$0xf]
  %s264 = scalar_lea.vmem %s0, 1
  %v265 = vld [vmem:[%s264] ss:$8 sm:$0xf0]
  %vm266 = vcmask 1047556
  %v267 = vsel %vm266, %v265, %v263
  %268 = vrot.lane.b32.xlu0 %v267, 32
  %v269 = vpop.permute.xlu0 %268
  %vm270 = vcmask 523520
  %271 = vst.msk [vmem:[%s1] sm:$0xff] %vm270, %v269
  %s272 = scalar_lea.vmem %s0, 129
  %v273 = vld [vmem:[%s272] ss:$8 sm:$0xf]
  %s274 = scalar_lea.vmem %s0, 129
  %v275 = vld [vmem:[%s274] ss:$8 sm:$0xf0]
  %vm276 = vcmask 1047556
  %v277 = vsel %vm276, %v275, %v273
  %278 = vrot.lane.b32.xlu0 %v277, 32
  %v279 = vpop.permute.xlu0 %278
  %vm280 = vcmask 523520
  %s281 = scalar_lea.vmem %s1, 32
  %282 = vst.msk [vmem:[%s281] sm:$0xff] %vm280, %v279
  %s283 = scalar_lea.vmem %s0, 5
  %v284 = vld [vmem:[%s283] ss:$8 sm:$0xf]
  %s285 = scalar_lea.vmem %s0, 5
  %v286 = vld [vmem:[%s285] ss:$8 sm:$0xf0]
  %vm287 = vcmask 1047556
  %v288 = vsel %vm287, %v286, %v284
  %289 = vrot.lane.b32.xlu0 %v288, 32
  %v290 = vpop.permute.xlu0 %289
  %vm291 = vcmask 523520
  %s292 = scalar_lea.vmem %s1, 8
  %293 = vst.msk [vmem:[%s292] sm:$0xff] %vm291, %v290
  %s294 = scalar_lea.vmem %s0, 133
  %v295 = vld [vmem:[%s294] ss:$8 sm:$0xf]
  %s296 = scalar_lea.vmem %s0, 133
  %v297 = vld [vmem:[%s296] ss:$8 sm:$0xf0]
  %vm298 = vcmask 1047556
  %v299 = vsel %vm298, %v297, %v295
  %300 = vrot.lane.b32.xlu0 %v299, 32
  %v301 = vpop.permute.xlu0 %300
  %vm302 = vcmask 523520
  %s303 = scalar_lea.vmem %s1, 40
  %304 = vst.msk [vmem:[%s303] sm:$0xff] %vm302, %v301
  %s305 = scalar_lea.vmem %s0, 65
  %v306 = vld [vmem:[%s305] ss:$8 sm:$0xf]
  %s307 = scalar_lea.vmem %s0, 65
  %v308 = vld [vmem:[%s307] ss:$8 sm:$0xf0]
  %vm309 = vcmask 1047556
  %v310 = vsel %vm309, %v308, %v306
  %311 = vrot.lane.b32.xlu0 %v310, 32
  %v312 = vpop.permute.xlu0 %311
  %vm313 = vcmask 523520
  %s314 = scalar_lea.vmem %s1, 16
  %315 = vst.msk [vmem:[%s314] sm:$0xff] %vm313, %v312
  %s316 = scalar_lea.vmem %s0, 193
  %v317 = vld [vmem:[%s316] ss:$8 sm:$0xf]
  %s318 = scalar_lea.vmem %s0, 193
  %v319 = vld [vmem:[%s318] ss:$8 sm:$0xf0]
  %vm320 = vcmask 1047556
  %v321 = vsel %vm320, %v319, %v317
  %322 = vrot.lane.b32.xlu0 %v321, 32
  %v323 = vpop.permute.xlu0 %322
  %vm324 = vcmask 523520
  %s325 = scalar_lea.vmem %s1, 48
  %326 = vst.msk [vmem:[%s325] sm:$0xff] %vm324, %v323
  %s327 = scalar_lea.vmem %s0, 69
  %v328 = vld [vmem:[%s327] ss:$8 sm:$0xf]
  %s329 = scalar_lea.vmem %s0, 69
  %v330 = vld [vmem:[%s329] ss:$8 sm:$0xf0]
  %vm331 = vcmask 1047556
  %v332 = vsel %vm331, %v330, %v328
  %333 = vrot.lane.b32.xlu0 %v332, 32
  %v334 = vpop.permute.xlu0 %333
  %vm335 = vcmask 523520
  %s336 = scalar_lea.vmem %s1, 24
  %337 = vst.msk [vmem:[%s336] sm:$0xff] %vm335, %v334
  %s338 = scalar_lea.vmem %s0, 197
  %v339 = vld [vmem:[%s338] ss:$8 sm:$0xf]
  %s340 = scalar_lea.vmem %s0, 197
  %v341 = vld [vmem:[%s340] ss:$8 sm:$0xf0]
  %vm342 = vcmask 1047556
  %v343 = vsel %vm342, %v341, %v339
  %344 = vrot.lane.b32.xlu0 %v343, 32
  %v345 = vpop.permute.xlu0 %344
  %vm346 = vcmask 523520
  %s347 = scalar_lea.vmem %s1, 56
  %348 = vst.msk [vmem:[%s347] sm:$0xff] %vm346, %v345

// kernel: _forward_impl.1
$region0: #{_forward_impl.1}
  #allocation0 [shape = 'u32[]', space=smem, size = 0x4, offset = 0x4, fixed_abs, tag = 'smem constant byte address 0x4 - core index']
  #allocation1 [shape = 'u32[144,128]{1,0:T(1,128)}', space=vmem, size = 0x12000, scoped, tag = 'internal scratch']
  %s0 = inlined_call_operand.vmem [shape: f32[16,8,16], index: 0, kind: input, shape index: {}]
  %s1 = inlined_call_operand.vmem [shape: f32[16,16,32], index: 1, kind: input, shape index: {}]
  %s2 = inlined_call_operand.vmem [shape: f32[32,256], index: 2, kind: input, shape index: {}]
  %s3 = inlined_call_operand.vmem [shape: f32[16,256], index: 3, kind: input, shape index: {}]
  %s4 = inlined_call_operand.vmem [shape: f32[32,256], index: 4, kind: input, shape index: {}]
  %s5 = inlined_call_operand.vmem [shape: f32[256,32], index: 5, kind: input, shape index: {}]
  %s6 = inlined_call_operand.vmem [shape: f32[32,256], index: 6, kind: output, shape index: {}]
  %s7 = sld [smem:[#allocation0]]
  $region34: #{_forward_impl.1} parent=0
    _
  %s9 = ssub.s32 1, %s7
  %s10 = scalar_select 0, %s9, %s7
  // Predicated region
  $region2: #{_forward_impl.1} parent=0 // pred_check
    _
  $region3: #{_forward_impl.1} parent=0 // pred_check_branch
    %12 = sbr.rel (0) target = $region5
  $region4: #{_forward_impl.1} parent=0 // pred_region
    _
  $region5: #{_forward_impl.1} parent=0 // pred_fallthru
    _
  // Predicated region
  $region6: #{_forward_impl.1} parent=0 // pred_check
    _
  $region7: #{_forward_impl.1} parent=0 // pred_check_branch
    %14 = sbr.rel (0) target = $region9
  $region8: #{_forward_impl.1} parent=0 // pred_region
    _
  $region9: #{_forward_impl.1} parent=0 // pred_fallthru
    _
  // Predicated region
  $region10: #{_forward_impl.1} parent=0 // pred_check
    _
  $region11: #{_forward_impl.1} parent=0 // pred_check_branch
    %16 = sbr.rel (0) target = $region13
  $region12: #{_forward_impl.1} parent=0 // pred_region
    _
  $region13: #{_forward_impl.1} parent=0 // pred_fallthru
    _
  // Predicated region
  $region14: #{_forward_impl.1} parent=0 // pred_check
    _
  $region15: #{_forward_impl.1} parent=0 // pred_check_branch
    %18 = sbr.rel (0) target = $region17
  $region16: #{_forward_impl.1} parent=0 // pred_region
    _
  $region17: #{_forward_impl.1} parent=0 // pred_fallthru
    _
  // Predicated region
  $region18: #{_forward_impl.1} parent=0 // pred_check
    _
  $region19: #{_forward_impl.1} parent=0 // pred_check_branch
    %20 = sbr.rel (0) target = $region21
  $region20: #{_forward_impl.1} parent=0 // pred_region
    _
  $region21: #{_forward_impl.1} parent=0 // pred_fallthru
    _
  // Predicated region
  $region22: #{_forward_impl.1} parent=0 // pred_check
    _
  $region23: #{_forward_impl.1} parent=0 // pred_check_branch
    %22 = sbr.rel (0) target = $region25
  $region24: #{_forward_impl.1} parent=0 // pred_region
    _
  $region25: #{_forward_impl.1} parent=0 // pred_fallthru
    _
  %v23 = vld [vmem:[%s0] sm:$0xff]
  %v24 = vld [vmem:[%s0 + $0x8] sm:$0xff]
  %v25 = vld [vmem:[%s0 + $0x10] sm:$0xff]
  %v26 = vld [vmem:[%s0 + $0x18] sm:$0xff]
  %v27 = vld [vmem:[%s0 + $0x20] sm:$0xff]
  %v28 = vld [vmem:[%s0 + $0x28] sm:$0xff]
  %v29 = vld [vmem:[%s0 + $0x30] sm:$0xff]
  %v30 = vld [vmem:[%s0 + $0x38] sm:$0xff]
  %v31 = vld [vmem:[%s0 + $0x40] sm:$0xff]
  %v32 = vld [vmem:[%s0 + $0x48] sm:$0xff]
  %v33 = vld [vmem:[%s0 + $0x50] sm:$0xff]
  %v34 = vld [vmem:[%s0 + $0x58] sm:$0xff]
  %v35 = vld [vmem:[%s0 + $0x60] sm:$0xff]
  %v36 = vld [vmem:[%s0 + $0x68] sm:$0xff]
  %v37 = vld [vmem:[%s0 + $0x70] sm:$0xff]
  %v38 = vld [vmem:[%s0 + $0x78] sm:$0xff]
  %v39 = vld [vmem:[%s1] sm:$0xff]
  %v40 = vld [vmem:[%s1 + $0x8] sm:$0xff]
  %v41 = vld [vmem:[%s1 + $0x10] sm:$0xff]
  %v42 = vld [vmem:[%s1 + $0x18] sm:$0xff]
  %v43 = vld [vmem:[%s1 + $0x20] sm:$0xff]
  %v44 = vld [vmem:[%s1 + $0x28] sm:$0xff]
  %v45 = vld [vmem:[%s1 + $0x30] sm:$0xff]
  %v46 = vld [vmem:[%s1 + $0x38] sm:$0xff]
  %v47 = vld [vmem:[%s1 + $0x40] sm:$0xff]
  %v48 = vld [vmem:[%s1 + $0x48] sm:$0xff]
  %v49 = vld [vmem:[%s1 + $0x50] sm:$0xff]
  %v50 = vld [vmem:[%s1 + $0x58] sm:$0xff]
  %v51 = vld [vmem:[%s1 + $0x60] sm:$0xff]
  %v52 = vld [vmem:[%s1 + $0x68] sm:$0xff]
  %v53 = vld [vmem:[%s1 + $0x70] sm:$0xff]
  %v54 = vld [vmem:[%s1 + $0x78] sm:$0xff]
  %v55 = vld [vmem:[%s1 + $0x80] sm:$0xff]
  %v56 = vld [vmem:[%s1 + $0x88] sm:$0xff]
  %v57 = vld [vmem:[%s1 + $0x90] sm:$0xff]
  %v58 = vld [vmem:[%s1 + $0x98] sm:$0xff]
  %v59 = vld [vmem:[%s1 + $0xa0] sm:$0xff]
  %v60 = vld [vmem:[%s1 + $0xa8] sm:$0xff]
  %v61 = vld [vmem:[%s1 + $0xb0] sm:$0xff]
  %v62 = vld [vmem:[%s1 + $0xb8] sm:$0xff]
  %v63 = vld [vmem:[%s1 + $0xc0] sm:$0xff]
  %v64 = vld [vmem:[%s1 + $0xc8] sm:$0xff]
  %v65 = vld [vmem:[%s1 + $0xd0] sm:$0xff]
  %v66 = vld [vmem:[%s1 + $0xd8] sm:$0xff]
  %v67 = vld [vmem:[%s1 + $0xe0] sm:$0xff]
  %v68 = vld [vmem:[%s1 + $0xe8] sm:$0xff]
  %v69 = vld [vmem:[%s1 + $0xf0] sm:$0xff]
  %v70 = vld [vmem:[%s1 + $0xf8] sm:$0xff]
  %vm71 = vcmask 130048
  %v73 = vsel %vm71, %v23, 0
  %75 = vmatprep.subr.mxu0 0.0
  %76 = vmatpush1.msra.mxu0 %v39
  %77 = vmatprep.subr.mxu0 0.0
  %78 = vmatpush1.msra.mxu0 %v40
  %79 = vmatprep.subr.mxu0 0.0
  %80 = vmatpush1.msra.mxu0 0.0
  %81 = vmatprep.subr.mxu0 0.0
  %82 = vmatpush1.msra.mxu0 0.0
  %83 = vmatprep.subr.mxu0 0.0
  %84 = vmatpush1.msra.mxu0 0.0
  %85 = vmatprep.subr.mxu0 0.0
  %86 = vmatpush1.msra.mxu0 0.0
  %87 = vmatprep.subr.mxu0 0.0
  %88 = vmatpush1.msra.mxu0 0.0
  %89 = vmatprep.subr.mxu0 0.0
  %90 = vmatpush1.msra.mxu0 0.0
  %91 = vmatprep.subr.mxu0 0.0
  %92 = vmatpush1.msra.mxu0 0.0
  %93 = vmatprep.subr.mxu0 0.0
  %94 = vmatpush1.msra.mxu0 0.0
  %95 = vmatprep.subr.mxu0 0.0
  %96 = vmatpush1.msra.mxu0 0.0
  %97 = vmatprep.subr.mxu0 0.0
  %98 = vmatpush1.msra.mxu0 0.0
  %99 = vmatprep.subr.mxu0 0.0
  %100 = vmatpush1.msra.mxu0 0.0
  %101 = vmatprep.subr.mxu0 0.0
  %102 = vmatpush1.msra.mxu0 0.0
  %103 = vmatprep.subr.mxu0 0.0
  %104 = vmatpush1.msra.mxu0 0.0
  %105 = vmatprep.subr.mxu0 0.0
  %106 = vmatpush1.msra.mxu0 0.0
  %107 = vmatprep.subr.mxu0 0.0
  %108 = vmatpush1.msra.mxu0 0.0
  %109 = vmatprep.subr.mxu0 0.0
  %110 = vmatpush1.msra.mxu0 0.0
  %111 = vmatprep.subr.mxu0 0.0
  %112 = vmatpush1.msra.mxu0 0.0
  %113 = vmatprep.subr.mxu0 0.0
  %114 = vmatpush1.msra.mxu0 0.0
  %115 = vmatprep.subr.mxu0 0.0
  %116 = vmatpush1.msra.mxu0 0.0
  %117 = vmatprep.subr.mxu0 0.0
  %118 = vmatpush1.msra.mxu0 0.0
  %119 = vmatprep.subr.mxu0 0.0
  %120 = vmatpush1.msra.mxu0 0.0
  %121 = vmatprep.subr.mxu0 0.0
  %122 = vmatpush1.msra.mxu0 0.0
  %123 = vmatprep.subr.mxu0 0.0
  %124 = vmatpush1.msra.mxu0 0.0
  %125 = vmatprep.subr.mxu0 0.0
  %126 = vmatpush1.msra.mxu0 0.0
  %127 = vmatprep.subr.mxu0 0.0
  %128 = vmatpush1.msra.mxu0 0.0
  %129 = vmatprep.subr.mxu0 0.0
  %130 = vmatpush1.msra.mxu0 0.0
  %131 = vmatprep.subr.mxu0 0.0
  %132 = vmatpush1.msra.mxu0 0.0
  %133 = vmatprep.subr.mxu0 0.0
  %134 = vmatpush1.msra.mxu0 0.0
  %135 = vmatprep.subr.mxu0 0.0
  %136 = vmatpush1.msra.mxu0 0.0
  %137 = vmatprep.subr.mxu0 0.0
  %138 = vmatpush1.msra.mxu0 0.0
  %139 = vmatprep.mubr.f32.mxu0 0.0
  %140 = vmatmul.mubr.f32.gmra.mrb[0].mxu0 %v73
  %v141 = vpop.f32.mrb[0].mxu0
  %v142 = vadd.f32 0.0, %v141
  %v143 = vpop.f32.mrb[0].mxu0
  %144 = vdwg.mxu0
  %v146 = vsel %vm71, %v24, 0
  %148 = vmatprep.subr.mxu0 0.0
  %149 = vmatpush1.msra.mxu0 %v41
  %150 = vmatprep.subr.mxu0 0.0
  %151 = vmatpush1.msra.mxu0 %v42
  %152 = vmatprep.subr.mxu0 0.0
  %153 = vmatpush1.msra.mxu0 0.0
  %154 = vmatprep.subr.mxu0 0.0
  %155 = vmatpush1.msra.mxu0 0.0
  %156 = vmatprep.subr.mxu0 0.0
  %157 = vmatpush1.msra.mxu0 0.0
  %158 = vmatprep.subr.mxu0 0.0
  %159 = vmatpush1.msra.mxu0 0.0
  %160 = vmatprep.subr.mxu0 0.0
  %161 = vmatpush1.msra.mxu0 0.0
  %162 = vmatprep.subr.mxu0 0.0
  %163 = vmatpush1.msra.mxu0 0.0
  %164 = vmatprep.subr.mxu0 0.0
  %165 = vmatpush1.msra.mxu0 0.0
  %166 = vmatprep.subr.mxu0 0.0
  %167 = vmatpush1.msra.mxu0 0.0
  %168 = vmatprep.subr.mxu0 0.0
  %169 = vmatpush1.msra.mxu0 0.0
  %170 = vmatprep.subr.mxu0 0.0
  %171 = vmatpush1.msra.mxu0 0.0
  %172 = vmatprep.subr.mxu0 0.0
  %173 = vmatpush1.msra.mxu0 0.0
  %174 = vmatprep.subr.mxu0 0.0
  %175 = vmatpush1.msra.mxu0 0.0
  %176 = vmatprep.subr.mxu0 0.0
  %177 = vmatpush1.msra.mxu0 0.0
  %178 = vmatprep.subr.mxu0 0.0
  %179 = vmatpush1.msra.mxu0 0.0
  %180 = vmatprep.subr.mxu0 0.0
  %181 = vmatpush1.msra.mxu0 0.0
  %182 = vmatprep.subr.mxu0 0.0
  %183 = vmatpush1.msra.mxu0 0.0
  %184 = vmatprep.subr.mxu0 0.0
  %185 = vmatpush1.msra.mxu0 0.0
  %186 = vmatprep.subr.mxu0 0.0
  %187 = vmatpush1.msra.mxu0 0.0
  %188 = vmatprep.subr.mxu0 0.0
  %189 = vmatpush1.msra.mxu0 0.0
  %190 = vmatprep.subr.mxu0 0.0
  %191 = vmatpush1.msra.mxu0 0.0
  %192 = vmatprep.subr.mxu0 0.0
  %193 = vmatpush1.msra.mxu0 0.0
  %194 = vmatprep.subr.mxu0 0.0
  %195 = vmatpush1.msra.mxu0 0.0
  %196 = vmatprep.subr.mxu0 0.0
  %197 = vmatpush1.msra.mxu0 0.0
  %198 = vmatprep.subr.mxu0 0.0
  %199 = vmatpush1.msra.mxu0 0.0
  %200 = vmatprep.subr.mxu0 0.0
  %201 = vmatpush1.msra.mxu0 0.0
  %202 = vmatprep.subr.mxu0 0.0
  %203 = vmatpush1.msra.mxu0 0.0
  %204 = vmatprep.subr.mxu0 0.0
  %205 = vmatpush1.msra.mxu0 0.0
  %206 = vmatprep.subr.mxu0 0.0
  %207 = vmatpush1.msra.mxu0 0.0
  %208 = vmatprep.subr.mxu0 0.0
  %209 = vmatpush1.msra.mxu0 0.0
  %210 = vmatprep.subr.mxu0 0.0
  %211 = vmatpush1.msra.mxu0 0.0
  %212 = vmatprep.mubr.f32.mxu0 0.0
  %213 = vmatmul.mubr.f32.gmra.mrb[0].mxu0 %v146
  %v214 = vpop.f32.mrb[0].mxu0
  %v215 = vadd.f32 0.0, %v214
  %v216 = vpop.f32.mrb[0].mxu0
  %217 = vdwg.mxu0
  %v219 = vsel %vm71, %v25, 0
  %221 = vmatprep.subr.mxu0 0.0
  %222 = vmatpush1.msra.mxu0 %v43
  %223 = vmatprep.subr.mxu0 0.0
  %224 = vmatpush1.msra.mxu0 %v44
  %225 = vmatprep.subr.mxu0 0.0
  %226 = vmatpush1.msra.mxu0 0.0
  %227 = vmatprep.subr.mxu0 0.0
  %228 = vmatpush1.msra.mxu0 0.0
  %229 = vmatprep.subr.mxu0 0.0
  %230 = vmatpush1.msra.mxu0 0.0
  %231 = vmatprep.subr.mxu0 0.0
  %232 = vmatpush1.msra.mxu0 0.0
  %233 = vmatprep.subr.mxu0 0.0
  %234 = vmatpush1.msra.mxu0 0.0
  %235 = vmatprep.subr.mxu0 0.0
  %236 = vmatpush1.msra.mxu0 0.0
  %237 = vmatprep.subr.mxu0 0.0
  %238 = vmatpush1.msra.mxu0 0.0
  %239 = vmatprep.subr.mxu0 0.0
  %240 = vmatpush1.msra.mxu0 0.0
  %241 = vmatprep.subr.mxu0 0.0
  %242 = vmatpush1.msra.mxu0 0.0
  %243 = vmatprep.subr.mxu0 0.0
  %244 = vmatpush1.msra.mxu0 0.0
  %245 = vmatprep.subr.mxu0 0.0
  %246 = vmatpush1.msra.mxu0 0.0
  %247 = vmatprep.subr.mxu0 0.0
  %248 = vmatpush1.msra.mxu0 0.0
  %249 = vmatprep.subr.mxu0 0.0
  %250 = vmatpush1.msra.mxu0 0.0
  %251 = vmatprep.subr.mxu0 0.0
  %252 = vmatpush1.msra.mxu0 0.0
  %253 = vmatprep.subr.mxu0 0.0
  %254 = vmatpush1.msra.mxu0 0.0
  %255 = vmatprep.subr.mxu0 0.0
  %256 = vmatpush1.msra.mxu0 0.0
  %257 = vmatprep.subr.mxu0 0.0
  %258 = vmatpush1.msra.mxu0 0.0
  %259 = vmatprep.subr.mxu0 0.0
  %260 = vmatpush1.msra.mxu0 0.0
  %261 = vmatprep.subr.mxu0 0.0
  %262 = vmatpush1.msra.mxu0 0.0
  %263 = vmatprep.subr.mxu0 0.0
  %264 = vmatpush1.msra.mxu0 0.0
  %265 = vmatprep.subr.mxu0 0.0
  %266 = vmatpush1.msra.mxu0 0.0
  %267 = vmatprep.subr.mxu0 0.0
  %268 = vmatpush1.msra.mxu0 0.0
  %269 = vmatprep.subr.mxu0 0.0
  %270 = vmatpush1.msra.mxu0 0.0
  %271 = vmatprep.subr.mxu0 0.0
  %272 = vmatpush1.msra.mxu0 0.0
  %273 = vmatprep.subr.mxu0 0.0
  %274 = vmatpush1.msra.mxu0 0.0
  %275 = vmatprep.subr.mxu0 0.0
  %276 = vmatpush1.msra.mxu0 0.0
  %277 = vmatprep.subr.mxu0 0.0
  %278 = vmatpush1.msra.mxu0 0.0
  %279 = vmatprep.subr.mxu0 0.0
  %280 = vmatpush1.msra.mxu0 0.0
  %281 = vmatprep.subr.mxu0 0.0
  %282 = vmatpush1.msra.mxu0 0.0
  %283 = vmatprep.subr.mxu0 0.0
  %284 = vmatpush1.msra.mxu0 0.0
  %285 = vmatprep.mubr.f32.mxu0 0.0
  %286 = vmatmul.mubr.f32.gmra.mrb[0].mxu0 %v219
  %v287 = vpop.f32.mrb[0].mxu0
  %v288 = vadd.f32 0.0, %v287
  %v289 = vpop.f32.mrb[0].mxu0
  %290 = vdwg.mxu0
  %v292 = vsel %vm71, %v26, 0
  %294 = vmatprep.subr.mxu0 0.0
  %295 = vmatpush1.msra.mxu0 %v45
  %296 = vmatprep.subr.mxu0 0.0
  %297 = vmatpush1.msra.mxu0 %v46
  %298 = vmatprep.subr.mxu0 0.0
  %299 = vmatpush1.msra.mxu0 0.0
  %300 = vmatprep.subr.mxu0 0.0
  %301 = vmatpush1.msra.mxu0 0.0
  %302 = vmatprep.subr.mxu0 0.0
  %303 = vmatpush1.msra.mxu0 0.0
  %304 = vmatprep.subr.mxu0 0.0
  %305 = vmatpush1.msra.mxu0 0.0
  %306 = vmatprep.subr.mxu0 0.0
  %307 = vmatpush1.msra.mxu0 0.0
  %308 = vmatprep.subr.mxu0 0.0
  %309 = vmatpush1.msra.mxu0 0.0
  %310 = vmatprep.subr.mxu0 0.0
  %311 = vmatpush1.msra.mxu0 0.0
  %312 = vmatprep.subr.mxu0 0.0
  %313 = vmatpush1.msra.mxu0 0.0
  %314 = vmatprep.subr.mxu0 0.0
  %315 = vmatpush1.msra.mxu0 0.0
  %316 = vmatprep.subr.mxu0 0.0
  %317 = vmatpush1.msra.mxu0 0.0
  %318 = vmatprep.subr.mxu0 0.0
  %319 = vmatpush1.msra.mxu0 0.0
  %320 = vmatprep.subr.mxu0 0.0
  %321 = vmatpush1.msra.mxu0 0.0
  %322 = vmatprep.subr.mxu0 0.0
  %323 = vmatpush1.msra.mxu0 0.0
  %324 = vmatprep.subr.mxu0 0.0
  %325 = vmatpush1.msra.mxu0 0.0
  %326 = vmatprep.subr.mxu0 0.0
  %327 = vmatpush1.msra.mxu0 0.0
  %328 = vmatprep.subr.mxu0 0.0
  %329 = vmatpush1.msra.mxu0 0.0
  %330 = vmatprep.subr.mxu0 0.0
  %331 = vmatpush1.msra.mxu0 0.0
  %332 = vmatprep.subr.mxu0 0.0
  %333 = vmatpush1.msra.mxu0 0.0
  %334 = vmatprep.subr.mxu0 0.0
  %335 = vmatpush1.msra.mxu0 0.0
  %336 = vmatprep.subr.mxu0 0.0
  %337 = vmatpush1.msra.mxu0 0.0
  %338 = vmatprep.subr.mxu0 0.0
  %339 = vmatpush1.msra.mxu0 0.0
  %340 = vmatprep.subr.mxu0 0.0
  %341 = vmatpush1.msra.mxu0 0.0
  %342 = vmatprep.subr.mxu0 0.0
  %343 = vmatpush1.msra.mxu0 0.0
  %344 = vmatprep.subr.mxu0 0.0
  %345 = vmatpush1.msra.mxu0 0.0
  %346 = vmatprep.subr.mxu0 0.0
  %347 = vmatpush1.msra.mxu0 0.0
  %348 = vmatprep.subr.mxu0 0.0
  %349 = vmatpush1.msra.mxu0 0.0
  %350 = vmatprep.subr.mxu0 0.0
  %351 = vmatpush1.msra.mxu0 0.0
  %352 = vmatprep.subr.mxu0 0.0
  %353 = vmatpush1.msra.mxu0 0.0
  %354 = vmatprep.subr.mxu0 0.0
  %355 = vmatpush1.msra.mxu0 0.0
  %356 = vmatprep.subr.mxu0 0.0
  %357 = vmatpush1.msra.mxu0 0.0
  %358 = vmatprep.mubr.f32.mxu0 0.0
  %359 = vmatmul.mubr.f32.gmra.mrb[0].mxu0 %v292
  %v360 = vpop.f32.mrb[0].mxu0
  %v361 = vadd.f32 0.0, %v360
  %v362 = vpop.f32.mrb[0].mxu0
  %363 = vdwg.mxu0
  %v365 = vsel %vm71, %v27, 0
  %367 = vmatprep.subr.mxu0 0.0
  %368 = vmatpush1.msra.mxu0 %v47
  %369 = vmatprep.subr.mxu0 0.0
  %370 = vmatpush1.msra.mxu0 %v48
  %371 = vmatprep.subr.mxu0 0.0
  %372 = vmatpush1.msra.mxu0 0.0
  %373 = vmatprep.subr.mxu0 0.0
  %374 = vmatpush1.msra.mxu0 0.0
  %375 = vmatprep.subr.mxu0 0.0
  %376 = vmatpush1.msra.mxu0 0.0
  %377 = vmatprep.subr.mxu0 0.0
  %378 = vmatpush1.msra.mxu0 0.0
  %379 = vmatprep.subr.mxu0 0.0
  %380 = vmatpush1.msra.mxu0 0.0
  %381 = vmatprep.subr.mxu0 0.0
  %382 = vmatpush1.msra.mxu0 0.0
  %383 = vmatprep.subr.mxu0 0.0
  %384 = vmatpush1.msra.mxu0 0.0
  %385 = vmatprep.subr.mxu0 0.0
  %386 = vmatpush1.msra.mxu0 0.0
  %387 = vmatprep.subr.mxu0 0.0
  %388 = vmatpush1.msra.mxu0 0.0
  %389 = vmatprep.subr.mxu0 0.0
  %390 = vmatpush1.msra.mxu0 0.0
  %391 = vmatprep.subr.mxu0 0.0
  %392 = vmatpush1.msra.mxu0 0.0
  %393 = vmatprep.subr.mxu0 0.0
  %394 = vmatpush1.msra.mxu0 0.0
  %395 = vmatprep.subr.mxu0 0.0
  %396 = vmatpush1.msra.mxu0 0.0
  %397 = vmatprep.subr.mxu0 0.0
  %398 = vmatpush1.msra.mxu0 0.0
  %399 = vmatprep.subr.mxu0 0.0
  %400 = vmatpush1.msra.mxu0 0.0
  %401 = vmatprep.subr.mxu0 0.0
  %402 = vmatpush1.msra.mxu0 0.0
  %403 = vmatprep.subr.mxu0 0.0
  %404 = vmatpush1.msra.mxu0 0.0
  %405 = vmatprep.subr.mxu0 0.0
  %406 = vmatpush1.msra.mxu0 0.0
  %407 = vmatprep.subr.mxu0 0.0
  %408 = vmatpush1.msra.mxu0 0.0
  %409 = vmatprep.subr.mxu0 0.0
  %410 = vmatpush1.msra.mxu0 0.0
  %411 = vmatprep.subr.mxu0 0.0
  %412 = vmatpush1.msra.mxu0 0.0
  %413 = vmatprep.subr.mxu0 0.0
  %414 = vmatpush1.msra.mxu0 0.0
  %415 = vmatprep.subr.mxu0 0.0
  %416 = vmatpush1.msra.mxu0 0.0
  %417 = vmatprep.subr.mxu0 0.0
  %418 = vmatpush1.msra.mxu0 0.0
  %419 = vmatprep.subr.mxu0 0.0
  %420 = vmatpush1.msra.mxu0 0.0
  %421 = vmatprep.subr.mxu0 0.0
  %422 = vmatpush1.msra.mxu0 0.0
  %423 = vmatprep.subr.mxu0 0.0
  %424 = vmatpush1.msra.mxu0 0.0
  %425 = vmatprep.subr.mxu0 0.0
  %426 = vmatpush1.msra.mxu0 0.0
  %427 = vmatprep.subr.mxu0 0.0
  %428 = vmatpush1.msra.mxu0 0.0
  %429 = vmatprep.subr.mxu0 0.0
  %430 = vmatpush1.msra.mxu0 0.0
  %431 = vmatprep.mubr.f32.mxu0 0.0
  %432 = vmatmul.mubr.f32.gmra.mrb[0].mxu0 %v365
  %v433 = vpop.f32.mrb[0].mxu0
  %v434 = vadd.f32 0.0, %v433
  %v435 = vpop.f32.mrb[0].mxu0
  %436 = vdwg.mxu0
  %v438 = vsel %vm71, %v28, 0
  %440 = vmatprep.subr.mxu0 0.0
  %441 = vmatpush1.msra.mxu0 %v49
  %442 = vmatprep.subr.mxu0 0.0
  %443 = vmatpush1.msra.mxu0 %v50
  %444 = vmatprep.subr.mxu0 0.0
  %445 = vmatpush1.msra.mxu0 0.0
  %446 = vmatprep.subr.mxu0 0.0
  %447 = vmatpush1.msra.mxu0 0.0
  %448 = vmatprep.subr.mxu0 0.0
  %449 = vmatpush1.msra.mxu0 0.0
  %450 = vmatprep.subr.mxu0 0.0
  %451 = vmatpush1.msra.mxu0 0.0
  %452 = vmatprep.subr.mxu0 0.0
  %453 = vmatpush1.msra.mxu0 0.0
  %454 = vmatprep.subr.mxu0 0.0
  %455 = vmatpush1.msra.mxu0 0.0
  %456 = vmatprep.subr.mxu0 0.0
  %457 = vmatpush1.msra.mxu0 0.0
  %458 = vmatprep.subr.mxu0 0.0
  %459 = vmatpush1.msra.mxu0 0.0
  %460 = vmatprep.subr.mxu0 0.0
  %461 = vmatpush1.msra.mxu0 0.0
  %462 = vmatprep.subr.mxu0 0.0
  %463 = vmatpush1.msra.mxu0 0.0
  %464 = vmatprep.subr.mxu0 0.0
  %465 = vmatpush1.msra.mxu0 0.0
  %466 = vmatprep.subr.mxu0 0.0
  %467 = vmatpush1.msra.mxu0 0.0
  %468 = vmatprep.subr.mxu0 0.0
  %469 = vmatpush1.msra.mxu0 0.0
  %470 = vmatprep.subr.mxu0 0.0
  %471 = vmatpush1.msra.mxu0 0.0
  %472 = vmatprep.subr.mxu0 0.0
  %473 = vmatpush1.msra.mxu0 0.0
  %474 = vmatprep.subr.mxu0 0.0
  %475 = vmatpush1.msra.mxu0 0.0
  %476 = vmatprep.subr.mxu0 0.0
  %477 = vmatpush1.msra.mxu0 0.0
  %478 = vmatprep.subr.mxu0 0.0
  %479 = vmatpush1.msra.mxu0 0.0
  %480 = vmatprep.subr.mxu0 0.0
  %481 = vmatpush1.msra.mxu0 0.0
  %482 = vmatprep.subr.mxu0 0.0
  %483 = vmatpush1.msra.mxu0 0.0
  %484 = vmatprep.subr.mxu0 0.0
  %485 = vmatpush1.msra.mxu0 0.0
  %486 = vmatprep.subr.mxu0 0.0
  %487 = vmatpush1.msra.mxu0 0.0
  %488 = vmatprep.subr.mxu0 0.0
  %489 = vmatpush1.msra.mxu0 0.0
  %490 = vmatprep.subr.mxu0 0.0
  %491 = vmatpush1.msra.mxu0 0.0
  %492 = vmatprep.subr.mxu0 0.0
  %493 = vmatpush1.msra.mxu0 0.0
  %494 = vmatprep.subr.mxu0 0.0
  %495 = vmatpush1.msra.mxu0 0.0
  %496 = vmatprep.subr.mxu0 0.0
  %497 = vmatpush1.msra.mxu0 0.0
  %498 = vmatprep.subr.mxu0 0.0
  %499 = vmatpush1.msra.mxu0 0.0
  %500 = vmatprep.subr.mxu0 0.0
  %501 = vmatpush1.msra.mxu0 0.0
  %502 = vmatprep.subr.mxu0 0.0
  %503 = vmatpush1.msra.mxu0 0.0
  %504 = vmatprep.mubr.f32.mxu0 0.0
  %505 = vmatmul.mubr.f32.gmra.mrb[0].mxu0 %v438
  %v506 = vpop.f32.mrb[0].mxu0
  %v507 = vadd.f32 0.0, %v506
  %v508 = vpop.f32.mrb[0].mxu0
  %509 = vdwg.mxu0
  %v511 = vsel %vm71, %v29, 0
  %513 = vmatprep.subr.mxu0 0.0
  %514 = vmatpush1.msra.mxu0 %v51
  %515 = vmatprep.subr.mxu0 0.0
  %516 = vmatpush1.msra.mxu0 %v52
  %517 = vmatprep.subr.mxu0 0.0
  %518 = vmatpush1.msra.mxu0 0.0
  %519 = vmatprep.subr.mxu0 0.0
  %520 = vmatpush1.msra.mxu0 0.0
  %521 = vmatprep.subr.mxu0 0.0
  %522 = vmatpush1.msra.mxu0 0.0
  %523 = vmatprep.subr.mxu0 0.0
  %524 = vmatpush1.msra.mxu0 0.0
  %525 = vmatprep.subr.mxu0 0.0
  %526 = vmatpush1.msra.mxu0 0.0
  %527 = vmatprep.subr.mxu0 0.0
  %528 = vmatpush1.msra.mxu0 0.0
  %529 = vmatprep.subr.mxu0 0.0
  %530 = vmatpush1.msra.mxu0 0.0
  %531 = vmatprep.subr.mxu0 0.0
  %532 = vmatpush1.msra.mxu0 0.0
  %533 = vmatprep.subr.mxu0 0.0
  %534 = vmatpush1.msra.mxu0 0.0
  %535 = vmatprep.subr.mxu0 0.0
  %536 = vmatpush1.msra.mxu0 0.0
  %537 = vmatprep.subr.mxu0 0.0
  %538 = vmatpush1.msra.mxu0 0.0
  %539 = vmatprep.subr.mxu0 0.0
  %540 = vmatpush1.msra.mxu0 0.0
  %541 = vmatprep.subr.mxu0 0.0
  %542 = vmatpush1.msra.mxu0 0.0
  %543 = vmatprep.subr.mxu0 0.0
  %544 = vmatpush1.msra.mxu0 0.0
  %545 = vmatprep.subr.mxu0 0.0
  %546 = vmatpush1.msra.mxu0 0.0
  %547 = vmatprep.subr.mxu0 0.0
  %548 = vmatpush1.msra.mxu0 0.0
  %549 = vmatprep.subr.mxu0 0.0
  %550 = vmatpush1.msra.mxu0 0.0
  %551 = vmatprep.subr.mxu0 0.0
  %552 = vmatpush1.msra.mxu0 0.0
  %553 = vmatprep.subr.mxu0 0.0
  %554 = vmatpush1.msra.mxu0 0.0
  %555 = vmatprep.subr.mxu0 0.0
  %556 = vmatpush1.msra.mxu0 0.0
  %557 = vmatprep.subr.mxu0 0.0
  %558 = vmatpush1.msra.mxu0 0.0
  %559 = vmatprep.subr.mxu0 0.0
  %560 = vmatpush1.msra.mxu0 0.0
  %561 = vmatprep.subr.mxu0 0.0
  %562 = vmatpush1.msra.mxu0 0.0
  %563 = vmatprep.subr.mxu0 0.0
  %564 = vmatpush1.msra.mxu0 0.0
  %565 = vmatprep.subr.mxu0 0.0
  %566 = vmatpush1.msra.mxu0 0.0
  %567 = vmatprep.subr.mxu0 0.0
  %568 = vmatpush1.msra.mxu0 0.0
  %569 = vmatprep.subr.mxu0 0.0
  %570 = vmatpush1.msra.mxu0 0.0
  %571 = vmatprep.subr.mxu0 0.0
  %572 = vmatpush1.msra.mxu0 0.0
  %573 = vmatprep.subr.mxu0 0.0
  %574 = vmatpush1.msra.mxu0 0.0
  %575 = vmatprep.subr.mxu0 0.0
  %576 = vmatpush1.msra.mxu0 0.0
  %577 = vmatprep.mubr.f32.mxu0 0.0
  %578 = vmatmul.mubr.f32.gmra.mrb[0].mxu0 %v511
  %v579 = vpop.f32.mrb[0].mxu0
  %v580 = vadd.f32 0.0, %v579
  %v581 = vpop.f32.mrb[0].mxu0
  %582 = vdwg.mxu0
  %v584 = vsel %vm71, %v30, 0
  %586 = vmatprep.subr.mxu0 0.0
  %587 = vmatpush1.msra.mxu0 %v53
  %588 = vmatprep.subr.mxu0 0.0
  %589 = vmatpush1.msra.mxu0 %v54
  %590 = vmatprep.subr.mxu0 0.0
  %591 = vmatpush1.msra.mxu0 0.0
  %592 = vmatprep.subr.mxu0 0.0
  %593 = vmatpush1.msra.mxu0 0.0
  %594 = vmatprep.subr.mxu0 0.0
  %595 = vmatpush1.msra.mxu0 0.0
  %596 = vmatprep.subr.mxu0 0.0
  %597 = vmatpush1.msra.mxu0 0.0
  %598 = vmatprep.subr.mxu0 0.0
  %599 = vmatpush1.msra.mxu0 0.0
  %600 = vmatprep.subr.mxu0 0.0
  %601 = vmatpush1.msra.mxu0 0.0
  %602 = vmatprep.subr.mxu0 0.0
  %603 = vmatpush1.msra.mxu0 0.0
  %604 = vmatprep.subr.mxu0 0.0
  %605 = vmatpush1.msra.mxu0 0.0
  %606 = vmatprep.subr.mxu0 0.0
  %607 = vmatpush1.msra.mxu0 0.0
  %608 = vmatprep.subr.mxu0 0.0
  %609 = vmatpush1.msra.mxu0 0.0
  %610 = vmatprep.subr.mxu0 0.0
  %611 = vmatpush1.msra.mxu0 0.0
  %612 = vmatprep.subr.mxu0 0.0
  %613 = vmatpush1.msra.mxu0 0.0
  %614 = vmatprep.subr.mxu0 0.0
  %615 = vmatpush1.msra.mxu0 0.0
  %616 = vmatprep.subr.mxu0 0.0
  %617 = vmatpush1.msra.mxu0 0.0
  %618 = vmatprep.subr.mxu0 0.0
  %619 = vmatpush1.msra.mxu0 0.0
  %620 = vmatprep.subr.mxu0 0.0
  %621 = vmatpush1.msra.mxu0 0.0
  %622 = vmatprep.subr.mxu0 0.0
  %623 = vmatpush1.msra.mxu0 0.0
  %624 = vmatprep.subr.mxu0 0.0
  %625 = vmatpush1.msra.mxu0 0.0
  %626 = vmatprep.subr.mxu0 0.0
  %627 = vmatpush1.msra.mxu0 0.0
  %628 = vmatprep.subr.mxu0 0.0
  %629 = vmatpush1.msra.mxu0 0.0
  %630 = vmatprep.subr.mxu0 0.0
  %631 = vmatpush1.msra.mxu0 0.0
  %632 = vmatprep.subr.mxu0 0.0
  %633 = vmatpush1.msra.mxu0 0.0
  %634 = vmatprep.subr.mxu0 0.0
  %635 = vmatpush1.msra.mxu0 0.0
  %636 = vmatprep.subr.mxu0 0.0
  %637 = vmatpush1.msra.mxu0 0.0
  %638 = vmatprep.subr.mxu0 0.0
  %639 = vmatpush1.msra.mxu0 0.0
  %640 = vmatprep.subr.mxu0 0.0
  %641 = vmatpush1.msra.mxu0 0.0
  %642 = vmatprep.subr.mxu0 0.0
  %643 = vmatpush1.msra.mxu0 0.0
  %644 = vmatprep.subr.mxu0 0.0
  %645 = vmatpush1.msra.mxu0 0.0
  %646 = vmatprep.subr.mxu0 0.0
  %647 = vmatpush1.msra.mxu0 0.0
  %648 = vmatprep.subr.mxu0 0.0
  %649 = vmatpush1.msra.mxu0 0.0
  %650 = vmatprep.mubr.f32.mxu0 0.0
  %651 = vmatmul.mubr.f32.gmra.mrb[0].mxu0 %v584
  %v652 = vpop.f32.mrb[0].mxu0
  %v653 = vadd.f32 0.0, %v652
  %v654 = vpop.f32.mrb[0].mxu0
  %655 = vdwg.mxu0
  %v657 = vsel %vm71, %v31, 0
  %659 = vmatprep.subr.mxu0 0.0
  %660 = vmatpush1.msra.mxu0 %v55
  %661 = vmatprep.subr.mxu0 0.0
  %662 = vmatpush1.msra.mxu0 %v56
  %663 = vmatprep.subr.mxu0 0.0
  %664 = vmatpush1.msra.mxu0 0.0
  %665 = vmatprep.subr.mxu0 0.0
  %666 = vmatpush1.msra.mxu0 0.0
  %667 = vmatprep.subr.mxu0 0.0
  %668 = vmatpush1.msra.mxu0 0.0
  %669 = vmatprep.subr.mxu0 0.0
  %670 = vmatpush1.msra.mxu0 0.0
  %671 = vmatprep.subr.mxu0 0.0
  %672 = vmatpush1.msra.mxu0 0.0
  %673 = vmatprep.subr.mxu0 0.0
  %674 = vmatpush1.msra.mxu0 0.0
  %675 = vmatprep.subr.mxu0 0.0
  %676 = vmatpush1.msra.mxu0 0.0
  %677 = vmatprep.subr.mxu0 0.0
  %678 = vmatpush1.msra.mxu0 0.0
  %679 = vmatprep.subr.mxu0 0.0
  %680 = vmatpush1.msra.mxu0 0.0
  %681 = vmatprep.subr.mxu0 0.0
  %682 = vmatpush1.msra.mxu0 0.0
  %683 = vmatprep.subr.mxu0 0.0
  %684 = vmatpush1.msra.mxu0 0.0
  %685 = vmatprep.subr.mxu0 0.0
  %686 = vmatpush1.msra.mxu0 0.0
  %687 = vmatprep.subr.mxu0 0.0
  %688 = vmatpush1.msra.mxu0 0.0
  %689 = vmatprep.subr.mxu0 0.0
  %690 = vmatpush1.msra.mxu0 0.0
  %691 = vmatprep.subr.mxu0 0.0
  %692 = vmatpush1.msra.mxu0 0.0
  %693 = vmatprep.subr.mxu0 0.0
  %694 = vmatpush1.msra.mxu0 0.0
  %695 = vmatprep.subr.mxu0 0.0
  %696 = vmatpush1.msra.mxu0 0.0
  %697 = vmatprep.subr.mxu0 0.0
  %698 = vmatpush1.msra.mxu0 0.0
  %699 = vmatprep.subr.mxu0 0.0
  %700 = vmatpush1.msra.mxu0 0.0
  %701 = vmatprep.subr.mxu0 0.0
  %702 = vmatpush1.msra.mxu0 0.0
  %703 = vmatprep.subr.mxu0 0.0
  %704 = vmatpush1.msra.mxu0 0.0
  %705 = vmatprep.subr.mxu0 0.0
  %706 = vmatpush1.msra.mxu0 0.0
  %707 = vmatprep.subr.mxu0 0.0
  %708 = vmatpush1.msra.mxu0 0.0
  %709 = vmatprep.subr.mxu0 0.0
  %710 = vmatpush1.msra.mxu0 0.0
  %711 = vmatprep.subr.mxu0 0.0
  %712 = vmatpush1.msra.mxu0 0.0
  %713 = vmatprep.subr.mxu0 0.0
  %714 = vmatpush1.msra.mxu0 0.0
  %715 = vmatprep.subr.mxu0 0.0
  %716 = vmatpush1.msra.mxu0 0.0
  %717 = vmatprep.subr.mxu0 0.0
  %718 = vmatpush1.msra.mxu0 0.0
  %719 = vmatprep.subr.mxu0 0.0
  %720 = vmatpush1.msra.mxu0 0.0
  %721 = vmatprep.subr.mxu0 0.0
  %722 = vmatpush1.msra.mxu0 0.0
  %723 = vmatprep.mubr.f32.mxu0 0.0
  %724 = vmatmul.mubr.f32.gmra.mrb[0].mxu0 %v657
  %v725 = vpop.f32.mrb[0].mxu0
  %v726 = vadd.f32 0.0, %v725
  %v727 = vpop.f32.mrb[0].mxu0
  %728 = vdwg.mxu0
  %v730 = vsel %vm71, %v32, 0
  %732 = vmatprep.subr.mxu0 0.0
  %733 = vmatpush1.msra.mxu0 %v57
  %734 = vmatprep.subr.mxu0 0.0
  %735 = vmatpush1.msra.mxu0 %v58
  %736 = vmatprep.subr.mxu0 0.0
  %737 = vmatpush1.msra.mxu0 0.0
  %738 = vmatprep.subr.mxu0 0.0
  %739 = vmatpush1.msra.mxu0 0.0
  %740 = vmatprep.subr.mxu0 0.0
  %741 = vmatpush1.msra.mxu0 0.0
  %742 = vmatprep.subr.mxu0 0.0
  %743 = vmatpush1.msra.mxu0 0.0
  %744 = vmatprep.subr.mxu0 0.0
  %745 = vmatpush1.msra.mxu0 0.0
  %746 = vmatprep.subr.mxu0 0.0
  %747 = vmatpush1.msra.mxu0 0.0
  %748 = vmatprep.subr.mxu0 0.0
  %749 = vmatpush1.msra.mxu0 0.0
  %750 = vmatprep.subr.mxu0 0.0
  %751 = vmatpush1.msra.mxu0 0.0
  %752 = vmatprep.subr.mxu0 0.0
  %753 = vmatpush1.msra.mxu0 0.0
  %754 = vmatprep.subr.mxu0 0.0
  %755 = vmatpush1.msra.mxu0 0.0
  %756 = vmatprep.subr.mxu0 0.0
  %757 = vmatpush1.msra.mxu0 0.0
  %758 = vmatprep.subr.mxu0 0.0
  %759 = vmatpush1.msra.mxu0 0.0
  %760 = vmatprep.subr.mxu0 0.0
  %761 = vmatpush1.msra.mxu0 0.0
  %762 = vmatprep.subr.mxu0 0.0
  %763 = vmatpush1.msra.mxu0 0.0
  %764 = vmatprep.subr.mxu0 0.0
  %765 = vmatpush1.msra.mxu0 0.0
  %766 = vmatprep.subr.mxu0 0.0
  %767 = vmatpush1.msra.mxu0 0.0
  %768 = vmatprep.subr.mxu0 0.0
  %769 = vmatpush1.msra.mxu0 0.0
  %770 = vmatprep.subr.mxu0 0.0
  %771 = vmatpush1.msra.mxu0 0.0
  %772 = vmatprep.subr.mxu0 0.0
  %773 = vmatpush1.msra.mxu0 0.0
  %774 = vmatprep.subr.mxu0 0.0
  %775 = vmatpush1.msra.mxu0 0.0
  %776 = vmatprep.subr.mxu0 0.0
  %777 = vmatpush1.msra.mxu0 0.0
  %778 = vmatprep.subr.mxu0 0.0
  %779 = vmatpush1.msra.mxu0 0.0
  %780 = vmatprep.subr.mxu0 0.0
  %781 = vmatpush1.msra.mxu0 0.0
  %782 = vmatprep.subr.mxu0 0.0
  %783 = vmatpush1.msra.mxu0 0.0
  %784 = vmatprep.subr.mxu0 0.0
  %785 = vmatpush1.msra.mxu0 0.0
  %786 = vmatprep.subr.mxu0 0.0
  %787 = vmatpush1.msra.mxu0 0.0
  %788 = vmatprep.subr.mxu0 0.0
  %789 = vmatpush1.msra.mxu0 0.0
  %790 = vmatprep.subr.mxu0 0.0
  %791 = vmatpush1.msra.mxu0 0.0
  %792 = vmatprep.subr.mxu0 0.0
  %793 = vmatpush1.msra.mxu0 0.0
  %794 = vmatprep.subr.mxu0 0.0
  %795 = vmatpush1.msra.mxu0 0.0
  %796 = vmatprep.mubr.f32.mxu0 0.0
  %797 = vmatmul.mubr.f32.gmra.mrb[0].mxu0 %v730
  %v798 = vpop.f32.mrb[0].mxu0
  %v799 = vadd.f32 0.0, %v798
  %v800 = vpop.f32.mrb[0].mxu0
  %801 = vdwg.mxu0
  %v803 = vsel %vm71, %v33, 0
  %805 = vmatprep.subr.mxu0 0.0
  %806 = vmatpush1.msra.mxu0 %v59
  %807 = vmatprep.subr.mxu0 0.0
  %808 = vmatpush1.msra.mxu0 %v60
  %809 = vmatprep.subr.mxu0 0.0
  %810 = vmatpush1.msra.mxu0 0.0
  %811 = vmatprep.subr.mxu0 0.0
  %812 = vmatpush1.msra.mxu0 0.0
  %813 = vmatprep.subr.mxu0 0.0
  %814 = vmatpush1.msra.mxu0 0.0
  %815 = vmatprep.subr.mxu0 0.0
  %816 = vmatpush1.msra.mxu0 0.0
  %817 = vmatprep.subr.mxu0 0.0
  %818 = vmatpush1.msra.mxu0 0.0
  %819 = vmatprep.subr.mxu0 0.0
  %820 = vmatpush1.msra.mxu0 0.0
  %821 = vmatprep.subr.mxu0 0.0
  %822 = vmatpush1.msra.mxu0 0.0
  %823 = vmatprep.subr.mxu0 0.0
  %824 = vmatpush1.msra.mxu0 0.0
  %825 = vmatprep.subr.mxu0 0.0
  %826 = vmatpush1.msra.mxu0 0.0
  %827 = vmatprep.subr.mxu0 0.0
  %828 = vmatpush1.msra.mxu0 0.0
  %829 = vmatprep.subr.mxu0 0.0
  %830 = vmatpush1.msra.mxu0 0.0
  %831 = vmatprep.subr.mxu0 0.0
  %832 = vmatpush1.msra.mxu0 0.0
  %833 = vmatprep.subr.mxu0 0.0
  %834 = vmatpush1.msra.mxu0 0.0
  %835 = vmatprep.subr.mxu0 0.0
  %836 = vmatpush1.msra.mxu0 0.0
  %837 = vmatprep.subr.mxu0 0.0
  %838 = vmatpush1.msra.mxu0 0.0
  %839 = vmatprep.subr.mxu0 0.0
  %840 = vmatpush1.msra.mxu0 0.0
  %841 = vmatprep.subr.mxu0 0.0
  %842 = vmatpush1.msra.mxu0 0.0
  %843 = vmatprep.subr.mxu0 0.0
  %844 = vmatpush1.msra.mxu0 0.0
  %845 = vmatprep.subr.mxu0 0.0
  %846 = vmatpush1.msra.mxu0 0.0
  %847 = vmatprep.subr.mxu0 0.0
  %848 = vmatpush1.msra.mxu0 0.0
  %849 = vmatprep.subr.mxu0 0.0
  %850 = vmatpush1.msra.mxu0 0.0
  %851 = vmatprep.subr.mxu0 0.0
  %852 = vmatpush1.msra.mxu0 0.0
  %853 = vmatprep.subr.mxu0 0.0
  %854 = vmatpush1.msra.mxu0 0.0
  %855 = vmatprep.subr.mxu0 0.0
  %856 = vmatpush1.msra.mxu0 0.0
  %857 = vmatprep.subr.mxu0 0.0
  %858 = vmatpush1.msra.mxu0 0.0
  %859 = vmatprep.subr.mxu0 0.0
  %860 = vmatpush1.msra.mxu0 0.0
  %861 = vmatprep.subr.mxu0 0.0
  %862 = vmatpush1.msra.mxu0 0.0
  %863 = vmatprep.subr.mxu0 0.0
  %864 = vmatpush1.msra.mxu0 0.0
  %865 = vmatprep.subr.mxu0 0.0
  %866 = vmatpush1.msra.mxu0 0.0
  %867 = vmatprep.subr.mxu0 0.0
  %868 = vmatpush1.msra.mxu0 0.0
  %869 = vmatprep.mubr.f32.mxu0 0.0
  %870 = vmatmul.mubr.f32.gmra.mrb[0].mxu0 %v803
  %v871 = vpop.f32.mrb[0].mxu0
  %v872 = vadd.f32 0.0, %v871
  %v873 = vpop.f32.mrb[0].mxu0
  %874 = vdwg.mxu0
  %v876 = vsel %vm71, %v34, 0
  %878 = vmatprep.subr.mxu0 0.0
  %879 = vmatpush1.msra.mxu0 %v61
  %880 = vmatprep.subr.mxu0 0.0
  %881 = vmatpush1.msra.mxu0 %v62
  %882 = vmatprep.subr.mxu0 0.0
  %883 = vmatpush1.msra.mxu0 0.0
  %884 = vmatprep.subr.mxu0 0.0
  %885 = vmatpush1.msra.mxu0 0.0
  %886 = vmatprep.subr.mxu0 0.0
  %887 = vmatpush1.msra.mxu0 0.0
  %888 = vmatprep.subr.mxu0 0.0
  %889 = vmatpush1.msra.mxu0 0.0
  %890 = vmatprep.subr.mxu0 0.0
  %891 = vmatpush1.msra.mxu0 0.0
  %892 = vmatprep.subr.mxu0 0.0
  %893 = vmatpush1.msra.mxu0 0.0
  %894 = vmatprep.subr.mxu0 0.0
  %895 = vmatpush1.msra.mxu0 0.0
  %896 = vmatprep.subr.mxu0 0.0
  %897 = vmatpush1.msra.mxu0 0.0
  %898 = vmatprep.subr.mxu0 0.0
  %899 = vmatpush1.msra.mxu0 0.0
  %900 = vmatprep.subr.mxu0 0.0
  %901 = vmatpush1.msra.mxu0 0.0
  %902 = vmatprep.subr.mxu0 0.0
  %903 = vmatpush1.msra.mxu0 0.0
  %904 = vmatprep.subr.mxu0 0.0
  %905 = vmatpush1.msra.mxu0 0.0
  %906 = vmatprep.subr.mxu0 0.0
  %907 = vmatpush1.msra.mxu0 0.0
  %908 = vmatprep.subr.mxu0 0.0
  %909 = vmatpush1.msra.mxu0 0.0
  %910 = vmatprep.subr.mxu0 0.0
  %911 = vmatpush1.msra.mxu0 0.0
  %912 = vmatprep.subr.mxu0 0.0
  %913 = vmatpush1.msra.mxu0 0.0
  %914 = vmatprep.subr.mxu0 0.0
  %915 = vmatpush1.msra.mxu0 0.0
  %916 = vmatprep.subr.mxu0 0.0
  %917 = vmatpush1.msra.mxu0 0.0
  %918 = vmatprep.subr.mxu0 0.0
  %919 = vmatpush1.msra.mxu0 0.0
  %920 = vmatprep.subr.mxu0 0.0
  %921 = vmatpush1.msra.mxu0 0.0
  %922 = vmatprep.subr.mxu0 0.0
  %923 = vmatpush1.msra.mxu0 0.0
  %924 = vmatprep.subr.mxu0 0.0
  %925 = vmatpush1.msra.mxu0 0.0
  %926 = vmatprep.subr.mxu0 0.0
  %927 = vmatpush1.msra.mxu0 0.0
  %928 = vmatprep.subr.mxu0 0.0
  %929 = vmatpush1.msra.mxu0 0.0
  %930 = vmatprep.subr.mxu0 0.0
  %931 = vmatpush1.msra.mxu0 0.0
  %932 = vmatprep.subr.mxu0 0.0
  %933 = vmatpush1.msra.mxu0 0.0
  %934 = vmatprep.subr.mxu0 0.0
  %935 = vmatpush1.msra.mxu0 0.0
  %936 = vmatprep.subr.mxu0 0.0
  %937 = vmatpush1.msra.mxu0 0.0
  %938 = vmatprep.subr.mxu0 0.0
  %939 = vmatpush1.msra.mxu0 0.0
  %940 = vmatprep.subr.mxu0 0.0
  %941 = vmatpush1.msra.mxu0 0.0
  %942 = vmatprep.mubr.f32.mxu0 0.0
  %943 = vmatmul.mubr.f32.gmra.mrb[0].mxu0 %v876
  %v944 = vpop.f32.mrb[0].mxu0
  %v945 = vadd.f32 0.0, %v944
  %v946 = vpop.f32.mrb[0].mxu0
  %947 = vdwg.mxu0
  %v949 = vsel %vm71, %v35, 0
  %951 = vmatprep.subr.mxu0 0.0
  %952 = vmatpush1.msra.mxu0 %v63
  %953 = vmatprep.subr.mxu0 0.0
  %954 = vmatpush1.msra.mxu0 %v64
  %955 = vmatprep.subr.mxu0 0.0
  %956 = vmatpush1.msra.mxu0 0.0
  %957 = vmatprep.subr.mxu0 0.0
  %958 = vmatpush1.msra.mxu0 0.0
  %959 = vmatprep.subr.mxu0 0.0
  %960 = vmatpush1.msra.mxu0 0.0
  %961 = vmatprep.subr.mxu0 0.0
  %962 = vmatpush1.msra.mxu0 0.0
  %963 = vmatprep.subr.mxu0 0.0
  %964 = vmatpush1.msra.mxu0 0.0
  %965 = vmatprep.subr.mxu0 0.0
  %966 = vmatpush1.msra.mxu0 0.0
  %967 = vmatprep.subr.mxu0 0.0
  %968 = vmatpush1.msra.mxu0 0.0
  %969 = vmatprep.subr.mxu0 0.0
  %970 = vmatpush1.msra.mxu0 0.0
  %971 = vmatprep.subr.mxu0 0.0
  %972 = vmatpush1.msra.mxu0 0.0
  %973 = vmatprep.subr.mxu0 0.0
  %974 = vmatpush1.msra.mxu0 0.0
  %975 = vmatprep.subr.mxu0 0.0
  %976 = vmatpush1.msra.mxu0 0.0
  %977 = vmatprep.subr.mxu0 0.0
  %978 = vmatpush1.msra.mxu0 0.0
  %979 = vmatprep.subr.mxu0 0.0
  %980 = vmatpush1.msra.mxu0 0.0
  %981 = vmatprep.subr.mxu0 0.0
  %982 = vmatpush1.msra.mxu0 0.0
  %983 = vmatprep.subr.mxu0 0.0
  %984 = vmatpush1.msra.mxu0 0.0
  %985 = vmatprep.subr.mxu0 0.0
  %986 = vmatpush1.msra.mxu0 0.0
  %987 = vmatprep.subr.mxu0 0.0
  %988 = vmatpush1.msra.mxu0 0.0
  %989 = vmatprep.subr.mxu0 0.0
  %990 = vmatpush1.msra.mxu0 0.0
  %991 = vmatprep.subr.mxu0 0.0
  %992 = vmatpush1.msra.mxu0 0.0
  %993 = vmatprep.subr.mxu0 0.0
  %994 = vmatpush1.msra.mxu0 0.0
  %995 = vmatprep.subr.mxu0 0.0
  %996 = vmatpush1.msra.mxu0 0.0
  %997 = vmatprep.subr.mxu0 0.0
  %998 = vmatpush1.msra.mxu0 0.0
  %999 = vmatprep.subr.mxu0 0.0
  %1000 = vmatpush1.msra.mxu0 0.0
  %1001 = vmatprep.subr.mxu0 0.0
  %1002 = vmatpush1.msra.mxu0 0.0
  %1003 = vmatprep.subr.mxu0 0.0
  %1004 = vmatpush1.msra.mxu0 0.0
  %1005 = vmatprep.subr.mxu0 0.0
  %1006 = vmatpush1.msra.mxu0 0.0
  %1007 = vmatprep.subr.mxu0 0.0
  %1008 = vmatpush1.msra.mxu0 0.0
  %1009 = vmatprep.subr.mxu0 0.0
  %1010 = vmatpush1.msra.mxu0 0.0
  %1011 = vmatprep.subr.mxu0 0.0
  %1012 = vmatpush1.msra.mxu0 0.0
  %1013 = vmatprep.subr.mxu0 0.0
  %1014 = vmatpush1.msra.mxu0 0.0
  %1015 = vmatprep.mubr.f32.mxu0 0.0
  %1016 = vmatmul.mubr.f32.gmra.mrb[0].mxu0 %v949
  %v1017 = vpop.f32.mrb[0].mxu0
  %v1018 = vadd.f32 0.0, %v1017
  %v1019 = vpop.f32.mrb[0].mxu0
  %1020 = vdwg.mxu0
  %v1022 = vsel %vm71, %v36, 0
  %1024 = vmatprep.subr.mxu0 0.0
  %1025 = vmatpush1.msra.mxu0 %v65
  %1026 = vmatprep.subr.mxu0 0.0
  %1027 = vmatpush1.msra.mxu0 %v66
  %1028 = vmatprep.subr.mxu0 0.0
  %1029 = vmatpush1.msra.mxu0 0.0
  %1030 = vmatprep.subr.mxu0 0.0
  %1031 = vmatpush1.msra.mxu0 0.0
  %1032 = vmatprep.subr.mxu0 0.0
  %1033 = vmatpush1.msra.mxu0 0.0
  %1034 = vmatprep.subr.mxu0 0.0
  %1035 = vmatpush1.msra.mxu0 0.0
  %1036 = vmatprep.subr.mxu0 0.0
  %1037 = vmatpush1.msra.mxu0 0.0
  %1038 = vmatprep.subr.mxu0 0.0
  %1039 = vmatpush1.msra.mxu0 0.0
  %1040 = vmatprep.subr.mxu0 0.0
  %1041 = vmatpush1.msra.mxu0 0.0
  %1042 = vmatprep.subr.mxu0 0.0
  %1043 = vmatpush1.msra.mxu0 0.0
  %1044 = vmatprep.subr.mxu0 0.0
  %1045 = vmatpush1.msra.mxu0 0.0
  %1046 = vmatprep.subr.mxu0 0.0
  %1047 = vmatpush1.msra.mxu0 0.0
  %1048 = vmatprep.subr.mxu0 0.0
  %1049 = vmatpush1.msra.mxu0 0.0
  %1050 = vmatprep.subr.mxu0 0.0
  %1051 = vmatpush1.msra.mxu0 0.0
  %1052 = vmatprep.subr.mxu0 0.0
  %1053 = vmatpush1.msra.mxu0 0.0
  %1054 = vmatprep.subr.mxu0 0.0
  %1055 = vmatpush1.msra.mxu0 0.0
  %1056 = vmatprep.subr.mxu0 0.0
  %1057 = vmatpush1.msra.mxu0 0.0
  %1058 = vmatprep.subr.mxu0 0.0
  %1059 = vmatpush1.msra.mxu0 0.0
  %1060 = vmatprep.subr.mxu0 0.0
  %1061 = vmatpush1.msra.mxu0 0.0
  %1062 = vmatprep.subr.mxu0 0.0
  %1063 = vmatpush1.msra.mxu0 0.0
  %1064 = vmatprep.subr.mxu0 0.0
  %1065 = vmatpush1.msra.mxu0 0.0
  %1066 = vmatprep.subr.mxu0 0.0
  %1067 = vmatpush1.msra.mxu0 0.0
  %1068 = vmatprep.subr.mxu0 0.0
  %1069 = vmatpush1.msra.mxu0 0.0
  %1070 = vmatprep.subr.mxu0 0.0
  %1071 = vmatpush1.msra.mxu0 0.0
  %1072 = vmatprep.subr.mxu0 0.0
  %1073 = vmatpush1.msra.mxu0 0.0
  %1074 = vmatprep.subr.mxu0 0.0
  %1075 = vmatpush1.msra.mxu0 0.0
  %1076 = vmatprep.subr.mxu0 0.0
  %1077 = vmatpush1.msra.mxu0 0.0
  %1078 = vmatprep.subr.mxu0 0.0
  %1079 = vmatpush1.msra.mxu0 0.0
  %1080 = vmatprep.subr.mxu0 0.0
  %1081 = vmatpush1.msra.mxu0 0.0
  %1082 = vmatprep.subr.mxu0 0.0
  %1083 = vmatpush1.msra.mxu0 0.0
  %1084 = vmatprep.subr.mxu0 0.0
  %1085 = vmatpush1.msra.mxu0 0.0
  %1086 = vmatprep.subr.mxu0 0.0
  %1087 = vmatpush1.msra.mxu0 0.0
  %1088 = vmatprep.mubr.f32.mxu0 0.0
  %1089 = vmatmul.mubr.f32.gmra.mrb[0].mxu0 %v1022
  %v1090 = vpop.f32.mrb[0].mxu0
  %v1091 = vadd.f32 0.0, %v1090
  %v1092 = vpop.f32.mrb[0].mxu0
  %1093 = vdwg.mxu0
  %v1095 = vsel %vm71, %v37, 0
  %1097 = vmatprep.subr.mxu0 0.0
  %1098 = vmatpush1.msra.mxu0 %v67
  %1099 = vmatprep.subr.mxu0 0.0
  %1100 = vmatpush1.msra.mxu0 %v68
  %1101 = vmatprep.subr.mxu0 0.0
  %1102 = vmatpush1.msra.mxu0 0.0
  %1103 = vmatprep.subr.mxu0 0.0
  %1104 = vmatpush1.msra.mxu0 0.0
  %1105 = vmatprep.subr.mxu0 0.0
  %1106 = vmatpush1.msra.mxu0 0.0
  %1107 = vmatprep.subr.mxu0 0.0
  %1108 = vmatpush1.msra.mxu0 0.0
  %1109 = vmatprep.subr.mxu0 0.0
  %1110 = vmatpush1.msra.mxu0 0.0
  %1111 = vmatprep.subr.mxu0 0.0
  %1112 = vmatpush1.msra.mxu0 0.0
  %1113 = vmatprep.subr.mxu0 0.0
  %1114 = vmatpush1.msra.mxu0 0.0
  %1115 = vmatprep.subr.mxu0 0.0
  %1116 = vmatpush1.msra.mxu0 0.0
  %1117 = vmatprep.subr.mxu0 0.0
  %1118 = vmatpush1.msra.mxu0 0.0
  %1119 = vmatprep.subr.mxu0 0.0
  %1120 = vmatpush1.msra.mxu0 0.0
  %1121 = vmatprep.subr.mxu0 0.0
  %1122 = vmatpush1.msra.mxu0 0.0
  %1123 = vmatprep.subr.mxu0 0.0
  %1124 = vmatpush1.msra.mxu0 0.0
  %1125 = vmatprep.subr.mxu0 0.0
  %1126 = vmatpush1.msra.mxu0 0.0
  %1127 = vmatprep.subr.mxu0 0.0
  %1128 = vmatpush1.msra.mxu0 0.0
  %1129 = vmatprep.subr.mxu0 0.0
  %1130 = vmatpush1.msra.mxu0 0.0
  %1131 = vmatprep.subr.mxu0 0.0
  %1132 = vmatpush1.msra.mxu0 0.0
  %1133 = vmatprep.subr.mxu0 0.0
  %1134 = vmatpush1.msra.mxu0 0.0
  %1135 = vmatprep.subr.mxu0 0.0
  %1136 = vmatpush1.msra.mxu0 0.0
  %1137 = vmatprep.subr.mxu0 0.0
  %1138 = vmatpush1.msra.mxu0 0.0
  %1139 = vmatprep.subr.mxu0 0.0
  %1140 = vmatpush1.msra.mxu0 0.0
  %1141 = vmatprep.subr.mxu0 0.0
  %1142 = vmatpush1.msra.mxu0 0.0
  %1143 = vmatprep.subr.mxu0 0.0
  %1144 = vmatpush1.msra.mxu0 0.0
  %1145 = vmatprep.subr.mxu0 0.0
  %1146 = vmatpush1.msra.mxu0 0.0
  %1147 = vmatprep.subr.mxu0 0.0
  %1148 = vmatpush1.msra.mxu0 0.0
  %1149 = vmatprep.subr.mxu0 0.0
  %1150 = vmatpush1.msra.mxu0 0.0
  %1151 = vmatprep.subr.mxu0 0.0
  %1152 = vmatpush1.msra.mxu0 0.0
  %1153 = vmatprep.subr.mxu0 0.0
  %1154 = vmatpush1.msra.mxu0 0.0
  %1155 = vmatprep.subr.mxu0 0.0
  %1156 = vmatpush1.msra.mxu0 0.0
  %1157 = vmatprep.subr.mxu0 0.0
  %1158 = vmatpush1.msra.mxu0 0.0
  %1159 = vmatprep.subr.mxu0 0.0
  %1160 = vmatpush1.msra.mxu0 0.0
  %1161 = vmatprep.mubr.f32.mxu0 0.0
  %1162 = vmatmul.mubr.f32.gmra.mrb[0].mxu0 %v1095
  %v1163 = vpop.f32.mrb[0].mxu0
  %v1164 = vadd.f32 0.0, %v1163
  %v1165 = vpop.f32.mrb[0].mxu0
  %1166 = vdwg.mxu0
  %v1168 = vsel %vm71, %v38, 0
  %1170 = vmatprep.subr.mxu0 0.0
  %1171 = vmatpush1.msra.mxu0 %v69
  %1172 = vmatprep.subr.mxu0 0.0
  %1173 = vmatpush1.msra.mxu0 %v70
  %1174 = vmatprep.subr.mxu0 0.0
  %1175 = vmatpush1.msra.mxu0 0.0
  %1176 = vmatprep.subr.mxu0 0.0
  %1177 = vmatpush1.msra.mxu0 0.0
  %1178 = vmatprep.subr.mxu0 0.0
  %1179 = vmatpush1.msra.mxu0 0.0
  %1180 = vmatprep.subr.mxu0 0.0
  %1181 = vmatpush1.msra.mxu0 0.0
  %1182 = vmatprep.subr.mxu0 0.0
  %1183 = vmatpush1.msra.mxu0 0.0
  %1184 = vmatprep.subr.mxu0 0.0
  %1185 = vmatpush1.msra.mxu0 0.0
  %1186 = vmatprep.subr.mxu0 0.0
  %1187 = vmatpush1.msra.mxu0 0.0
  %1188 = vmatprep.subr.mxu0 0.0
  %1189 = vmatpush1.msra.mxu0 0.0
  %1190 = vmatprep.subr.mxu0 0.0
  %1191 = vmatpush1.msra.mxu0 0.0
  %1192 = vmatprep.subr.mxu0 0.0
  %1193 = vmatpush1.msra.mxu0 0.0
  %1194 = vmatprep.subr.mxu0 0.0
  %1195 = vmatpush1.msra.mxu0 0.0
  %1196 = vmatprep.subr.mxu0 0.0
  %1197 = vmatpush1.msra.mxu0 0.0
  %1198 = vmatprep.subr.mxu0 0.0
  %1199 = vmatpush1.msra.mxu0 0.0
  %1200 = vmatprep.subr.mxu0 0.0
  %1201 = vmatpush1.msra.mxu0 0.0
  %1202 = vmatprep.subr.mxu0 0.0
  %1203 = vmatpush1.msra.mxu0 0.0
  %1204 = vmatprep.subr.mxu0 0.0
  %1205 = vmatpush1.msra.mxu0 0.0
  %1206 = vmatprep.subr.mxu0 0.0
  %1207 = vmatpush1.msra.mxu0 0.0
  %1208 = vmatprep.subr.mxu0 0.0
  %1209 = vmatpush1.msra.mxu0 0.0
  %1210 = vmatprep.subr.mxu0 0.0
  %1211 = vmatpush1.msra.mxu0 0.0
  %1212 = vmatprep.subr.mxu0 0.0
  %1213 = vmatpush1.msra.mxu0 0.0
  %1214 = vmatprep.subr.mxu0 0.0
  %1215 = vmatpush1.msra.mxu0 0.0
  %1216 = vmatprep.subr.mxu0 0.0
  %1217 = vmatpush1.msra.mxu0 0.0
  %1218 = vmatprep.subr.mxu0 0.0
  %1219 = vmatpush1.msra.mxu0 0.0
  %1220 = vmatprep.subr.mxu0 0.0
  %1221 = vmatpush1.msra.mxu0 0.0
  %1222 = vmatprep.subr.mxu0 0.0
  %1223 = vmatpush1.msra.mxu0 0.0
  %1224 = vmatprep.subr.mxu0 0.0
  %1225 = vmatpush1.msra.mxu0 0.0
  %1226 = vmatprep.subr.mxu0 0.0
  %1227 = vmatpush1.msra.mxu0 0.0
  %1228 = vmatprep.subr.mxu0 0.0
  %1229 = vmatpush1.msra.mxu0 0.0
  %1230 = vmatprep.subr.mxu0 0.0
  %1231 = vmatpush1.msra.mxu0 0.0
  %1232 = vmatprep.subr.mxu0 0.0
  %1233 = vmatpush1.msra.mxu0 0.0
  %1234 = vmatprep.mubr.f32.mxu0 0.0
  %1235 = vmatmul.mubr.f32.gmra.mrb[0].mxu0 %v1168
  %v1236 = vpop.f32.mrb[0].mxu0
  %v1237 = vadd.f32 0.0, %v1236
  %v1238 = vpop.f32.mrb[0].mxu0
  %1239 = vdwg.mxu0
  %vm1240 = vcmp.gt.f32.partialorder %v142, 0.0
  %vm1241 = vcmp.gt.f32.partialorder %v215, 0.0
  %vm1242 = vcmp.gt.f32.partialorder %v288, 0.0
  %vm1243 = vcmp.gt.f32.partialorder %v361, 0.0
  %vm1244 = vcmp.gt.f32.partialorder %v434, 0.0
  %vm1245 = vcmp.gt.f32.partialorder %v507, 0.0
  %vm1246 = vcmp.gt.f32.partialorder %v580, 0.0
  %vm1247 = vcmp.gt.f32.partialorder %v653, 0.0
  %vm1248 = vcmp.gt.f32.partialorder %v726, 0.0
  %vm1249 = vcmp.gt.f32.partialorder %v799, 0.0
  %vm1250 = vcmp.gt.f32.partialorder %v872, 0.0
  %vm1251 = vcmp.gt.f32.partialorder %v945, 0.0
  %vm1252 = vcmp.gt.f32.partialorder %v1018, 0.0
  %vm1253 = vcmp.gt.f32.partialorder %v1091, 0.0
  %vm1254 = vcmp.gt.f32.partialorder %v1164, 0.0
  %vm1255 = vcmp.gt.f32.partialorder %v1237, 0.0
  %v1256 = vmul.f32 %v142, 0.01
  %v1257 = vmul.f32 %v215, 0.01
  %v1258 = vmul.f32 %v288, 0.01
  %v1259 = vmul.f32 %v361, 0.01
  %v1260 = vmul.f32 %v434, 0.01
  %v1261 = vmul.f32 %v507, 0.01
  %v1262 = vmul.f32 %v580, 0.01
  %v1263 = vmul.f32 %v653, 0.01
  %v1264 = vmul.f32 %v726, 0.01
  %v1265 = vmul.f32 %v799, 0.01
  %v1266 = vmul.f32 %v872, 0.01
  %v1267 = vmul.f32 %v945, 0.01
  %v1268 = vmul.f32 %v1018, 0.01
  %v1269 = vmul.f32 %v1091, 0.01
  %v1270 = vmul.f32 %v1164, 0.01
  %v1271 = vmul.f32 %v1237, 0.01
  %v1272 = vsel %vm1240, %v142, %v1256
  %v1273 = vsel %vm1241, %v215, %v1257
  %v1274 = vsel %vm1242, %v288, %v1258
  %v1275 = vsel %vm1243, %v361, %v1259
  %v1276 = vsel %vm1244, %v434, %v1260
  %v1277 = vsel %vm1245, %v507, %v1261
  %v1278 = vsel %vm1246, %v580, %v1262
  %v1279 = vsel %vm1247, %v653, %v1263
  %v1280 = vsel %vm1248, %v726, %v1264
  %v1281 = vsel %vm1249, %v799, %v1265
  %v1282 = vsel %vm1250, %v872, %v1266
  %v1283 = vsel %vm1251, %v945, %v1267
  %v1284 = vsel %vm1252, %v1018, %v1268
  %v1285 = vsel %vm1253, %v1091, %v1269
  %v1286 = vsel %vm1254, %v1164, %v1270
  %v1287 = vsel %vm1255, %v1237, %v1271
  %1288 = vxpose.xlu0.b32.start [1/16] %v23, 128
  %1289 = vxpose.xlu0.b32.cont [2/16] 0.0, 128
  %1290 = vxpose.xlu0.b32.cont [3/16] 0.0, 128
  %1291 = vxpose.xlu0.b32.cont [4/16] 0.0, 128
  %1292 = vxpose.xlu0.b32.cont [5/16] 0.0, 128
  %1293 = vxpose.xlu0.b32.cont [6/16] 0.0, 128
  %1294 = vxpose.xlu0.b32.cont [7/16] 0.0, 128
  %1295 = vxpose.xlu0.b32.cont [8/16] 0.0, 128
  %1296 = vxpose.xlu0.b32.cont [9/16] 0.0, 128
  %1297 = vxpose.xlu0.b32.cont [10/16] 0.0, 128
  %1298 = vxpose.xlu0.b32.cont [11/16] 0.0, 128
  %1299 = vxpose.xlu0.b32.cont [12/16] 0.0, 128
  %1300 = vxpose.xlu0.b32.cont [13/16] 0.0, 128
  %1301 = vxpose.xlu0.b32.cont [14/16] 0.0, 128
  %1302 = vxpose.xlu0.b32.cont [15/16] 0.0, 128
  %1303 = vxpose.xlu0.b32.end [16/16] 0.0, 128
  %v1304 = vpop.trf.xlu0
  %v1305 = vpop.trf.xlu0
  %v1306 = vpop.trf.xlu0
  %v1307 = vpop.trf.xlu0
  %v1308 = vpop.trf.xlu0
  %v1309 = vpop.trf.xlu0
  %v1310 = vpop.trf.xlu0
  %v1311 = vpop.trf.xlu0
  %v1312 = vpop.trf.xlu0
  %v1313 = vpop.trf.xlu0
  %v1314 = vpop.trf.xlu0
  %v1315 = vpop.trf.xlu0
  %v1316 = vpop.trf.xlu0
  %v1317 = vpop.trf.xlu0
  %v1318 = vpop.trf.xlu0
  %v1319 = vpop.trf.xlu0
  %vm1320 = vcmask 64512
  %v1322 = vsel %vm1320, %v1304, 0
  %v1325 = vsel %vm1320, %v1305, 0
  %1327 = vmatprep.subr.mxu0 0.0
  %1328 = vmatpush1.msra.mxu0 %v1272
  %1329 = vmatprep.subr.mxu0 0.0
  %1330 = vmatpush1.msra.mxu0 0.0
  %1331 = vmatprep.subr.mxu0 0.0
  %1332 = vmatpush1.msra.mxu0 0.0
  %1333 = vmatprep.subr.mxu0 0.0
  %1334 = vmatpush1.msra.mxu0 0.0
  %1335 = vmatprep.subr.mxu0 0.0
  %1336 = vmatpush1.msra.mxu0 0.0
  %1337 = vmatprep.subr.mxu0 0.0
  %1338 = vmatpush1.msra.mxu0 0.0
  %1339 = vmatprep.subr.mxu0 0.0
  %1340 = vmatpush1.msra.mxu0 0.0
  %1341 = vmatprep.subr.mxu0 0.0
  %1342 = vmatpush1.msra.mxu0 0.0
  %1343 = vmatprep.subr.mxu0 0.0
  %1344 = vmatpush1.msra.mxu0 0.0
  %1345 = vmatprep.subr.mxu0 0.0
  %1346 = vmatpush1.msra.mxu0 0.0
  %1347 = vmatprep.subr.mxu0 0.0
  %1348 = vmatpush1.msra.mxu0 0.0
  %1349 = vmatprep.subr.mxu0 0.0
  %1350 = vmatpush1.msra.mxu0 0.0
  %1351 = vmatprep.subr.mxu0 0.0
  %1352 = vmatpush1.msra.mxu0 0.0
  %1353 = vmatprep.subr.mxu0 0.0
  %1354 = vmatpush1.msra.mxu0 0.0
  %1355 = vmatprep.subr.mxu0 0.0
  %1356 = vmatpush1.msra.mxu0 0.0
  %1357 = vmatprep.subr.mxu0 0.0
  %1358 = vmatpush1.msra.mxu0 0.0
  %1359 = vmatprep.subr.mxu0 0.0
  %1360 = vmatpush1.msra.mxu0 0.0
  %1361 = vmatprep.subr.mxu0 0.0
  %1362 = vmatpush1.msra.mxu0 0.0
  %1363 = vmatprep.subr.mxu0 0.0
  %1364 = vmatpush1.msra.mxu0 0.0
  %1365 = vmatprep.subr.mxu0 0.0
  %1366 = vmatpush1.msra.mxu0 0.0
  %1367 = vmatprep.subr.mxu0 0.0
  %1368 = vmatpush1.msra.mxu0 0.0
  %1369 = vmatprep.subr.mxu0 0.0
  %1370 = vmatpush1.msra.mxu0 0.0
  %1371 = vmatprep.subr.mxu0 0.0
  %1372 = vmatpush1.msra.mxu0 0.0
  %1373 = vmatprep.subr.mxu0 0.0
  %1374 = vmatpush1.msra.mxu0 0.0
  %1375 = vmatprep.subr.mxu0 0.0
  %1376 = vmatpush1.msra.mxu0 0.0
  %1377 = vmatprep.subr.mxu0 0.0
  %1378 = vmatpush1.msra.mxu0 0.0
  %1379 = vmatprep.subr.mxu0 0.0
  %1380 = vmatpush1.msra.mxu0 0.0
  %1381 = vmatprep.subr.mxu0 0.0
  %1382 = vmatpush1.msra.mxu0 0.0
  %1383 = vmatprep.subr.mxu0 0.0
  %1384 = vmatpush1.msra.mxu0 0.0
  %1385 = vmatprep.subr.mxu0 0.0
  %1386 = vmatpush1.msra.mxu0 0.0
  %1387 = vmatprep.subr.mxu0 0.0
  %1388 = vmatpush1.msra.mxu0 0.0
  %1389 = vmatprep.subr.mxu0 0.0
  %1390 = vmatpush1.msra.mxu0 0.0
  %1391 = vmatprep.mubr.f32.mxu0 0.0
  %1392 = vmatmul.mubr.f32.gmra.mrb[0].mxu0 %v1322
  %v1393 = vpop.f32.mrb[0].mxu0
  %v1394 = vadd.f32 0.0, %v1393
  %v1395 = vpop.f32.mrb[0].mxu0
  %1396 = vmatprep.mubr.f32.mxu0 0.0
  %1397 = vmatmul.mubr.f32.gmra.mrb[0].mxu0 %v1325
  %v1398 = vpop.f32.mrb[0].mxu0
  %v1399 = vadd.f32 0.0, %v1398
  %v1400 = vpop.f32.mrb[0].mxu0
  %1401 = vdwg.mxu0
  %1402 = vxpose.xlu0.b32.start [1/16] %v24, 128
  %1403 = vxpose.xlu0.b32.cont [2/16] 0.0, 128
  %1404 = vxpose.xlu0.b32.cont [3/16] 0.0, 128
  %1405 = vxpose.xlu0.b32.cont [4/16] 0.0, 128
  %1406 = vxpose.xlu0.b32.cont [5/16] 0.0, 128
  %1407 = vxpose.xlu0.b32.cont [6/16] 0.0, 128
  %1408 = vxpose.xlu0.b32.cont [7/16] 0.0, 128
  %1409 = vxpose.xlu0.b32.cont [8/16] 0.0, 128
  %1410 = vxpose.xlu0.b32.cont [9/16] 0.0, 128
  %1411 = vxpose.xlu0.b32.cont [10/16] 0.0, 128
  %1412 = vxpose.xlu0.b32.cont [11/16] 0.0, 128
  %1413 = vxpose.xlu0.b32.cont [12/16] 0.0, 128
  %1414 = vxpose.xlu0.b32.cont [13/16] 0.0, 128
  %1415 = vxpose.xlu0.b32.cont [14/16] 0.0, 128
  %1416 = vxpose.xlu0.b32.cont [15/16] 0.0, 128
  %1417 = vxpose.xlu0.b32.end [16/16] 0.0, 128
  %v1418 = vpop.trf.xlu0
  %v1419 = vpop.trf.xlu0
  %v1420 = vpop.trf.xlu0
  %v1421 = vpop.trf.xlu0
  %v1422 = vpop.trf.xlu0
  %v1423 = vpop.trf.xlu0
  %v1424 = vpop.trf.xlu0
  %v1425 = vpop.trf.xlu0
  %v1426 = vpop.trf.xlu0
  %v1427 = vpop.trf.xlu0
  %v1428 = vpop.trf.xlu0
  %v1429 = vpop.trf.xlu0
  %v1430 = vpop.trf.xlu0
  %v1431 = vpop.trf.xlu0
  %v1432 = vpop.trf.xlu0
  %v1433 = vpop.trf.xlu0
  %v1435 = vsel %vm1320, %v1418, 0
  %v1438 = vsel %vm1320, %v1419, 0
  %1440 = vmatprep.subr.mxu0 0.0
  %1441 = vmatpush1.msra.mxu0 %v1273
  %1442 = vmatprep.subr.mxu0 0.0
  %1443 = vmatpush1.msra.mxu0 0.0
  %1444 = vmatprep.subr.mxu0 0.0
  %1445 = vmatpush1.msra.mxu0 0.0
  %1446 = vmatprep.subr.mxu0 0.0
  %1447 = vmatpush1.msra.mxu0 0.0
  %1448 = vmatprep.subr.mxu0 0.0
  %1449 = vmatpush1.msra.mxu0 0.0
  %1450 = vmatprep.subr.mxu0 0.0
  %1451 = vmatpush1.msra.mxu0 0.0
  %1452 = vmatprep.subr.mxu0 0.0
  %1453 = vmatpush1.msra.mxu0 0.0
  %1454 = vmatprep.subr.mxu0 0.0
  %1455 = vmatpush1.msra.mxu0 0.0
  %1456 = vmatprep.subr.mxu0 0.0
  %1457 = vmatpush1.msra.mxu0 0.0
  %1458 = vmatprep.subr.mxu0 0.0
  %1459 = vmatpush1.msra.mxu0 0.0
  %1460 = vmatprep.subr.mxu0 0.0
  %1461 = vmatpush1.msra.mxu0 0.0
  %1462 = vmatprep.subr.mxu0 0.0
  %1463 = vmatpush1.msra.mxu0 0.0
  %1464 = vmatprep.subr.mxu0 0.0
  %1465 = vmatpush1.msra.mxu0 0.0
  %1466 = vmatprep.subr.mxu0 0.0
  %1467 = vmatpush1.msra.mxu0 0.0
  %1468 = vmatprep.subr.mxu0 0.0
  %1469 = vmatpush1.msra.mxu0 0.0
  %1470 = vmatprep.subr.mxu0 0.0
  %1471 = vmatpush1.msra.mxu0 0.0
  %1472 = vmatprep.subr.mxu0 0.0
  %1473 = vmatpush1.msra.mxu0 0.0
  %1474 = vmatprep.subr.mxu0 0.0
  %1475 = vmatpush1.msra.mxu0 0.0
  %1476 = vmatprep.subr.mxu0 0.0
  %1477 = vmatpush1.msra.mxu0 0.0
  %1478 = vmatprep.subr.mxu0 0.0
  %1479 = vmatpush1.msra.mxu0 0.0
  %1480 = vmatprep.subr.mxu0 0.0
  %1481 = vmatpush1.msra.mxu0 0.0
  %1482 = vmatprep.subr.mxu0 0.0
  %1483 = vmatpush1.msra.mxu0 0.0
  %1484 = vmatprep.subr.mxu0 0.0
  %1485 = vmatpush1.msra.mxu0 0.0
  %1486 = vmatprep.subr.mxu0 0.0
  %1487 = vmatpush1.msra.mxu0 0.0
  %1488 = vmatprep.subr.mxu0 0.0
  %1489 = vmatpush1.msra.mxu0 0.0
  %1490 = vmatprep.subr.mxu0 0.0
  %1491 = vmatpush1.msra.mxu0 0.0
  %1492 = vmatprep.subr.mxu0 0.0
  %1493 = vmatpush1.msra.mxu0 0.0
  %1494 = vmatprep.subr.mxu0 0.0
  %1495 = vmatpush1.msra.mxu0 0.0
  %1496 = vmatprep.subr.mxu0 0.0
  %1497 = vmatpush1.msra.mxu0 0.0
  %1498 = vmatprep.subr.mxu0 0.0
  %1499 = vmatpush1.msra.mxu0 0.0
  %1500 = vmatprep.subr.mxu0 0.0
  %1501 = vmatpush1.msra.mxu0 0.0
  %1502 = vmatprep.subr.mxu0 0.0
  %1503 = vmatpush1.msra.mxu0 0.0
  %1504 = vmatprep.mubr.f32.mxu0 0.0
  %1505 = vmatmul.mubr.f32.gmra.mrb[0].mxu0 %v1435
  %v1506 = vpop.f32.mrb[0].mxu0
  %v1507 = vadd.f32 0.0, %v1506
  %v1508 = vpop.f32.mrb[0].mxu0
  %1509 = vmatprep.mubr.f32.mxu0 0.0
  %1510 = vmatmul.mubr.f32.gmra.mrb[0].mxu0 %v1438
  %v1511 = vpop.f32.mrb[0].mxu0
  %v1512 = vadd.f32 0.0, %v1511
  %v1513 = vpop.f32.mrb[0].mxu0
  %1514 = vdwg.mxu0
  %1515 = vxpose.xlu0.b32.start [1/16] %v25, 128
  %1516 = vxpose.xlu0.b32.cont [2/16] 0.0, 128
  %1517 = vxpose.xlu0.b32.cont [3/16] 0.0, 128
  %1518 = vxpose.xlu0.b32.cont [4/16] 0.0, 128
  %1519 = vxpose.xlu0.b32.cont [5/16] 0.0, 128
  %1520 = vxpose.xlu0.b32.cont [6/16] 0.0, 128
  %1521 = vxpose.xlu0.b32.cont [7/16] 0.0, 128
  %1522 = vxpose.xlu0.b32.cont [8/16] 0.0, 128
  %1523 = vxpose.xlu0.b32.cont [9/16] 0.0, 128
  %1524 = vxpose.xlu0.b32.cont [10/16] 0.0, 128
  %1525 = vxpose.xlu0.b32.cont [11/16] 0.0, 128
  %1526 = vxpose.xlu0.b32.cont [12/16] 0.0, 128
  %1527 = vxpose.xlu0.b32.cont [13/16] 0.0, 128
  %1528 = vxpose.xlu0.b32.cont [14/16] 0.0, 128
  %1529 = vxpose.xlu0.b32.cont [15/16] 0.0, 128
  %1530 = vxpose.xlu0.b32.end [16/16] 0.0, 128
  %v1531 = vpop.trf.xlu0
  %v1532 = vpop.trf.xlu0
  %v1533 = vpop.trf.xlu0
  %v1534 = vpop.trf.xlu0
  %v1535 = vpop.trf.xlu0
  %v1536 = vpop.trf.xlu0
  %v1537 = vpop.trf.xlu0
  %v1538 = vpop.trf.xlu0
  %v1539 = vpop.trf.xlu0
  %v1540 = vpop.trf.xlu0
  %v1541 = vpop.trf.xlu0
  %v1542 = vpop.trf.xlu0
  %v1543 = vpop.trf.xlu0
  %v1544 = vpop.trf.xlu0
  %v1545 = vpop.trf.xlu0
  %v1546 = vpop.trf.xlu0
  %v1548 = vsel %vm1320, %v1531, 0
  %v1551 = vsel %vm1320, %v1532, 0
  %1553 = vmatprep.subr.mxu0 0.0
  %1554 = vmatpush1.msra.mxu0 %v1274
  %1555 = vmatprep.subr.mxu0 0.0
  %1556 = vmatpush1.msra.mxu0 0.0
  %1557 = vmatprep.subr.mxu0 0.0
  %1558 = vmatpush1.msra.mxu0 0.0
  %1559 = vmatprep.subr.mxu0 0.0
  %1560 = vmatpush1.msra.mxu0 0.0
  %1561 = vmatprep.subr.mxu0 0.0
  %1562 = vmatpush1.msra.mxu0 0.0
  %1563 = vmatprep.subr.mxu0 0.0
  %1564 = vmatpush1.msra.mxu0 0.0
  %1565 = vmatprep.subr.mxu0 0.0
  %1566 = vmatpush1.msra.mxu0 0.0
  %1567 = vmatprep.subr.mxu0 0.0
  %1568 = vmatpush1.msra.mxu0 0.0
  %1569 = vmatprep.subr.mxu0 0.0
  %1570 = vmatpush1.msra.mxu0 0.0
  %1571 = vmatprep.subr.mxu0 0.0
  %1572 = vmatpush1.msra.mxu0 0.0
  %1573 = vmatprep.subr.mxu0 0.0
  %1574 = vmatpush1.msra.mxu0 0.0
  %1575 = vmatprep.subr.mxu0 0.0
  %1576 = vmatpush1.msra.mxu0 0.0
  %1577 = vmatprep.subr.mxu0 0.0
  %1578 = vmatpush1.msra.mxu0 0.0
  %1579 = vmatprep.subr.mxu0 0.0
  %1580 = vmatpush1.msra.mxu0 0.0
  %1581 = vmatprep.subr.mxu0 0.0
  %1582 = vmatpush1.msra.mxu0 0.0
  %1583 = vmatprep.subr.mxu0 0.0
  %1584 = vmatpush1.msra.mxu0 0.0
  %1585 = vmatprep.subr.mxu0 0.0
  %1586 = vmatpush1.msra.mxu0 0.0
  %1587 = vmatprep.subr.mxu0 0.0
  %1588 = vmatpush1.msra.mxu0 0.0
  %1589 = vmatprep.subr.mxu0 0.0
  %1590 = vmatpush1.msra.mxu0 0.0
  %1591 = vmatprep.subr.mxu0 0.0
  %1592 = vmatpush1.msra.mxu0 0.0
  %1593 = vmatprep.subr.mxu0 0.0
  %1594 = vmatpush1.msra.mxu0 0.0
  %1595 = vmatprep.subr.mxu0 0.0
  %1596 = vmatpush1.msra.mxu0 0.0
  %1597 = vmatprep.subr.mxu0 0.0
  %1598 = vmatpush1.msra.mxu0 0.0
  %1599 = vmatprep.subr.mxu0 0.0
  %1600 = vmatpush1.msra.mxu0 0.0
  %1601 = vmatprep.subr.mxu0 0.0
  %1602 = vmatpush1.msra.mxu0 0.0
  %1603 = vmatprep.subr.mxu0 0.0
  %1604 = vmatpush1.msra.mxu0 0.0
  %1605 = vmatprep.subr.mxu0 0.0
  %1606 = vmatpush1.msra.mxu0 0.0
  %1607 = vmatprep.subr.mxu0 0.0
  %1608 = vmatpush1.msra.mxu0 0.0
  %1609 = vmatprep.subr.mxu0 0.0
  %1610 = vmatpush1.msra.mxu0 0.0
  %1611 = vmatprep.subr.mxu0 0.0
  %1612 = vmatpush1.msra.mxu0 0.0
  %1613 = vmatprep.subr.mxu0 0.0
  %1614 = vmatpush1.msra.mxu0 0.0
  %1615 = vmatprep.subr.mxu0 0.0
  %1616 = vmatpush1.msra.mxu0 0.0
  %1617 = vmatprep.mubr.f32.mxu0 0.0
  %1618 = vmatmul.mubr.f32.gmra.mrb[0].mxu0 %v1548
  %v1619 = vpop.f32.mrb[0].mxu0
  %v1620 = vadd.f32 0.0, %v1619
  %v1621 = vpop.f32.mrb[0].mxu0
  %1622 = vmatprep.mubr.f32.mxu0 0.0
  %1623 = vmatmul.mubr.f32.gmra.mrb[0].mxu0 %v1551
  %v1624 = vpop.f32.mrb[0].mxu0
  %v1625 = vadd.f32 0.0, %v1624
  %v1626 = vpop.f32.mrb[0].mxu0
  %1627 = vdwg.mxu0
  %1628 = vxpose.xlu0.b32.start [1/16] %v26, 128
  %1629 = vxpose.xlu0.b32.cont [2/16] 0.0, 128
  %1630 = vxpose.xlu0.b32.cont [3/16] 0.0, 128
  %1631 = vxpose.xlu0.b32.cont [4/16] 0.0, 128
  %1632 = vxpose.xlu0.b32.cont [5/16] 0.0, 128
  %1633 = vxpose.xlu0.b32.cont [6/16] 0.0, 128
  %1634 = vxpose.xlu0.b32.cont [7/16] 0.0, 128
  %1635 = vxpose.xlu0.b32.cont [8/16] 0.0, 128
  %1636 = vxpose.xlu0.b32.cont [9/16] 0.0, 128
  %1637 = vxpose.xlu0.b32.cont [10/16] 0.0, 128
  %1638 = vxpose.xlu0.b32.cont [11/16] 0.0, 128
  %1639 = vxpose.xlu0.b32.cont [12/16] 0.0, 128
  %1640 = vxpose.xlu0.b32.cont [13/16] 0.0, 128
  %1641 = vxpose.xlu0.b32.cont [14/16] 0.0, 128
  %1642 = vxpose.xlu0.b32.cont [15/16] 0.0, 128
  %1643 = vxpose.xlu0.b32.end [16/16] 0.0, 128
  %v1644 = vpop.trf.xlu0
  %v1645 = vpop.trf.xlu0
  %v1646 = vpop.trf.xlu0
  %v1647 = vpop.trf.xlu0
  %v1648 = vpop.trf.xlu0
  %v1649 = vpop.trf.xlu0
  %v1650 = vpop.trf.xlu0
  %v1651 = vpop.trf.xlu0
  %v1652 = vpop.trf.xlu0
  %v1653 = vpop.trf.xlu0
  %v1654 = vpop.trf.xlu0
  %v1655 = vpop.trf.xlu0
  %v1656 = vpop.trf.xlu0
  %v1657 = vpop.trf.xlu0
  %v1658 = vpop.trf.xlu0
  %v1659 = vpop.trf.xlu0
  %v1661 = vsel %vm1320, %v1644, 0
  %v1664 = vsel %vm1320, %v1645, 0
  %1666 = vmatprep.subr.mxu0 0.0
  %1667 = vmatpush1.msra.mxu0 %v1275
  %1668 = vmatprep.subr.mxu0 0.0
  %1669 = vmatpush1.msra.mxu0 0.0
  %1670 = vmatprep.subr.mxu0 0.0
  %1671 = vmatpush1.msra.mxu0 0.0
  %1672 = vmatprep.subr.mxu0 0.0
  %1673 = vmatpush1.msra.mxu0 0.0
  %1674 = vmatprep.subr.mxu0 0.0
  %1675 = vmatpush1.msra.mxu0 0.0
  %1676 = vmatprep.subr.mxu0 0.0
  %1677 = vmatpush1.msra.mxu0 0.0
  %1678 = vmatprep.subr.mxu0 0.0
  %1679 = vmatpush1.msra.mxu0 0.0
  %1680 = vmatprep.subr.mxu0 0.0
  %1681 = vmatpush1.msra.mxu0 0.0
  %1682 = vmatprep.subr.mxu0 0.0
  %1683 = vmatpush1.msra.mxu0 0.0
  %1684 = vmatprep.subr.mxu0 0.0
  %1685 = vmatpush1.msra.mxu0 0.0
  %1686 = vmatprep.subr.mxu0 0.0
  %1687 = vmatpush1.msra.mxu0 0.0
  %1688 = vmatprep.subr.mxu0 0.0
  %1689 = vmatpush1.msra.mxu0 0.0
  %1690 = vmatprep.subr.mxu0 0.0
  %1691 = vmatpush1.msra.mxu0 0.0
  %1692 = vmatprep.subr.mxu0 0.0
  %1693 = vmatpush1.msra.mxu0 0.0
  %1694 = vmatprep.subr.mxu0 0.0
  %1695 = vmatpush1.msra.mxu0 0.0
  %1696 = vmatprep.subr.mxu0 0.0
  %1697 = vmatpush1.msra.mxu0 0.0
  %1698 = vmatprep.subr.mxu0 0.0
  %1699 = vmatpush1.msra.mxu0 0.0
  %1700 = vmatprep.subr.mxu0 0.0
  %1701 = vmatpush1.msra.mxu0 0.0
  %1702 = vmatprep.subr.mxu0 0.0
  %1703 = vmatpush1.msra.mxu0 0.0
  %1704 = vmatprep.subr.mxu0 0.0
  %1705 = vmatpush1.msra.mxu0 0.0
  %1706 = vmatprep.subr.mxu0 0.0
  %1707 = vmatpush1.msra.mxu0 0.0
  %1708 = vmatprep.subr.mxu0 0.0
  %1709 = vmatpush1.msra.mxu0 0.0
  %1710 = vmatprep.subr.mxu0 0.0
  %1711 = vmatpush1.msra.mxu0 0.0
  %1712 = vmatprep.subr.mxu0 0.0
  %1713 = vmatpush1.msra.mxu0 0.0
  %1714 = vmatprep.subr.mxu0 0.0
  %1715 = vmatpush1.msra.mxu0 0.0
  %1716 = vmatprep.subr.mxu0 0.0
  %1717 = vmatpush1.msra.mxu0 0.0
  %1718 = vmatprep.subr.mxu0 0.0
  %1719 = vmatpush1.msra.mxu0 0.0
  %1720 = vmatprep.subr.mxu0 0.0
  %1721 = vmatpush1.msra.mxu0 0.0
  %1722 = vmatprep.subr.mxu0 0.0
  %1723 = vmatpush1.msra.mxu0 0.0
  %1724 = vmatprep.subr.mxu0 0.0
  %1725 = vmatpush1.msra.mxu0 0.0
  %1726 = vmatprep.subr.mxu0 0.0
  %1727 = vmatpush1.msra.mxu0 0.0
  %1728 = vmatprep.subr.mxu0 0.0
  %1729 = vmatpush1.msra.mxu0 0.0
  %1730 = vmatprep.mubr.f32.mxu0 0.0
  %1731 = vmatmul.mubr.f32.gmra.mrb[0].mxu0 %v1661
  %v1732 = vpop.f32.mrb[0].mxu0
  %v1733 = vadd.f32 0.0, %v1732
  %v1734 = vpop.f32.mrb[0].mxu0
  %1735 = vmatprep.mubr.f32.mxu0 0.0
  %1736 = vmatmul.mubr.f32.gmra.mrb[0].mxu0 %v1664
  %v1737 = vpop.f32.mrb[0].mxu0
  %v1738 = vadd.f32 0.0, %v1737
  %v1739 = vpop.f32.mrb[0].mxu0
  %1740 = vdwg.mxu0
  %1741 = vxpose.xlu0.b32.start [1/16] %v27, 128
  %1742 = vxpose.xlu0.b32.cont [2/16] 0.0, 128
  %1743 = vxpose.xlu0.b32.cont [3/16] 0.0, 128
  %1744 = vxpose.xlu0.b32.cont [4/16] 0.0, 128
  %1745 = vxpose.xlu0.b32.cont [5/16] 0.0, 128
  %1746 = vxpose.xlu0.b32.cont [6/16] 0.0, 128
  %1747 = vxpose.xlu0.b32.cont [7/16] 0.0, 128
  %1748 = vxpose.xlu0.b32.cont [8/16] 0.0, 128
  %1749 = vxpose.xlu0.b32.cont [9/16] 0.0, 128
  %1750 = vxpose.xlu0.b32.cont [10/16] 0.0, 128
  %1751 = vxpose.xlu0.b32.cont [11/16] 0.0, 128
  %1752 = vxpose.xlu0.b32.cont [12/16] 0.0, 128
  %1753 = vxpose.xlu0.b32.cont [13/16] 0.0, 128
  %1754 = vxpose.xlu0.b32.cont [14/16] 0.0, 128
  %1755 = vxpose.xlu0.b32.cont [15/16] 0.0, 128
  %1756 = vxpose.xlu0.b32.end [16/16] 0.0, 128
  %v1757 = vpop.trf.xlu0
  %v1758 = vpop.trf.xlu0
  %v1759 = vpop.trf.xlu0
  %v1760 = vpop.trf.xlu0
  %v1761 = vpop.trf.xlu0
  %v1762 = vpop.trf.xlu0
  %v1763 = vpop.trf.xlu0
  %v1764 = vpop.trf.xlu0
  %v1765 = vpop.trf.xlu0
  %v1766 = vpop.trf.xlu0
  %v1767 = vpop.trf.xlu0
  %v1768 = vpop.trf.xlu0
  %v1769 = vpop.trf.xlu0
  %v1770 = vpop.trf.xlu0
  %v1771 = vpop.trf.xlu0
  %v1772 = vpop.trf.xlu0
  %v1774 = vsel %vm1320, %v1757, 0
  %v1777 = vsel %vm1320, %v1758, 0
  %1779 = vmatprep.subr.mxu0 0.0
  %1780 = vmatpush1.msra.mxu0 %v1276
  %1781 = vmatprep.subr.mxu0 0.0
  %1782 = vmatpush1.msra.mxu0 0.0
  %1783 = vmatprep.subr.mxu0 0.0
  %1784 = vmatpush1.msra.mxu0 0.0
  %1785 = vmatprep.subr.mxu0 0.0
  %1786 = vmatpush1.msra.mxu0 0.0
  %1787 = vmatprep.subr.mxu0 0.0
  %1788 = vmatpush1.msra.mxu0 0.0
  %1789 = vmatprep.subr.mxu0 0.0
  %1790 = vmatpush1.msra.mxu0 0.0
  %1791 = vmatprep.subr.mxu0 0.0
  %1792 = vmatpush1.msra.mxu0 0.0
  %1793 = vmatprep.subr.mxu0 0.0
  %1794 = vmatpush1.msra.mxu0 0.0
  %1795 = vmatprep.subr.mxu0 0.0
  %1796 = vmatpush1.msra.mxu0 0.0
  %1797 = vmatprep.subr.mxu0 0.0
  %1798 = vmatpush1.msra.mxu0 0.0
  %1799 = vmatprep.subr.mxu0 0.0
  %1800 = vmatpush1.msra.mxu0 0.0
  %1801 = vmatprep.subr.mxu0 0.0
  %1802 = vmatpush1.msra.mxu0 0.0
  %1803 = vmatprep.subr.mxu0 0.0
  %1804 = vmatpush1.msra.mxu0 0.0
  %1805 = vmatprep.subr.mxu0 0.0
  %1806 = vmatpush1.msra.mxu0 0.0
  %1807 = vmatprep.subr.mxu0 0.0
  %1808 = vmatpush1.msra.mxu0 0.0
  %1809 = vmatprep.subr.mxu0 0.0
  %1810 = vmatpush1.msra.mxu0 0.0
  %1811 = vmatprep.subr.mxu0 0.0
  %1812 = vmatpush1.msra.mxu0 0.0
  %1813 = vmatprep.subr.mxu0 0.0
  %1814 = vmatpush1.msra.mxu0 0.0
  %1815 = vmatprep.subr.mxu0 0.0
  %1816 = vmatpush1.msra.mxu0 0.0
  %1817 = vmatprep.subr.mxu0 0.0
  %1818 = vmatpush1.msra.mxu0 0.0
  %1819 = vmatprep.subr.mxu0 0.0
  %1820 = vmatpush1.msra.mxu0 0.0
  %1821 = vmatprep.subr.mxu0 0.0
  %1822 = vmatpush1.msra.mxu0 0.0
  %1823 = vmatprep.subr.mxu0 0.0
  %1824 = vmatpush1.msra.mxu0 0.0
  %1825 = vmatprep.subr.mxu0 0.0
  %1826 = vmatpush1.msra.mxu0 0.0
  %1827 = vmatprep.subr.mxu0 0.0
  %1828 = vmatpush1.msra.mxu0 0.0
  %1829 = vmatprep.subr.mxu0 0.0
  %1830 = vmatpush1.msra.mxu0 0.0
  %1831 = vmatprep.subr.mxu0 0.0
  %1832 = vmatpush1.msra.mxu0 0.0
  %1833 = vmatprep.subr.mxu0 0.0
  %1834 = vmatpush1.msra.mxu0 0.0
  %1835 = vmatprep.subr.mxu0 0.0
  %1836 = vmatpush1.msra.mxu0 0.0
  %1837 = vmatprep.subr.mxu0 0.0
  %1838 = vmatpush1.msra.mxu0 0.0
  %1839 = vmatprep.subr.mxu0 0.0
  %1840 = vmatpush1.msra.mxu0 0.0
  %1841 = vmatprep.subr.mxu0 0.0
  %1842 = vmatpush1.msra.mxu0 0.0
  %1843 = vmatprep.mubr.f32.mxu0 0.0
  %1844 = vmatmul.mubr.f32.gmra.mrb[0].mxu0 %v1774
  %v1845 = vpop.f32.mrb[0].mxu0
  %v1846 = vadd.f32 0.0, %v1845
  %v1847 = vpop.f32.mrb[0].mxu0
  %1848 = vmatprep.mubr.f32.mxu0 0.0
  %1849 = vmatmul.mubr.f32.gmra.mrb[0].mxu0 %v1777
  %v1850 = vpop.f32.mrb[0].mxu0
  %v1851 = vadd.f32 0.0, %v1850
  %v1852 = vpop.f32.mrb[0].mxu0
  %1853 = vdwg.mxu0
  %1854 = vxpose.xlu0.b32.start [1/16] %v28, 128
  %1855 = vxpose.xlu0.b32.cont [2/16] 0.0, 128
  %1856 = vxpose.xlu0.b32.cont [3/16] 0.0, 128
  %1857 = vxpose.xlu0.b32.cont [4/16] 0.0, 128
  %1858 = vxpose.xlu0.b32.cont [5/16] 0.0, 128
  %1859 = vxpose.xlu0.b32.cont [6/16] 0.0, 128
  %1860 = vxpose.xlu0.b32.cont [7/16] 0.0, 128
  %1861 = vxpose.xlu0.b32.cont [8/16] 0.0, 128
  %1862 = vxpose.xlu0.b32.cont [9/16] 0.0, 128
  %1863 = vxpose.xlu0.b32.cont [10/16] 0.0, 128
  %1864 = vxpose.xlu0.b32.cont [11/16] 0.0, 128
  %1865 = vxpose.xlu0.b32.cont [12/16] 0.0, 128
  %1866 = vxpose.xlu0.b32.cont [13/16] 0.0, 128
  %1867 = vxpose.xlu0.b32.cont [14/16] 0.0, 128
  %1868 = vxpose.xlu0.b32.cont [15/16] 0.0, 128
  %1869 = vxpose.xlu0.b32.end [16/16] 0.0, 128
  %v1870 = vpop.trf.xlu0
  %v1871 = vpop.trf.xlu0
  %v1872 = vpop.trf.xlu0
  %v1873 = vpop.trf.xlu0
  %v1874 = vpop.trf.xlu0
  %v1875 = vpop.trf.xlu0
  %v1876 = vpop.trf.xlu0
  %v1877 = vpop.trf.xlu0
  %v1878 = vpop.trf.xlu0
  %v1879 = vpop.trf.xlu0
  %v1880 = vpop.trf.xlu0
  %v1881 = vpop.trf.xlu0
  %v1882 = vpop.trf.xlu0
  %v1883 = vpop.trf.xlu0
  %v1884 = vpop.trf.xlu0
  %v1885 = vpop.trf.xlu0
  %v1887 = vsel %vm1320, %v1870, 0
  %v1890 = vsel %vm1320, %v1871, 0
  %1892 = vmatprep.subr.mxu0 0.0
  %1893 = vmatpush1.msra.mxu0 %v1277
  %1894 = vmatprep.subr.mxu0 0.0
  %1895 = vmatpush1.msra.mxu0 0.0
  %1896 = vmatprep.subr.mxu0 0.0
  %1897 = vmatpush1.msra.mxu0 0.0
  %1898 = vmatprep.subr.mxu0 0.0
  %1899 = vmatpush1.msra.mxu0 0.0
  %1900 = vmatprep.subr.mxu0 0.0
  %1901 = vmatpush1.msra.mxu0 0.0
  %1902 = vmatprep.subr.mxu0 0.0
  %1903 = vmatpush1.msra.mxu0 0.0
  %1904 = vmatprep.subr.mxu0 0.0
  %1905 = vmatpush1.msra.mxu0 0.0
  %1906 = vmatprep.subr.mxu0 0.0
  %1907 = vmatpush1.msra.mxu0 0.0
  %1908 = vmatprep.subr.mxu0 0.0
  %1909 = vmatpush1.msra.mxu0 0.0
  %1910 = vmatprep.subr.mxu0 0.0
  %1911 = vmatpush1.msra.mxu0 0.0
  %1912 = vmatprep.subr.mxu0 0.0
  %1913 = vmatpush1.msra.mxu0 0.0
  %1914 = vmatprep.subr.mxu0 0.0
  %1915 = vmatpush1.msra.mxu0 0.0
  %1916 = vmatprep.subr.mxu0 0.0
  %1917 = vmatpush1.msra.mxu0 0.0
  %1918 = vmatprep.subr.mxu0 0.0
  %1919 = vmatpush1.msra.mxu0 0.0
  %1920 = vmatprep.subr.mxu0 0.0
  %1921 = vmatpush1.msra.mxu0 0.0
  %1922 = vmatprep.subr.mxu0 0.0
  %1923 = vmatpush1.msra.mxu0 0.0
  %1924 = vmatprep.subr.mxu0 0.0
  %1925 = vmatpush1.msra.mxu0 0.0
  %1926 = vmatprep.subr.mxu0 0.0
  %1927 = vmatpush1.msra.mxu0 0.0
  %1928 = vmatprep.subr.mxu0 0.0
  %1929 = vmatpush1.msra.mxu0 0.0
  %1930 = vmatprep.subr.mxu0 0.0
  %1931 = vmatpush1.msra.mxu0 0.0
  %1932 = vmatprep.subr.mxu0 0.0
  %1933 = vmatpush1.msra.mxu0 0.0
  %1934 = vmatprep.subr.mxu0 0.0
  %1935 = vmatpush1.msra.mxu0 0.0
  %1936 = vmatprep.subr.mxu0 0.0
  %1937 = vmatpush1.msra.mxu0 0.0
  %1938 = vmatprep.subr.mxu0 0.0
  %1939 = vmatpush1.msra.mxu0 0.0
  %1940 = vmatprep.subr.mxu0 0.0
  %1941 = vmatpush1.msra.mxu0 0.0
  %1942 = vmatprep.subr.mxu0 0.0
  %1943 = vmatpush1.msra.mxu0 0.0
  %1944 = vmatprep.subr.mxu0 0.0
  %1945 = vmatpush1.msra.mxu0 0.0
  %1946 = vmatprep.subr.mxu0 0.0
  %1947 = vmatpush1.msra.mxu0 0.0
  %1948 = vmatprep.subr.mxu0 0.0
  %1949 = vmatpush1.msra.mxu0 0.0
  %1950 = vmatprep.subr.mxu0 0.0
  %1951 = vmatpush1.msra.mxu0 0.0
  %1952 = vmatprep.subr.mxu0 0.0
  %1953 = vmatpush1.msra.mxu0 0.0
  %1954 = vmatprep.subr.mxu0 0.0
  %1955 = vmatpush1.msra.mxu0 0.0
  %1956 = vmatprep.mubr.f32.mxu0 0.0
  %1957 = vmatmul.mubr.f32.gmra.mrb[0].mxu0 %v1887
  %v1958 = vpop.f32.mrb[0].mxu0
  %v1959 = vadd.f32 0.0, %v1958
  %v1960 = vpop.f32.mrb[0].mxu0
  %1961 = vmatprep.mubr.f32.mxu0 0.0
  %1962 = vmatmul.mubr.f32.gmra.mrb[0].mxu0 %v1890
  %v1963 = vpop.f32.mrb[0].mxu0
  %v1964 = vadd.f32 0.0, %v1963
  %v1965 = vpop.f32.mrb[0].mxu0
  %1966 = vdwg.mxu0
  %1967 = vxpose.xlu0.b32.start [1/16] %v29, 128
  %1968 = vxpose.xlu0.b32.cont [2/16] 0.0, 128
  %1969 = vxpose.xlu0.b32.cont [3/16] 0.0, 128
  %1970 = vxpose.xlu0.b32.cont [4/16] 0.0, 128
  %1971 = vxpose.xlu0.b32.cont [5/16] 0.0, 128
  %1972 = vxpose.xlu0.b32.cont [6/16] 0.0, 128
  %1973 = vxpose.xlu0.b32.cont [7/16] 0.0, 128
  %1974 = vxpose.xlu0.b32.cont [8/16] 0.0, 128
  %1975 = vxpose.xlu0.b32.cont [9/16] 0.0, 128
  %1976 = vxpose.xlu0.b32.cont [10/16] 0.0, 128
  %1977 = vxpose.xlu0.b32.cont [11/16] 0.0, 128
  %1978 = vxpose.xlu0.b32.cont [12/16] 0.0, 128
  %1979 = vxpose.xlu0.b32.cont [13/16] 0.0, 128
  %1980 = vxpose.xlu0.b32.cont [14/16] 0.0, 128
  %1981 = vxpose.xlu0.b32.cont [15/16] 0.0, 128
  %1982 = vxpose.xlu0.b32.end [16/16] 0.0, 128
  %v1983 = vpop.trf.xlu0
  %v1984 = vpop.trf.xlu0
  %v1985 = vpop.trf.xlu0
  %v1986 = vpop.trf.xlu0
  %v1987 = vpop.trf.xlu0
  %v1988 = vpop.trf.xlu0
  %v1989 = vpop.trf.xlu0
  %v1990 = vpop.trf.xlu0
  %v1991 = vpop.trf.xlu0
  %v1992 = vpop.trf.xlu0
  %v1993 = vpop.trf.xlu0
  %v1994 = vpop.trf.xlu0
  %v1995 = vpop.trf.xlu0
  %v1996 = vpop.trf.xlu0
  %v1997 = vpop.trf.xlu0
  %v1998 = vpop.trf.xlu0
  %v2000 = vsel %vm1320, %v1983, 0
  %v2003 = vsel %vm1320, %v1984, 0
  %2005 = vmatprep.subr.mxu0 0.0
  %2006 = vmatpush1.msra.mxu0 %v1278
  %2007 = vmatprep.subr.mxu0 0.0
  %2008 = vmatpush1.msra.mxu0 0.0
  %2009 = vmatprep.subr.mxu0 0.0
  %2010 = vmatpush1.msra.mxu0 0.0
  %2011 = vmatprep.subr.mxu0 0.0
  %2012 = vmatpush1.msra.mxu0 0.0
  %2013 = vmatprep.subr.mxu0 0.0
  %2014 = vmatpush1.msra.mxu0 0.0
  %2015 = vmatprep.subr.mxu0 0.0
  %2016 = vmatpush1.msra.mxu0 0.0
  %2017 = vmatprep.subr.mxu0 0.0
  %2018 = vmatpush1.msra.mxu0 0.0
  %2019 = vmatprep.subr.mxu0 0.0
  %2020 = vmatpush1.msra.mxu0 0.0
  %2021 = vmatprep.subr.mxu0 0.0
  %2022 = vmatpush1.msra.mxu0 0.0
  %2023 = vmatprep.subr.mxu0 0.0
  %2024 = vmatpush1.msra.mxu0 0.0
  %2025 = vmatprep.subr.mxu0 0.0
  %2026 = vmatpush1.msra.mxu0 0.0
  %2027 = vmatprep.subr.mxu0 0.0
  %2028 = vmatpush1.msra.mxu0 0.0
  %2029 = vmatprep.subr.mxu0 0.0
  %2030 = vmatpush1.msra.mxu0 0.0
  %2031 = vmatprep.subr.mxu0 0.0
  %2032 = vmatpush1.msra.mxu0 0.0
  %2033 = vmatprep.subr.mxu0 0.0
  %2034 = vmatpush1.msra.mxu0 0.0
  %2035 = vmatprep.subr.mxu0 0.0
  %2036 = vmatpush1.msra.mxu0 0.0
  %2037 = vmatprep.subr.mxu0 0.0
  %2038 = vmatpush1.msra.mxu0 0.0
  %2039 = vmatprep.subr.mxu0 0.0
  %2040 = vmatpush1.msra.mxu0 0.0
  %2041 = vmatprep.subr.mxu0 0.0
  %2042 = vmatpush1.msra.mxu0 0.0
  %2043 = vmatprep.subr.mxu0 0.0
  %2044 = vmatpush1.msra.mxu0 0.0
  %2045 = vmatprep.subr.mxu0 0.0
  %2046 = vmatpush1.msra.mxu0 0.0
  %2047 = vmatprep.subr.mxu0 0.0
  %2048 = vmatpush1.msra.mxu0 0.0
  %2049 = vmatprep.subr.mxu0 0.0
  %2050 = vmatpush1.msra.mxu0 0.0
  %2051 = vmatprep.subr.mxu0 0.0
  %2052 = vmatpush1.msra.mxu0 0.0
  %2053 = vmatprep.subr.mxu0 0.0
  %2054 = vmatpush1.msra.mxu0 0.0
  %2055 = vmatprep.subr.mxu0 0.0
  %2056 = vmatpush1.msra.mxu0 0.0
  %2057 = vmatprep.subr.mxu0 0.0
  %2058 = vmatpush1.msra.mxu0 0.0
  %2059 = vmatprep.subr.mxu0 0.0
  %2060 = vmatpush1.msra.mxu0 0.0
  %2061 = vmatprep.subr.mxu0 0.0
  %2062 = vmatpush1.msra.mxu0 0.0
  %2063 = vmatprep.subr.mxu0 0.0
  %2064 = vmatpush1.msra.mxu0 0.0
  %2065 = vmatprep.subr.mxu0 0.0
  %2066 = vmatpush1.msra.mxu0 0.0
  %2067 = vmatprep.subr.mxu0 0.0
  %2068 = vmatpush1.msra.mxu0 0.0
  %2069 = vmatprep.mubr.f32.mxu0 0.0
  %2070 = vmatmul.mubr.f32.gmra.mrb[0].mxu0 %v2000
  %v2071 = vpop.f32.mrb[0].mxu0
  %v2072 = vadd.f32 0.0, %v2071
  %v2073 = vpop.f32.mrb[0].mxu0
  %2074 = vmatprep.mubr.f32.mxu0 0.0
  %2075 = vmatmul.mubr.f32.gmra.mrb[0].mxu0 %v2003
  %v2076 = vpop.f32.mrb[0].mxu0
  %v2077 = vadd.f32 0.0, %v2076
  %v2078 = vpop.f32.mrb[0].mxu0
  %2079 = vdwg.mxu0
  %2080 = vxpose.xlu0.b32.start [1/16] %v30, 128
  %2081 = vxpose.xlu0.b32.cont [2/16] 0.0, 128
  %2082 = vxpose.xlu0.b32.cont [3/16] 0.0, 128
  %2083 = vxpose.xlu0.b32.cont [4/16] 0.0, 128
  %2084 = vxpose.xlu0.b32.cont [5/16] 0.0, 128
  %2085 = vxpose.xlu0.b32.cont [6/16] 0.0, 128
  %2086 = vxpose.xlu0.b32.cont [7/16] 0.0, 128
  %2087 = vxpose.xlu0.b32.cont [8/16] 0.0, 128
  %2088 = vxpose.xlu0.b32.cont [9/16] 0.0, 128
  %2089 = vxpose.xlu0.b32.cont [10/16] 0.0, 128
  %2090 = vxpose.xlu0.b32.cont [11/16] 0.0, 128
  %2091 = vxpose.xlu0.b32.cont [12/16] 0.0, 128
  %2092 = vxpose.xlu0.b32.cont [13/16] 0.0, 128
  %2093 = vxpose.xlu0.b32.cont [14/16] 0.0, 128
  %2094 = vxpose.xlu0.b32.cont [15/16] 0.0, 128
  %2095 = vxpose.xlu0.b32.end [16/16] 0.0, 128
  %v2096 = vpop.trf.xlu0
  %v2097 = vpop.trf.xlu0
  %v2098 = vpop.trf.xlu0
  %v2099 = vpop.trf.xlu0
  %v2100 = vpop.trf.xlu0
  %v2101 = vpop.trf.xlu0
  %v2102 = vpop.trf.xlu0
  %v2103 = vpop.trf.xlu0
  %v2104 = vpop.trf.xlu0
  %v2105 = vpop.trf.xlu0
  %v2106 = vpop.trf.xlu0
  %v2107 = vpop.trf.xlu0
  %v2108 = vpop.trf.xlu0
  %v2109 = vpop.trf.xlu0
  %v2110 = vpop.trf.xlu0
  %v2111 = vpop.trf.xlu0
  %v2113 = vsel %vm1320, %v2096, 0
  %v2116 = vsel %vm1320, %v2097, 0
  %2118 = vmatprep.subr.mxu0 0.0
  %2119 = vmatpush1.msra.mxu0 %v1279
  %2120 = vmatprep.subr.mxu0 0.0
  %2121 = vmatpush1.msra.mxu0 0.0
  %2122 = vmatprep.subr.mxu0 0.0
  %2123 = vmatpush1.msra.mxu0 0.0
  %2124 = vmatprep.subr.mxu0 0.0
  %2125 = vmatpush1.msra.mxu0 0.0
  %2126 = vmatprep.subr.mxu0 0.0
  %2127 = vmatpush1.msra.mxu0 0.0
  %2128 = vmatprep.subr.mxu0 0.0
  %2129 = vmatpush1.msra.mxu0 0.0
  %2130 = vmatprep.subr.mxu0 0.0
  %2131 = vmatpush1.msra.mxu0 0.0
  %2132 = vmatprep.subr.mxu0 0.0
  %2133 = vmatpush1.msra.mxu0 0.0
  %2134 = vmatprep.subr.mxu0 0.0
  %2135 = vmatpush1.msra.mxu0 0.0
  %2136 = vmatprep.subr.mxu0 0.0
  %2137 = vmatpush1.msra.mxu0 0.0
  %2138 = vmatprep.subr.mxu0 0.0
  %2139 = vmatpush1.msra.mxu0 0.0
  %2140 = vmatprep.subr.mxu0 0.0
  %2141 = vmatpush1.msra.mxu0 0.0
  %2142 = vmatprep.subr.mxu0 0.0
  %2143 = vmatpush1.msra.mxu0 0.0
  %2144 = vmatprep.subr.mxu0 0.0
  %2145 = vmatpush1.msra.mxu0 0.0
  %2146 = vmatprep.subr.mxu0 0.0
  %2147 = vmatpush1.msra.mxu0 0.0
  %2148 = vmatprep.subr.mxu0 0.0
  %2149 = vmatpush1.msra.mxu0 0.0
  %2150 = vmatprep.subr.mxu0 0.0
  %2151 = vmatpush1.msra.mxu0 0.0
  %2152 = vmatprep.subr.mxu0 0.0
  %2153 = vmatpush1.msra.mxu0 0.0
  %2154 = vmatprep.subr.mxu0 0.0
  %2155 = vmatpush1.msra.mxu0 0.0
  %2156 = vmatprep.subr.mxu0 0.0
  %2157 = vmatpush1.msra.mxu0 0.0
  %2158 = vmatprep.subr.mxu0 0.0
  %2159 = vmatpush1.msra.mxu0 0.0
  %2160 = vmatprep.subr.mxu0 0.0
  %2161 = vmatpush1.msra.mxu0 0.0
  %2162 = vmatprep.subr.mxu0 0.0
  %2163 = vmatpush1.msra.mxu0 0.0
  %2164 = vmatprep.subr.mxu0 0.0
  %2165 = vmatpush1.msra.mxu0 0.0
  %2166 = vmatprep.subr.mxu0 0.0
  %2167 = vmatpush1.msra.mxu0 0.0
  %2168 = vmatprep.subr.mxu0 0.0
  %2169 = vmatpush1.msra.mxu0 0.0
  %2170 = vmatprep.subr.mxu0 0.0
  %2171 = vmatpush1.msra.mxu0 0.0
  %2172 = vmatprep.subr.mxu0 0.0
  %2173 = vmatpush1.msra.mxu0 0.0
  %2174 = vmatprep.subr.mxu0 0.0
  %2175 = vmatpush1.msra.mxu0 0.0
  %2176 = vmatprep.subr.mxu0 0.0
  %2177 = vmatpush1.msra.mxu0 0.0
  %2178 = vmatprep.subr.mxu0 0.0
  %2179 = vmatpush1.msra.mxu0 0.0
  %2180 = vmatprep.subr.mxu0 0.0
  %2181 = vmatpush1.msra.mxu0 0.0
  %2182 = vmatprep.mubr.f32.mxu0 0.0
  %2183 = vmatmul.mubr.f32.gmra.mrb[0].mxu0 %v2113
  %v2184 = vpop.f32.mrb[0].mxu0
  %v2185 = vadd.f32 0.0, %v2184
  %v2186 = vpop.f32.mrb[0].mxu0
  %2187 = vmatprep.mubr.f32.mxu0 0.0
  %2188 = vmatmul.mubr.f32.gmra.mrb[0].mxu0 %v2116
  %v2189 = vpop.f32.mrb[0].mxu0
  %v2190 = vadd.f32 0.0, %v2189
  %v2191 = vpop.f32.mrb[0].mxu0
  %2192 = vdwg.mxu0
  %2193 = vxpose.xlu0.b32.start [1/16] %v31, 128
  %2194 = vxpose.xlu0.b32.cont [2/16] 0.0, 128
  %2195 = vxpose.xlu0.b32.cont [3/16] 0.0, 128
  %2196 = vxpose.xlu0.b32.cont [4/16] 0.0, 128
  %2197 = vxpose.xlu0.b32.cont [5/16] 0.0, 128
  %2198 = vxpose.xlu0.b32.cont [6/16] 0.0, 128
  %2199 = vxpose.xlu0.b32.cont [7/16] 0.0, 128
  %2200 = vxpose.xlu0.b32.cont [8/16] 0.0, 128
  %2201 = vxpose.xlu0.b32.cont [9/16] 0.0, 128
  %2202 = vxpose.xlu0.b32.cont [10/16] 0.0, 128
  %2203 = vxpose.xlu0.b32.cont [11/16] 0.0, 128
  %2204 = vxpose.xlu0.b32.cont [12/16] 0.0, 128
  %2205 = vxpose.xlu0.b32.cont [13/16] 0.0, 128
  %2206 = vxpose.xlu0.b32.cont [14/16] 0.0, 128
  %2207 = vxpose.xlu0.b32.cont [15/16] 0.0, 128
  %2208 = vxpose.xlu0.b32.end [16/16] 0.0, 128
  %v2209 = vpop.trf.xlu0
  %v2210 = vpop.trf.xlu0
  %v2211 = vpop.trf.xlu0
  %v2212 = vpop.trf.xlu0
  %v2213 = vpop.trf.xlu0
  %v2214 = vpop.trf.xlu0
  %v2215 = vpop.trf.xlu0
  %v2216 = vpop.trf.xlu0
  %v2217 = vpop.trf.xlu0
  %v2218 = vpop.trf.xlu0
  %v2219 = vpop.trf.xlu0
  %v2220 = vpop.trf.xlu0
  %v2221 = vpop.trf.xlu0
  %v2222 = vpop.trf.xlu0
  %v2223 = vpop.trf.xlu0
  %v2224 = vpop.trf.xlu0
  %v2226 = vsel %vm1320, %v2209, 0
  %v2229 = vsel %vm1320, %v2210, 0
  %2231 = vmatprep.subr.mxu0 0.0
  %2232 = vmatpush1.msra.mxu0 %v1280
  %2233 = vmatprep.subr.mxu0 0.0
  %2234 = vmatpush1.msra.mxu0 0.0
  %2235 = vmatprep.subr.mxu0 0.0
  %2236 = vmatpush1.msra.mxu0 0.0
  %2237 = vmatprep.subr.mxu0 0.0
  %2238 = vmatpush1.msra.mxu0 0.0
  %2239 = vmatprep.subr.mxu0 0.0
  %2240 = vmatpush1.msra.mxu0 0.0
  %2241 = vmatprep.subr.mxu0 0.0
  %2242 = vmatpush1.msra.mxu0 0.0
  %2243 = vmatprep.subr.mxu0 0.0
  %2244 = vmatpush1.msra.mxu0 0.0
  %2245 = vmatprep.subr.mxu0 0.0
  %2246 = vmatpush1.msra.mxu0 0.0
  %2247 = vmatprep.subr.mxu0 0.0
  %2248 = vmatpush1.msra.mxu0 0.0
  %2249 = vmatprep.subr.mxu0 0.0
  %2250 = vmatpush1.msra.mxu0 0.0
  %2251 = vmatprep.subr.mxu0 0.0
  %2252 = vmatpush1.msra.mxu0 0.0
  %2253 = vmatprep.subr.mxu0 0.0
  %2254 = vmatpush1.msra.mxu0 0.0
  %2255 = vmatprep.subr.mxu0 0.0
  %2256 = vmatpush1.msra.mxu0 0.0
  %2257 = vmatprep.subr.mxu0 0.0
  %2258 = vmatpush1.msra.mxu0 0.0
  %2259 = vmatprep.subr.mxu0 0.0
  %2260 = vmatpush1.msra.mxu0 0.0
  %2261 = vmatprep.subr.mxu0 0.0
  %2262 = vmatpush1.msra.mxu0 0.0
  %2263 = vmatprep.subr.mxu0 0.0
  %2264 = vmatpush1.msra.mxu0 0.0
  %2265 = vmatprep.subr.mxu0 0.0
  %2266 = vmatpush1.msra.mxu0 0.0
  %2267 = vmatprep.subr.mxu0 0.0
  %2268 = vmatpush1.msra.mxu0 0.0
  %2269 = vmatprep.subr.mxu0 0.0
  %2270 = vmatpush1.msra.mxu0 0.0
  %2271 = vmatprep.subr.mxu0 0.0
  %2272 = vmatpush1.msra.mxu0 0.0
  %2273 = vmatprep.subr.mxu0 0.0
  %2274 = vmatpush1.msra.mxu0 0.0
  %2275 = vmatprep.subr.mxu0 0.0
  %2276 = vmatpush1.msra.mxu0 0.0
  %2277 = vmatprep.subr.mxu0 0.0
  %2278 = vmatpush1.msra.mxu0 0.0
  %2279 = vmatprep.subr.mxu0 0.0
  %2280 = vmatpush1.msra.mxu0 0.0
  %2281 = vmatprep.subr.mxu0 0.0
  %2282 = vmatpush1.msra.mxu0 0.0
  %2283 = vmatprep.subr.mxu0 0.0
  %2284 = vmatpush1.msra.mxu0 0.0
  %2285 = vmatprep.subr.mxu0 0.0
  %2286 = vmatpush1.msra.mxu0 0.0
  %2287 = vmatprep.subr.mxu0 0.0
  %2288 = vmatpush1.msra.mxu0 0.0
  %2289 = vmatprep.subr.mxu0 0.0
  %2290 = vmatpush1.msra.mxu0 0.0
  %2291 = vmatprep.subr.mxu0 0.0
  %2292 = vmatpush1.msra.mxu0 0.0
  %2293 = vmatprep.subr.mxu0 0.0
  %2294 = vmatpush1.msra.mxu0 0.0
  %2295 = vmatprep.mubr.f32.mxu0 0.0
  %2296 = vmatmul.mubr.f32.gmra.mrb[0].mxu0 %v2226
  %v2297 = vpop.f32.mrb[0].mxu0
  %v2298 = vadd.f32 0.0, %v2297
  %v2299 = vpop.f32.mrb[0].mxu0
  %2300 = vmatprep.mubr.f32.mxu0 0.0
  %2301 = vmatmul.mubr.f32.gmra.mrb[0].mxu0 %v2229
  %v2302 = vpop.f32.mrb[0].mxu0
  %v2303 = vadd.f32 0.0, %v2302
  %v2304 = vpop.f32.mrb[0].mxu0
  %2305 = vdwg.mxu0
  %2306 = vxpose.xlu0.b32.start [1/16] %v32, 128
  %2307 = vxpose.xlu0.b32.cont [2/16] 0.0, 128
  %2308 = vxpose.xlu0.b32.cont [3/16] 0.0, 128
  %2309 = vxpose.xlu0.b32.cont [4/16] 0.0, 128
  %2310 = vxpose.xlu0.b32.cont [5/16] 0.0, 128
  %2311 = vxpose.xlu0.b32.cont [6/16] 0.0, 128
  %2312 = vxpose.xlu0.b32.cont [7/16] 0.0, 128
  %2313 = vxpose.xlu0.b32.cont [8/16] 0.0, 128
  %2314 = vxpose.xlu0.b32.cont [9/16] 0.0, 128
  %2315 = vxpose.xlu0.b32.cont [10/16] 0.0, 128
  %2316 = vxpose.xlu0.b32.cont [11/16] 0.0, 128
  %2317 = vxpose.xlu0.b32.cont [12/16] 0.0, 128
  %2318 = vxpose.xlu0.b32.cont [13/16] 0.0, 128
  %2319 = vxpose.xlu0.b32.cont [14/16] 0.0, 128
  %2320 = vxpose.xlu0.b32.cont [15/16] 0.0, 128
  %2321 = vxpose.xlu0.b32.end [16/16] 0.0, 128
  %v2322 = vpop.trf.xlu0
  %v2323 = vpop.trf.xlu0
  %v2324 = vpop.trf.xlu0
  %v2325 = vpop.trf.xlu0
  %v2326 = vpop.trf.xlu0
  %v2327 = vpop.trf.xlu0
  %v2328 = vpop.trf.xlu0
  %v2329 = vpop.trf.xlu0
  %v2330 = vpop.trf.xlu0
  %v2331 = vpop.trf.xlu0
  %v2332 = vpop.trf.xlu0
  %v2333 = vpop.trf.xlu0
  %v2334 = vpop.trf.xlu0
  %v2335 = vpop.trf.xlu0
  %v2336 = vpop.trf.xlu0
  %v2337 = vpop.trf.xlu0
  %v2339 = vsel %vm1320, %v2322, 0
  %v2342 = vsel %vm1320, %v2323, 0
  %2344 = vmatprep.subr.mxu0 0.0
  %2345 = vmatpush1.msra.mxu0 %v1281
  %2346 = vmatprep.subr.mxu0 0.0
  %2347 = vmatpush1.msra.mxu0 0.0
  %2348 = vmatprep.subr.mxu0 0.0
  %2349 = vmatpush1.msra.mxu0 0.0
  %2350 = vmatprep.subr.mxu0 0.0
  %2351 = vmatpush1.msra.mxu0 0.0
  %2352 = vmatprep.subr.mxu0 0.0
  %2353 = vmatpush1.msra.mxu0 0.0
  %2354 = vmatprep.subr.mxu0 0.0
  %2355 = vmatpush1.msra.mxu0 0.0
  %2356 = vmatprep.subr.mxu0 0.0
  %2357 = vmatpush1.msra.mxu0 0.0
  %2358 = vmatprep.subr.mxu0 0.0
  %2359 = vmatpush1.msra.mxu0 0.0
  %2360 = vmatprep.subr.mxu0 0.0
  %2361 = vmatpush1.msra.mxu0 0.0
  %2362 = vmatprep.subr.mxu0 0.0
  %2363 = vmatpush1.msra.mxu0 0.0
  %2364 = vmatprep.subr.mxu0 0.0
  %2365 = vmatpush1.msra.mxu0 0.0
  %2366 = vmatprep.subr.mxu0 0.0
  %2367 = vmatpush1.msra.mxu0 0.0
  %2368 = vmatprep.subr.mxu0 0.0
  %2369 = vmatpush1.msra.mxu0 0.0
  %2370 = vmatprep.subr.mxu0 0.0
  %2371 = vmatpush1.msra.mxu0 0.0
  %2372 = vmatprep.subr.mxu0 0.0
  %2373 = vmatpush1.msra.mxu0 0.0
  %2374 = vmatprep.subr.mxu0 0.0
  %2375 = vmatpush1.msra.mxu0 0.0
  %2376 = vmatprep.subr.mxu0 0.0
  %2377 = vmatpush1.msra.mxu0 0.0
  %2378 = vmatprep.subr.mxu0 0.0
  %2379 = vmatpush1.msra.mxu0 0.0
  %2380 = vmatprep.subr.mxu0 0.0
  %2381 = vmatpush1.msra.mxu0 0.0
  %2382 = vmatprep.subr.mxu0 0.0
  %2383 = vmatpush1.msra.mxu0 0.0
  %2384 = vmatprep.subr.mxu0 0.0
  %2385 = vmatpush1.msra.mxu0 0.0
  %2386 = vmatprep.subr.mxu0 0.0
  %2387 = vmatpush1.msra.mxu0 0.0
  %2388 = vmatprep.subr.mxu0 0.0
  %2389 = vmatpush1.msra.mxu0 0.0
  %2390 = vmatprep.subr.mxu0 0.0
  %2391 = vmatpush1.msra.mxu0 0.0
  %2392 = vmatprep.subr.mxu0 0.0
  %2393 = vmatpush1.msra.mxu0 0.0
  %2394 = vmatprep.subr.mxu0 0.0
  %2395 = vmatpush1.msra.mxu0 0.0
  %2396 = vmatprep.subr.mxu0 0.0
  %2397 = vmatpush1.msra.mxu0 0.0
  %2398 = vmatprep.subr.mxu0 0.0
  %2399 = vmatpush1.msra.mxu0 0.0
  %2400 = vmatprep.subr.mxu0 0.0
  %2401 = vmatpush1.msra.mxu0 0.0
  %2402 = vmatprep.subr.mxu0 0.0
  %2403 = vmatpush1.msra.mxu0 0.0
  %2404 = vmatprep.subr.mxu0 0.0
  %2405 = vmatpush1.msra.mxu0 0.0
  %2406 = vmatprep.subr.mxu0 0.0
  %2407 = vmatpush1.msra.mxu0 0.0
  %2408 = vmatprep.mubr.f32.mxu0 0.0
  %2409 = vmatmul.mubr.f32.gmra.mrb[0].mxu0 %v2339
  %v2410 = vpop.f32.mrb[0].mxu0
  %v2411 = vadd.f32 0.0, %v2410
  %v2412 = vpop.f32.mrb[0].mxu0
  %2413 = vmatprep.mubr.f32.mxu0 0.0
  %2414 = vmatmul.mubr.f32.gmra.mrb[0].mxu0 %v2342
  %v2415 = vpop.f32.mrb[0].mxu0
  %v2416 = vadd.f32 0.0, %v2415
  %v2417 = vpop.f32.mrb[0].mxu0
  %2418 = vdwg.mxu0
  %2419 = vxpose.xlu0.b32.start [1/16] %v33, 128
  %2420 = vxpose.xlu0.b32.cont [2/16] 0.0, 128
  %2421 = vxpose.xlu0.b32.cont [3/16] 0.0, 128
  %2422 = vxpose.xlu0.b32.cont [4/16] 0.0, 128
  %2423 = vxpose.xlu0.b32.cont [5/16] 0.0, 128
  %2424 = vxpose.xlu0.b32.cont [6/16] 0.0, 128
  %2425 = vxpose.xlu0.b32.cont [7/16] 0.0, 128
  %2426 = vxpose.xlu0.b32.cont [8/16] 0.0, 128
  %2427 = vxpose.xlu0.b32.cont [9/16] 0.0, 128
  %2428 = vxpose.xlu0.b32.cont [10/16] 0.0, 128
  %2429 = vxpose.xlu0.b32.cont [11/16] 0.0, 128
  %2430 = vxpose.xlu0.b32.cont [12/16] 0.0, 128
  %2431 = vxpose.xlu0.b32.cont [13/16] 0.0, 128
  %2432 = vxpose.xlu0.b32.cont [14/16] 0.0, 128
  %2433 = vxpose.xlu0.b32.cont [15/16] 0.0, 128
  %2434 = vxpose.xlu0.b32.end [16/16] 0.0, 128
  %v2435 = vpop.trf.xlu0
  %v2436 = vpop.trf.xlu0
  %v2437 = vpop.trf.xlu0
  %v2438 = vpop.trf.xlu0
  %v2439 = vpop.trf.xlu0
  %v2440 = vpop.trf.xlu0
  %v2441 = vpop.trf.xlu0
  %v2442 = vpop.trf.xlu0
  %v2443 = vpop.trf.xlu0
  %v2444 = vpop.trf.xlu0
  %v2445 = vpop.trf.xlu0
  %v2446 = vpop.trf.xlu0
  %v2447 = vpop.trf.xlu0
  %v2448 = vpop.trf.xlu0
  %v2449 = vpop.trf.xlu0
  %v2450 = vpop.trf.xlu0
  %v2452 = vsel %vm1320, %v2435, 0
  %v2455 = vsel %vm1320, %v2436, 0
  %2457 = vmatprep.subr.mxu0 0.0
  %2458 = vmatpush1.msra.mxu0 %v1282
  %2459 = vmatprep.subr.mxu0 0.0
  %2460 = vmatpush1.msra.mxu0 0.0
  %2461 = vmatprep.subr.mxu0 0.0
  %2462 = vmatpush1.msra.mxu0 0.0
  %2463 = vmatprep.subr.mxu0 0.0
  %2464 = vmatpush1.msra.mxu0 0.0
  %2465 = vmatprep.subr.mxu0 0.0
  %2466 = vmatpush1.msra.mxu0 0.0
  %2467 = vmatprep.subr.mxu0 0.0
  %2468 = vmatpush1.msra.mxu0 0.0
  %2469 = vmatprep.subr.mxu0 0.0
  %2470 = vmatpush1.msra.mxu0 0.0
  %2471 = vmatprep.subr.mxu0 0.0
  %2472 = vmatpush1.msra.mxu0 0.0
  %2473 = vmatprep.subr.mxu0 0.0
  %2474 = vmatpush1.msra.mxu0 0.0
  %2475 = vmatprep.subr.mxu0 0.0
  %2476 = vmatpush1.msra.mxu0 0.0
  %2477 = vmatprep.subr.mxu0 0.0
  %2478 = vmatpush1.msra.mxu0 0.0
  %2479 = vmatprep.subr.mxu0 0.0
  %2480 = vmatpush1.msra.mxu0 0.0
  %2481 = vmatprep.subr.mxu0 0.0
  %2482 = vmatpush1.msra.mxu0 0.0
  %2483 = vmatprep.subr.mxu0 0.0
  %2484 = vmatpush1.msra.mxu0 0.0
  %2485 = vmatprep.subr.mxu0 0.0
  %2486 = vmatpush1.msra.mxu0 0.0
  %2487 = vmatprep.subr.mxu0 0.0
  %2488 = vmatpush1.msra.mxu0 0.0
  %2489 = vmatprep.subr.mxu0 0.0
  %2490 = vmatpush1.msra.mxu0 0.0
  %2491 = vmatprep.subr.mxu0 0.0
  %2492 = vmatpush1.msra.mxu0 0.0
  %2493 = vmatprep.subr.mxu0 0.0
  %2494 = vmatpush1.msra.mxu0 0.0
  %2495 = vmatprep.subr.mxu0 0.0
  %2496 = vmatpush1.msra.mxu0 0.0
  %2497 = vmatprep.subr.mxu0 0.0
  %2498 = vmatpush1.msra.mxu0 0.0
  %2499 = vmatprep.subr.mxu0 0.0
  %2500 = vmatpush1.msra.mxu0 0.0
  %2501 = vmatprep.subr.mxu0 0.0
  %2502 = vmatpush1.msra.mxu0 0.0
  %2503 = vmatprep.subr.mxu0 0.0
  %2504 = vmatpush1.msra.mxu0 0.0
  %2505 = vmatprep.subr.mxu0 0.0
  %2506 = vmatpush1.msra.mxu0 0.0
  %2507 = vmatprep.subr.mxu0 0.0
  %2508 = vmatpush1.msra.mxu0 0.0
  %2509 = vmatprep.subr.mxu0 0.0
  %2510 = vmatpush1.msra.mxu0 0.0
  %2511 = vmatprep.subr.mxu0 0.0
  %2512 = vmatpush1.msra.mxu0 0.0
  %2513 = vmatprep.subr.mxu0 0.0
  %2514 = vmatpush1.msra.mxu0 0.0
  %2515 = vmatprep.subr.mxu0 0.0
  %2516 = vmatpush1.msra.mxu0 0.0
  %2517 = vmatprep.subr.mxu0 0.0
  %2518 = vmatpush1.msra.mxu0 0.0
  %2519 = vmatprep.subr.mxu0 0.0
  %2520 = vmatpush1.msra.mxu0 0.0
  %2521 = vmatprep.mubr.f32.mxu0 0.0
  %2522 = vmatmul.mubr.f32.gmra.mrb[0].mxu0 %v2452
  %v2523 = vpop.f32.mrb[0].mxu0
  %v2524 = vadd.f32 0.0, %v2523
  %v2525 = vpop.f32.mrb[0].mxu0
  %2526 = vmatprep.mubr.f32.mxu0 0.0
  %2527 = vmatmul.mubr.f32.gmra.mrb[0].mxu0 %v2455
  %v2528 = vpop.f32.mrb[0].mxu0
  %v2529 = vadd.f32 0.0, %v2528
  %v2530 = vpop.f32.mrb[0].mxu0
  %2531 = vdwg.mxu0
  %2532 = vxpose.xlu0.b32.start [1/16] %v34, 128
  %2533 = vxpose.xlu0.b32.cont [2/16] 0.0, 128
  %2534 = vxpose.xlu0.b32.cont [3/16] 0.0, 128
  %2535 = vxpose.xlu0.b32.cont [4/16] 0.0, 128
  %2536 = vxpose.xlu0.b32.cont [5/16] 0.0, 128
  %2537 = vxpose.xlu0.b32.cont [6/16] 0.0, 128
  %2538 = vxpose.xlu0.b32.cont [7/16] 0.0, 128
  %2539 = vxpose.xlu0.b32.cont [8/16] 0.0, 128
  %2540 = vxpose.xlu0.b32.cont [9/16] 0.0, 128
  %2541 = vxpose.xlu0.b32.cont [10/16] 0.0, 128
  %2542 = vxpose.xlu0.b32.cont [11/16] 0.0, 128
  %2543 = vxpose.xlu0.b32.cont [12/16] 0.0, 128
  %2544 = vxpose.xlu0.b32.cont [13/16] 0.0, 128
  %2545 = vxpose.xlu0.b32.cont [14/16] 0.0, 128
  %2546 = vxpose.xlu0.b32.cont [15/16] 0.0, 128
  %2547 = vxpose.xlu0.b32.end [16/16] 0.0, 128
  %v2548 = vpop.trf.xlu0
  %v2549 = vpop.trf.xlu0
  %v2550 = vpop.trf.xlu0
  %v2551 = vpop.trf.xlu0
  %v2552 = vpop.trf.xlu0
  %v2553 = vpop.trf.xlu0
  %v2554 = vpop.trf.xlu0
  %v2555 = vpop.trf.xlu0
  %v2556 = vpop.trf.xlu0
  %v2557 = vpop.trf.xlu0
  %v2558 = vpop.trf.xlu0
  %v2559 = vpop.trf.xlu0
  %v2560 = vpop.trf.xlu0
  %v2561 = vpop.trf.xlu0
  %v2562 = vpop.trf.xlu0
  %v2563 = vpop.trf.xlu0
  %v2565 = vsel %vm1320, %v2548, 0
  %v2568 = vsel %vm1320, %v2549, 0
  %2570 = vmatprep.subr.mxu0 0.0
  %2571 = vmatpush1.msra.mxu0 %v1283
  %2572 = vmatprep.subr.mxu0 0.0
  %2573 = vmatpush1.msra.mxu0 0.0
  %2574 = vmatprep.subr.mxu0 0.0
  %2575 = vmatpush1.msra.mxu0 0.0
  %2576 = vmatprep.subr.mxu0 0.0
  %2577 = vmatpush1.msra.mxu0 0.0
  %2578 = vmatprep.subr.mxu0 0.0
  %2579 = vmatpush1.msra.mxu0 0.0
  %2580 = vmatprep.subr.mxu0 0.0
  %2581 = vmatpush1.msra.mxu0 0.0
  %2582 = vmatprep.subr.mxu0 0.0
  %2583 = vmatpush1.msra.mxu0 0.0
  %2584 = vmatprep.subr.mxu0 0.0
  %2585 = vmatpush1.msra.mxu0 0.0
  %2586 = vmatprep.subr.mxu0 0.0
  %2587 = vmatpush1.msra.mxu0 0.0
  %2588 = vmatprep.subr.mxu0 0.0
  %2589 = vmatpush1.msra.mxu0 0.0
  %2590 = vmatprep.subr.mxu0 0.0
  %2591 = vmatpush1.msra.mxu0 0.0
  %2592 = vmatprep.subr.mxu0 0.0
  %2593 = vmatpush1.msra.mxu0 0.0
  %2594 = vmatprep.subr.mxu0 0.0
  %2595 = vmatpush1.msra.mxu0 0.0
  %2596 = vmatprep.subr.mxu0 0.0
  %2597 = vmatpush1.msra.mxu0 0.0
  %2598 = vmatprep.subr.mxu0 0.0
  %2599 = vmatpush1.msra.mxu0 0.0
  %2600 = vmatprep.subr.mxu0 0.0
  %2601 = vmatpush1.msra.mxu0 0.0
  %2602 = vmatprep.subr.mxu0 0.0
  %2603 = vmatpush1.msra.mxu0 0.0
  %2604 = vmatprep.subr.mxu0 0.0
  %2605 = vmatpush1.msra.mxu0 0.0
  %2606 = vmatprep.subr.mxu0 0.0
  %2607 = vmatpush1.msra.mxu0 0.0
  %2608 = vmatprep.subr.mxu0 0.0
  %2609 = vmatpush1.msra.mxu0 0.0
  %2610 = vmatprep.subr.mxu0 0.0
  %2611 = vmatpush1.msra.mxu0 0.0
  %2612 = vmatprep.subr.mxu0 0.0
  %2613 = vmatpush1.msra.mxu0 0.0
  %2614 = vmatprep.subr.mxu0 0.0
  %2615 = vmatpush1.msra.mxu0 0.0
  %2616 = vmatprep.subr.mxu0 0.0
  %2617 = vmatpush1.msra.mxu0 0.0
  %2618 = vmatprep.subr.mxu0 0.0
  %2619 = vmatpush1.msra.mxu0 0.0
  %2620 = vmatprep.subr.mxu0 0.0
  %2621 = vmatpush1.msra.mxu0 0.0
  %2622 = vmatprep.subr.mxu0 0.0
  %2623 = vmatpush1.msra.mxu0 0.0
  %2624 = vmatprep.subr.mxu0 0.0
  %2625 = vmatpush1.msra.mxu0 0.0
  %2626 = vmatprep.subr.mxu0 0.0
  %2627 = vmatpush1.msra.mxu0 0.0
  %2628 = vmatprep.subr.mxu0 0.0
  %2629 = vmatpush1.msra.mxu0 0.0
  %2630 = vmatprep.subr.mxu0 0.0
  %2631 = vmatpush1.msra.mxu0 0.0
  %2632 = vmatprep.subr.mxu0 0.0
  %2633 = vmatpush1.msra.mxu0 0.0
  %2634 = vmatprep.mubr.f32.mxu0 0.0
  %2635 = vmatmul.mubr.f32.gmra.mrb[0].mxu0 %v2565
  %v2636 = vpop.f32.mrb[0].mxu0
  %v2637 = vadd.f32 0.0, %v2636
  %v2638 = vpop.f32.mrb[0].mxu0
  %2639 = vmatprep.mubr.f32.mxu0 0.0
  %2640 = vmatmul.mubr.f32.gmra.mrb[0].mxu0 %v2568
  %v2641 = vpop.f32.mrb[0].mxu0
  %v2642 = vadd.f32 0.0, %v2641
  %v2643 = vpop.f32.mrb[0].mxu0
  %2644 = vdwg.mxu0
  %2645 = vxpose.xlu0.b32.start [1/16] %v35, 128
  %2646 = vxpose.xlu0.b32.cont [2/16] 0.0, 128
  %2647 = vxpose.xlu0.b32.cont [3/16] 0.0, 128
  %2648 = vxpose.xlu0.b32.cont [4/16] 0.0, 128
  %2649 = vxpose.xlu0.b32.cont [5/16] 0.0, 128
  %2650 = vxpose.xlu0.b32.cont [6/16] 0.0, 128
  %2651 = vxpose.xlu0.b32.cont [7/16] 0.0, 128
  %2652 = vxpose.xlu0.b32.cont [8/16] 0.0, 128
  %2653 = vxpose.xlu0.b32.cont [9/16] 0.0, 128
  %2654 = vxpose.xlu0.b32.cont [10/16] 0.0, 128
  %2655 = vxpose.xlu0.b32.cont [11/16] 0.0, 128
  %2656 = vxpose.xlu0.b32.cont [12/16] 0.0, 128
  %2657 = vxpose.xlu0.b32.cont [13/16] 0.0, 128
  %2658 = vxpose.xlu0.b32.cont [14/16] 0.0, 128
  %2659 = vxpose.xlu0.b32.cont [15/16] 0.0, 128
  %2660 = vxpose.xlu0.b32.end [16/16] 0.0, 128
  %v2661 = vpop.trf.xlu0
  %v2662 = vpop.trf.xlu0
  %v2663 = vpop.trf.xlu0
  %v2664 = vpop.trf.xlu0
  %v2665 = vpop.trf.xlu0
  %v2666 = vpop.trf.xlu0
  %v2667 = vpop.trf.xlu0
  %v2668 = vpop.trf.xlu0
  %v2669 = vpop.trf.xlu0
  %v2670 = vpop.trf.xlu0
  %v2671 = vpop.trf.xlu0
  %v2672 = vpop.trf.xlu0
  %v2673 = vpop.trf.xlu0
  %v2674 = vpop.trf.xlu0
  %v2675 = vpop.trf.xlu0
  %v2676 = vpop.trf.xlu0
  %v2678 = vsel %vm1320, %v2661, 0
  %v2681 = vsel %vm1320, %v2662, 0
  %2683 = vmatprep.subr.mxu0 0.0
  %2684 = vmatpush1.msra.mxu0 %v1284
  %2685 = vmatprep.subr.mxu0 0.0
  %2686 = vmatpush1.msra.mxu0 0.0
  %2687 = vmatprep.subr.mxu0 0.0
  %2688 = vmatpush1.msra.mxu0 0.0
  %2689 = vmatprep.subr.mxu0 0.0
  %2690 = vmatpush1.msra.mxu0 0.0
  %2691 = vmatprep.subr.mxu0 0.0
  %2692 = vmatpush1.msra.mxu0 0.0
  %2693 = vmatprep.subr.mxu0 0.0
  %2694 = vmatpush1.msra.mxu0 0.0
  %2695 = vmatprep.subr.mxu0 0.0
  %2696 = vmatpush1.msra.mxu0 0.0
  %2697 = vmatprep.subr.mxu0 0.0
  %2698 = vmatpush1.msra.mxu0 0.0
  %2699 = vmatprep.subr.mxu0 0.0
  %2700 = vmatpush1.msra.mxu0 0.0
  %2701 = vmatprep.subr.mxu0 0.0
  %2702 = vmatpush1.msra.mxu0 0.0
  %2703 = vmatprep.subr.mxu0 0.0
  %2704 = vmatpush1.msra.mxu0 0.0
  %2705 = vmatprep.subr.mxu0 0.0
  %2706 = vmatpush1.msra.mxu0 0.0
  %2707 = vmatprep.subr.mxu0 0.0
  %2708 = vmatpush1.msra.mxu0 0.0
  %2709 = vmatprep.subr.mxu0 0.0
  %2710 = vmatpush1.msra.mxu0 0.0
  %2711 = vmatprep.subr.mxu0 0.0
  %2712 = vmatpush1.msra.mxu0 0.0
  %2713 = vmatprep.subr.mxu0 0.0
  %2714 = vmatpush1.msra.mxu0 0.0
  %2715 = vmatprep.subr.mxu0 0.0
  %2716 = vmatpush1.msra.mxu0 0.0
  %2717 = vmatprep.subr.mxu0 0.0
  %2718 = vmatpush1.msra.mxu0 0.0
  %2719 = vmatprep.subr.mxu0 0.0
  %2720 = vmatpush1.msra.mxu0 0.0
  %2721 = vmatprep.subr.mxu0 0.0
  %2722 = vmatpush1.msra.mxu0 0.0
  %2723 = vmatprep.subr.mxu0 0.0
  %2724 = vmatpush1.msra.mxu0 0.0
  %2725 = vmatprep.subr.mxu0 0.0
  %2726 = vmatpush1.msra.mxu0 0.0
  %2727 = vmatprep.subr.mxu0 0.0
  %2728 = vmatpush1.msra.mxu0 0.0
  %2729 = vmatprep.subr.mxu0 0.0
  %2730 = vmatpush1.msra.mxu0 0.0
  %2731 = vmatprep.subr.mxu0 0.0
  %2732 = vmatpush1.msra.mxu0 0.0
  %2733 = vmatprep.subr.mxu0 0.0
  %2734 = vmatpush1.msra.mxu0 0.0
  %2735 = vmatprep.subr.mxu0 0.0
  %2736 = vmatpush1.msra.mxu0 0.0
  %2737 = vmatprep.subr.mxu0 0.0
  %2738 = vmatpush1.msra.mxu0 0.0
  %2739 = vmatprep.subr.mxu0 0.0
  %2740 = vmatpush1.msra.mxu0 0.0
  %2741 = vmatprep.subr.mxu0 0.0
  %2742 = vmatpush1.msra.mxu0 0.0
  %2743 = vmatprep.subr.mxu0 0.0
  %2744 = vmatpush1.msra.mxu0 0.0
  %2745 = vmatprep.subr.mxu0 0.0
  %2746 = vmatpush1.msra.mxu0 0.0
  %2747 = vmatprep.mubr.f32.mxu0 0.0
  %2748 = vmatmul.mubr.f32.gmra.mrb[0].mxu0 %v2678
  %v2749 = vpop.f32.mrb[0].mxu0
  %v2750 = vadd.f32 0.0, %v2749
  %v2751 = vpop.f32.mrb[0].mxu0
  %2752 = vmatprep.mubr.f32.mxu0 0.0
  %2753 = vmatmul.mubr.f32.gmra.mrb[0].mxu0 %v2681
  %v2754 = vpop.f32.mrb[0].mxu0
  %v2755 = vadd.f32 0.0, %v2754
  %v2756 = vpop.f32.mrb[0].mxu0
  %2757 = vdwg.mxu0
  %2758 = vxpose.xlu0.b32.start [1/16] %v36, 128
  %2759 = vxpose.xlu0.b32.cont [2/16] 0.0, 128
  %2760 = vxpose.xlu0.b32.cont [3/16] 0.0, 128
  %2761 = vxpose.xlu0.b32.cont [4/16] 0.0, 128
  %2762 = vxpose.xlu0.b32.cont [5/16] 0.0, 128
  %2763 = vxpose.xlu0.b32.cont [6/16] 0.0, 128
  %2764 = vxpose.xlu0.b32.cont [7/16] 0.0, 128
  %2765 = vxpose.xlu0.b32.cont [8/16] 0.0, 128
  %2766 = vxpose.xlu0.b32.cont [9/16] 0.0, 128
  %2767 = vxpose.xlu0.b32.cont [10/16] 0.0, 128
  %2768 = vxpose.xlu0.b32.cont [11/16] 0.0, 128
  %2769 = vxpose.xlu0.b32.cont [12/16] 0.0, 128
  %2770 = vxpose.xlu0.b32.cont [13/16] 0.0, 128
  %2771 = vxpose.xlu0.b32.cont [14/16] 0.0, 128
  %2772 = vxpose.xlu0.b32.cont [15/16] 0.0, 128
  %2773 = vxpose.xlu0.b32.end [16/16] 0.0, 128
  %v2774 = vpop.trf.xlu0
  %v2775 = vpop.trf.xlu0
  %v2776 = vpop.trf.xlu0
  %v2777 = vpop.trf.xlu0
  %v2778 = vpop.trf.xlu0
  %v2779 = vpop.trf.xlu0
  %v2780 = vpop.trf.xlu0
  %v2781 = vpop.trf.xlu0
  %v2782 = vpop.trf.xlu0
  %v2783 = vpop.trf.xlu0
  %v2784 = vpop.trf.xlu0
  %v2785 = vpop.trf.xlu0
  %v2786 = vpop.trf.xlu0
  %v2787 = vpop.trf.xlu0
  %v2788 = vpop.trf.xlu0
  %v2789 = vpop.trf.xlu0
  %v2791 = vsel %vm1320, %v2774, 0
  %v2794 = vsel %vm1320, %v2775, 0
  %2796 = vmatprep.subr.mxu0 0.0
  %2797 = vmatpush1.msra.mxu0 %v1285
  %2798 = vmatprep.subr.mxu0 0.0
  %2799 = vmatpush1.msra.mxu0 0.0
  %2800 = vmatprep.subr.mxu0 0.0
  %2801 = vmatpush1.msra.mxu0 0.0
  %2802 = vmatprep.subr.mxu0 0.0
  %2803 = vmatpush1.msra.mxu0 0.0
  %2804 = vmatprep.subr.mxu0 0.0
  %2805 = vmatpush1.msra.mxu0 0.0
  %2806 = vmatprep.subr.mxu0 0.0
  %2807 = vmatpush1.msra.mxu0 0.0
  %2808 = vmatprep.subr.mxu0 0.0
  %2809 = vmatpush1.msra.mxu0 0.0
  %2810 = vmatprep.subr.mxu0 0.0
  %2811 = vmatpush1.msra.mxu0 0.0
  %2812 = vmatprep.subr.mxu0 0.0
  %2813 = vmatpush1.msra.mxu0 0.0
  %2814 = vmatprep.subr.mxu0 0.0
  %2815 = vmatpush1.msra.mxu0 0.0
  %2816 = vmatprep.subr.mxu0 0.0
  %2817 = vmatpush1.msra.mxu0 0.0
  %2818 = vmatprep.subr.mxu0 0.0
  %2819 = vmatpush1.msra.mxu0 0.0
  %2820 = vmatprep.subr.mxu0 0.0
  %2821 = vmatpush1.msra.mxu0 0.0
  %2822 = vmatprep.subr.mxu0 0.0
  %2823 = vmatpush1.msra.mxu0 0.0
  %2824 = vmatprep.subr.mxu0 0.0
  %2825 = vmatpush1.msra.mxu0 0.0
  %2826 = vmatprep.subr.mxu0 0.0
  %2827 = vmatpush1.msra.mxu0 0.0
  %2828 = vmatprep.subr.mxu0 0.0
  %2829 = vmatpush1.msra.mxu0 0.0
  %2830 = vmatprep.subr.mxu0 0.0
  %2831 = vmatpush1.msra.mxu0 0.0
  %2832 = vmatprep.subr.mxu0 0.0
  %2833 = vmatpush1.msra.mxu0 0.0
  %2834 = vmatprep.subr.mxu0 0.0
  %2835 = vmatpush1.msra.mxu0 0.0
  %2836 = vmatprep.subr.mxu0 0.0
  %2837 = vmatpush1.msra.mxu0 0.0
  %2838 = vmatprep.subr.mxu0 0.0
  %2839 = vmatpush1.msra.mxu0 0.0
  %2840 = vmatprep.subr.mxu0 0.0
  %2841 = vmatpush1.msra.mxu0 0.0
  %2842 = vmatprep.subr.mxu0 0.0
  %2843 = vmatpush1.msra.mxu0 0.0
  %2844 = vmatprep.subr.mxu0 0.0
  %2845 = vmatpush1.msra.mxu0 0.0
  %2846 = vmatprep.subr.mxu0 0.0
  %2847 = vmatpush1.msra.mxu0 0.0
  %2848 = vmatprep.subr.mxu0 0.0
  %2849 = vmatpush1.msra.mxu0 0.0
  %2850 = vmatprep.subr.mxu0 0.0
  %2851 = vmatpush1.msra.mxu0 0.0
  %2852 = vmatprep.subr.mxu0 0.0
  %2853 = vmatpush1.msra.mxu0 0.0
  %2854 = vmatprep.subr.mxu0 0.0
  %2855 = vmatpush1.msra.mxu0 0.0
  %2856 = vmatprep.subr.mxu0 0.0
  %2857 = vmatpush1.msra.mxu0 0.0
  %2858 = vmatprep.subr.mxu0 0.0
  %2859 = vmatpush1.msra.mxu0 0.0
  %2860 = vmatprep.mubr.f32.mxu0 0.0
  %2861 = vmatmul.mubr.f32.gmra.mrb[0].mxu0 %v2791
  %v2862 = vpop.f32.mrb[0].mxu0
  %v2863 = vadd.f32 0.0, %v2862
  %v2864 = vpop.f32.mrb[0].mxu0
  %2865 = vmatprep.mubr.f32.mxu0 0.0
  %2866 = vmatmul.mubr.f32.gmra.mrb[0].mxu0 %v2794
  %v2867 = vpop.f32.mrb[0].mxu0
  %v2868 = vadd.f32 0.0, %v2867
  %v2869 = vpop.f32.mrb[0].mxu0
  %2870 = vdwg.mxu0
  %2871 = vxpose.xlu0.b32.start [1/16] %v37, 128
  %2872 = vxpose.xlu0.b32.cont [2/16] 0.0, 128
  %2873 = vxpose.xlu0.b32.cont [3/16] 0.0, 128
  %2874 = vxpose.xlu0.b32.cont [4/16] 0.0, 128
  %2875 = vxpose.xlu0.b32.cont [5/16] 0.0, 128
  %2876 = vxpose.xlu0.b32.cont [6/16] 0.0, 128
  %2877 = vxpose.xlu0.b32.cont [7/16] 0.0, 128
  %2878 = vxpose.xlu0.b32.cont [8/16] 0.0, 128
  %2879 = vxpose.xlu0.b32.cont [9/16] 0.0, 128
  %2880 = vxpose.xlu0.b32.cont [10/16] 0.0, 128
  %2881 = vxpose.xlu0.b32.cont [11/16] 0.0, 128
  %2882 = vxpose.xlu0.b32.cont [12/16] 0.0, 128
  %2883 = vxpose.xlu0.b32.cont [13/16] 0.0, 128
  %2884 = vxpose.xlu0.b32.cont [14/16] 0.0, 128
  %2885 = vxpose.xlu0.b32.cont [15/16] 0.0, 128
  %2886 = vxpose.xlu0.b32.end [16/16] 0.0, 128
  %v2887 = vpop.trf.xlu0
  %v2888 = vpop.trf.xlu0
  %v2889 = vpop.trf.xlu0
  %v2890 = vpop.trf.xlu0
  %v2891 = vpop.trf.xlu0
  %v2892 = vpop.trf.xlu0
  %v2893 = vpop.trf.xlu0
  %v2894 = vpop.trf.xlu0
  %v2895 = vpop.trf.xlu0
  %v2896 = vpop.trf.xlu0
  %v2897 = vpop.trf.xlu0
  %v2898 = vpop.trf.xlu0
  %v2899 = vpop.trf.xlu0
  %v2900 = vpop.trf.xlu0
  %v2901 = vpop.trf.xlu0
  %v2902 = vpop.trf.xlu0
  %v2904 = vsel %vm1320, %v2887, 0
  %v2907 = vsel %vm1320, %v2888, 0
  %2909 = vmatprep.subr.mxu0 0.0
  %2910 = vmatpush1.msra.mxu0 %v1286
  %2911 = vmatprep.subr.mxu0 0.0
  %2912 = vmatpush1.msra.mxu0 0.0
  %2913 = vmatprep.subr.mxu0 0.0
  %2914 = vmatpush1.msra.mxu0 0.0
  %2915 = vmatprep.subr.mxu0 0.0
  %2916 = vmatpush1.msra.mxu0 0.0
  %2917 = vmatprep.subr.mxu0 0.0
  %2918 = vmatpush1.msra.mxu0 0.0
  %2919 = vmatprep.subr.mxu0 0.0
  %2920 = vmatpush1.msra.mxu0 0.0
  %2921 = vmatprep.subr.mxu0 0.0
  %2922 = vmatpush1.msra.mxu0 0.0
  %2923 = vmatprep.subr.mxu0 0.0
  %2924 = vmatpush1.msra.mxu0 0.0
  %2925 = vmatprep.subr.mxu0 0.0
  %2926 = vmatpush1.msra.mxu0 0.0
  %2927 = vmatprep.subr.mxu0 0.0
  %2928 = vmatpush1.msra.mxu0 0.0
  %2929 = vmatprep.subr.mxu0 0.0
  %2930 = vmatpush1.msra.mxu0 0.0
  %2931 = vmatprep.subr.mxu0 0.0
  %2932 = vmatpush1.msra.mxu0 0.0
  %2933 = vmatprep.subr.mxu0 0.0
  %2934 = vmatpush1.msra.mxu0 0.0
  %2935 = vmatprep.subr.mxu0 0.0
  %2936 = vmatpush1.msra.mxu0 0.0
  %2937 = vmatprep.subr.mxu0 0.0
  %2938 = vmatpush1.msra.mxu0 0.0
  %2939 = vmatprep.subr.mxu0 0.0
  %2940 = vmatpush1.msra.mxu0 0.0
  %2941 = vmatprep.subr.mxu0 0.0
  %2942 = vmatpush1.msra.mxu0 0.0
  %2943 = vmatprep.subr.mxu0 0.0
  %2944 = vmatpush1.msra.mxu0 0.0
  %2945 = vmatprep.subr.mxu0 0.0
  %2946 = vmatpush1.msra.mxu0 0.0
  %2947 = vmatprep.subr.mxu0 0.0
  %2948 = vmatpush1.msra.mxu0 0.0
  %2949 = vmatprep.subr.mxu0 0.0
  %2950 = vmatpush1.msra.mxu0 0.0
  %2951 = vmatprep.subr.mxu0 0.0
  %2952 = vmatpush1.msra.mxu0 0.0
  %2953 = vmatprep.subr.mxu0 0.0
  %2954 = vmatpush1.msra.mxu0 0.0
  %2955 = vmatprep.subr.mxu0 0.0
  %2956 = vmatpush1.msra.mxu0 0.0
  %2957 = vmatprep.subr.mxu0 0.0
  %2958 = vmatpush1.msra.mxu0 0.0
  %2959 = vmatprep.subr.mxu0 0.0
  %2960 = vmatpush1.msra.mxu0 0.0
  %2961 = vmatprep.subr.mxu0 0.0
  %2962 = vmatpush1.msra.mxu0 0.0
  %2963 = vmatprep.subr.mxu0 0.0
  %2964 = vmatpush1.msra.mxu0 0.0
  %2965 = vmatprep.subr.mxu0 0.0
  %2966 = vmatpush1.msra.mxu0 0.0
  %2967 = vmatprep.subr.mxu0 0.0
  %2968 = vmatpush1.msra.mxu0 0.0
  %2969 = vmatprep.subr.mxu0 0.0
  %2970 = vmatpush1.msra.mxu0 0.0
  %2971 = vmatprep.subr.mxu0 0.0
  %2972 = vmatpush1.msra.mxu0 0.0
  %2973 = vmatprep.mubr.f32.mxu0 0.0
  %2974 = vmatmul.mubr.f32.gmra.mrb[0].mxu0 %v2904
  %v2975 = vpop.f32.mrb[0].mxu0
  %v2976 = vadd.f32 0.0, %v2975
  %v2977 = vpop.f32.mrb[0].mxu0
  %2978 = vmatprep.mubr.f32.mxu0 0.0
  %2979 = vmatmul.mubr.f32.gmra.mrb[0].mxu0 %v2907
  %v2980 = vpop.f32.mrb[0].mxu0
  %v2981 = vadd.f32 0.0, %v2980
  %v2982 = vpop.f32.mrb[0].mxu0
  %2983 = vdwg.mxu0
  %2984 = vxpose.xlu0.b32.start [1/16] %v38, 128
  %2985 = vxpose.xlu0.b32.cont [2/16] 0.0, 128
  %2986 = vxpose.xlu0.b32.cont [3/16] 0.0, 128
  %2987 = vxpose.xlu0.b32.cont [4/16] 0.0, 128
  %2988 = vxpose.xlu0.b32.cont [5/16] 0.0, 128
  %2989 = vxpose.xlu0.b32.cont [6/16] 0.0, 128
  %2990 = vxpose.xlu0.b32.cont [7/16] 0.0, 128
  %2991 = vxpose.xlu0.b32.cont [8/16] 0.0, 128
  %2992 = vxpose.xlu0.b32.cont [9/16] 0.0, 128
  %2993 = vxpose.xlu0.b32.cont [10/16] 0.0, 128
  %2994 = vxpose.xlu0.b32.cont [11/16] 0.0, 128
  %2995 = vxpose.xlu0.b32.cont [12/16] 0.0, 128
  %2996 = vxpose.xlu0.b32.cont [13/16] 0.0, 128
  %2997 = vxpose.xlu0.b32.cont [14/16] 0.0, 128
  %2998 = vxpose.xlu0.b32.cont [15/16] 0.0, 128
  %2999 = vxpose.xlu0.b32.end [16/16] 0.0, 128
  %v3000 = vpop.trf.xlu0
  %v3001 = vpop.trf.xlu0
  %v3002 = vpop.trf.xlu0
  %v3003 = vpop.trf.xlu0
  %v3004 = vpop.trf.xlu0
  %v3005 = vpop.trf.xlu0
  %v3006 = vpop.trf.xlu0
  %v3007 = vpop.trf.xlu0
  %v3008 = vpop.trf.xlu0
  %v3009 = vpop.trf.xlu0
  %v3010 = vpop.trf.xlu0
  %v3011 = vpop.trf.xlu0
  %v3012 = vpop.trf.xlu0
  %v3013 = vpop.trf.xlu0
  %v3014 = vpop.trf.xlu0
  %v3015 = vpop.trf.xlu0
  %v3017 = vsel %vm1320, %v3000, 0
  %v3020 = vsel %vm1320, %v3001, 0
  %3022 = vmatprep.subr.mxu0 0.0
  %3023 = vmatpush1.msra.mxu0 %v1287
  %3024 = vmatprep.subr.mxu0 0.0
  %3025 = vmatpush1.msra.mxu0 0.0
  %3026 = vmatprep.subr.mxu0 0.0
  %3027 = vmatpush1.msra.mxu0 0.0
  %3028 = vmatprep.subr.mxu0 0.0
  %3029 = vmatpush1.msra.mxu0 0.0
  %3030 = vmatprep.subr.mxu0 0.0
  %3031 = vmatpush1.msra.mxu0 0.0
  %3032 = vmatprep.subr.mxu0 0.0
  %3033 = vmatpush1.msra.mxu0 0.0
  %3034 = vmatprep.subr.mxu0 0.0
  %3035 = vmatpush1.msra.mxu0 0.0
  %3036 = vmatprep.subr.mxu0 0.0
  %3037 = vmatpush1.msra.mxu0 0.0
  %3038 = vmatprep.subr.mxu0 0.0
  %3039 = vmatpush1.msra.mxu0 0.0
  %3040 = vmatprep.subr.mxu0 0.0
  %3041 = vmatpush1.msra.mxu0 0.0
  %3042 = vmatprep.subr.mxu0 0.0
  %3043 = vmatpush1.msra.mxu0 0.0
  %3044 = vmatprep.subr.mxu0 0.0
  %3045 = vmatpush1.msra.mxu0 0.0
  %3046 = vmatprep.subr.mxu0 0.0
  %3047 = vmatpush1.msra.mxu0 0.0
  %3048 = vmatprep.subr.mxu0 0.0
  %3049 = vmatpush1.msra.mxu0 0.0
  %3050 = vmatprep.subr.mxu0 0.0
  %3051 = vmatpush1.msra.mxu0 0.0
  %3052 = vmatprep.subr.mxu0 0.0
  %3053 = vmatpush1.msra.mxu0 0.0
  %3054 = vmatprep.subr.mxu0 0.0
  %3055 = vmatpush1.msra.mxu0 0.0
  %3056 = vmatprep.subr.mxu0 0.0
  %3057 = vmatpush1.msra.mxu0 0.0
  %3058 = vmatprep.subr.mxu0 0.0
  %3059 = vmatpush1.msra.mxu0 0.0
  %3060 = vmatprep.subr.mxu0 0.0
  %3061 = vmatpush1.msra.mxu0 0.0
  %3062 = vmatprep.subr.mxu0 0.0
  %3063 = vmatpush1.msra.mxu0 0.0
  %3064 = vmatprep.subr.mxu0 0.0
  %3065 = vmatpush1.msra.mxu0 0.0
  %3066 = vmatprep.subr.mxu0 0.0
  %3067 = vmatpush1.msra.mxu0 0.0
  %3068 = vmatprep.subr.mxu0 0.0
  %3069 = vmatpush1.msra.mxu0 0.0
  %3070 = vmatprep.subr.mxu0 0.0
  %3071 = vmatpush1.msra.mxu0 0.0
  %3072 = vmatprep.subr.mxu0 0.0
  %3073 = vmatpush1.msra.mxu0 0.0
  %3074 = vmatprep.subr.mxu0 0.0
  %3075 = vmatpush1.msra.mxu0 0.0
  %3076 = vmatprep.subr.mxu0 0.0
  %3077 = vmatpush1.msra.mxu0 0.0
  %3078 = vmatprep.subr.mxu0 0.0
  %3079 = vmatpush1.msra.mxu0 0.0
  %3080 = vmatprep.subr.mxu0 0.0
  %3081 = vmatpush1.msra.mxu0 0.0
  %3082 = vmatprep.subr.mxu0 0.0
  %3083 = vmatpush1.msra.mxu0 0.0
  %3084 = vmatprep.subr.mxu0 0.0
  %3085 = vmatpush1.msra.mxu0 0.0
  %3086 = vmatprep.mubr.f32.mxu0 0.0
  %3087 = vmatmul.mubr.f32.gmra.mrb[0].mxu0 %v3017
  %v3088 = vpop.f32.mrb[0].mxu0
  %v3089 = vadd.f32 0.0, %v3088
  %v3090 = vpop.f32.mrb[0].mxu0
  %3091 = vmatprep.mubr.f32.mxu0 0.0
  %3092 = vmatmul.mubr.f32.gmra.mrb[0].mxu0 %v3020
  %v3093 = vpop.f32.mrb[0].mxu0
  %v3094 = vadd.f32 0.0, %v3093
  %v3095 = vpop.f32.mrb[0].mxu0
  %3096 = vdwg.mxu0
  %vm3097 = vcmp.gt.f32.partialorder %v1394, 0.0
  %vm3098 = vcmp.gt.f32.partialorder %v1399, 0.0
  %vm3099 = vcmp.gt.f32.partialorder %v1507, 0.0
  %vm3100 = vcmp.gt.f32.partialorder %v1512, 0.0
  %vm3101 = vcmp.gt.f32.partialorder %v1620, 0.0
  %vm3102 = vcmp.gt.f32.partialorder %v1625, 0.0
  %vm3103 = vcmp.gt.f32.partialorder %v1733, 0.0
  %vm3104 = vcmp.gt.f32.partialorder %v1738, 0.0
  %vm3105 = vcmp.gt.f32.partialorder %v1846, 0.0
  %vm3106 = vcmp.gt.f32.partialorder %v1851, 0.0
  %vm3107 = vcmp.gt.f32.partialorder %v1959, 0.0
  %vm3108 = vcmp.gt.f32.partialorder %v1964, 0.0
  %vm3109 = vcmp.gt.f32.partialorder %v2072, 0.0
  %vm3110 = vcmp.gt.f32.partialorder %v2077, 0.0
  %vm3111 = vcmp.gt.f32.partialorder %v2185, 0.0
  %vm3112 = vcmp.gt.f32.partialorder %v2190, 0.0
  %vm3113 = vcmp.gt.f32.partialorder %v2298, 0.0
  %vm3114 = vcmp.gt.f32.partialorder %v2303, 0.0
  %vm3115 = vcmp.gt.f32.partialorder %v2411, 0.0
  %vm3116 = vcmp.gt.f32.partialorder %v2416, 0.0
  %vm3117 = vcmp.gt.f32.partialorder %v2524, 0.0
  %vm3118 = vcmp.gt.f32.partialorder %v2529, 0.0
  %vm3119 = vcmp.gt.f32.partialorder %v2637, 0.0
  %vm3120 = vcmp.gt.f32.partialorder %v2642, 0.0
  %vm3121 = vcmp.gt.f32.partialorder %v2750, 0.0
  %vm3122 = vcmp.gt.f32.partialorder %v2755, 0.0
  %vm3123 = vcmp.gt.f32.partialorder %v2863, 0.0
  %vm3124 = vcmp.gt.f32.partialorder %v2868, 0.0
  %vm3125 = vcmp.gt.f32.partialorder %v2976, 0.0
  %vm3126 = vcmp.gt.f32.partialorder %v2981, 0.0
  %vm3127 = vcmp.gt.f32.partialorder %v3089, 0.0
  %vm3128 = vcmp.gt.f32.partialorder %v3094, 0.0
  %v3129 = vmul.f32 %v1394, 0.01
  %v3130 = vmul.f32 %v1399, 0.01
  %v3131 = vmul.f32 %v1507, 0.01
  %v3132 = vmul.f32 %v1512, 0.01
  %v3133 = vmul.f32 %v1620, 0.01
  %v3134 = vmul.f32 %v1625, 0.01
  %v3135 = vmul.f32 %v1733, 0.01
  %v3136 = vmul.f32 %v1738, 0.01
  %v3137 = vmul.f32 %v1846, 0.01
  %v3138 = vmul.f32 %v1851, 0.01
  %v3139 = vmul.f32 %v1959, 0.01
  %v3140 = vmul.f32 %v1964, 0.01
  %v3141 = vmul.f32 %v2072, 0.01
  %v3142 = vmul.f32 %v2077, 0.01
  %v3143 = vmul.f32 %v2185, 0.01
  %v3144 = vmul.f32 %v2190, 0.01
  %v3145 = vmul.f32 %v2298, 0.01
  %v3146 = vmul.f32 %v2303, 0.01
  %v3147 = vmul.f32 %v2411, 0.01
  %v3148 = vmul.f32 %v2416, 0.01
  %v3149 = vmul.f32 %v2524, 0.01
  %v3150 = vmul.f32 %v2529, 0.01
  %v3151 = vmul.f32 %v2637, 0.01
  %v3152 = vmul.f32 %v2642, 0.01
  %v3153 = vmul.f32 %v2750, 0.01
  %v3154 = vmul.f32 %v2755, 0.01
  %v3155 = vmul.f32 %v2863, 0.01
  %v3156 = vmul.f32 %v2868, 0.01
  %v3157 = vmul.f32 %v2976, 0.01
  %v3158 = vmul.f32 %v2981, 0.01
  %v3159 = vmul.f32 %v3089, 0.01
  %v3160 = vmul.f32 %v3094, 0.01
  %v3161 = vsel %vm3097, %v1394, %v3129
  %v3162 = vsel %vm3098, %v1399, %v3130
  %v3163 = vsel %vm3099, %v1507, %v3131
  %v3164 = vsel %vm3100, %v1512, %v3132
  %v3165 = vsel %vm3101, %v1620, %v3133
  %v3166 = vsel %vm3102, %v1625, %v3134
  %v3167 = vsel %vm3103, %v1733, %v3135
  %v3168 = vsel %vm3104, %v1738, %v3136
  %v3169 = vsel %vm3105, %v1846, %v3137
  %v3170 = vsel %vm3106, %v1851, %v3138
  %v3171 = vsel %vm3107, %v1959, %v3139
  %v3172 = vsel %vm3108, %v1964, %v3140
  %v3173 = vsel %vm3109, %v2072, %v3141
  %v3174 = vsel %vm3110, %v2077, %v3142
  %v3175 = vsel %vm3111, %v2185, %v3143
  %v3176 = vsel %vm3112, %v2190, %v3144
  %v3177 = vsel %vm3113, %v2298, %v3145
  %v3178 = vsel %vm3114, %v2303, %v3146
  %v3179 = vsel %vm3115, %v2411, %v3147
  %v3180 = vsel %vm3116, %v2416, %v3148
  %v3181 = vsel %vm3117, %v2524, %v3149
  %v3182 = vsel %vm3118, %v2529, %v3150
  %v3183 = vsel %vm3119, %v2637, %v3151
  %v3184 = vsel %vm3120, %v2642, %v3152
  %v3185 = vsel %vm3121, %v2750, %v3153
  %v3186 = vsel %vm3122, %v2755, %v3154
  %v3187 = vsel %vm3123, %v2863, %v3155
  %v3188 = vsel %vm3124, %v2868, %v3156
  %v3189 = vsel %vm3125, %v2976, %v3157
  %v3190 = vsel %vm3126, %v2981, %v3158
  %v3191 = vsel %vm3127, %v3089, %v3159
  %v3192 = vsel %vm3128, %v3094, %v3160
  %v3193 = vld [vmem:[%s4] sm:$0xff]
  %v3194 = vld [vmem:[%s4 + $0x8] sm:$0xff]
  %v3195 = vld [vmem:[%s4 + $0x10] sm:$0xff]
  %v3196 = vld [vmem:[%s4 + $0x18] sm:$0xff]
  %v3197 = vld [vmem:[%s4 + $0x20] sm:$0xff]
  %v3198 = vld [vmem:[%s4 + $0x28] sm:$0xff]
  %v3199 = vld [vmem:[%s4 + $0x30] sm:$0xff]
  %v3200 = vld [vmem:[%s4 + $0x38] sm:$0xff]
  %vm3201 = vcmask 261120
  %v3203 = vsel %vm3201, %v3161, 0
  %v3206 = vsel %vm3201, %v3162, 0
  %v3209 = vsel %vm3201, %v3163, 0
  %v3212 = vsel %vm3201, %v3164, 0
  %v3215 = vsel %vm3201, %v3165, 0
  %v3218 = vsel %vm3201, %v3166, 0
  %v3221 = vsel %vm3201, %v3167, 0
  %v3224 = vsel %vm3201, %v3168, 0
  %v3227 = vsel %vm3201, %v3169, 0
  %v3230 = vsel %vm3201, %v3170, 0
  %v3233 = vsel %vm3201, %v3171, 0
  %v3236 = vsel %vm3201, %v3172, 0
  %v3239 = vsel %vm3201, %v3173, 0
  %v3242 = vsel %vm3201, %v3174, 0
  %v3245 = vsel %vm3201, %v3175, 0
  %v3248 = vsel %vm3201, %v3176, 0
  %v3251 = vsel %vm3201, %v3177, 0
  %v3254 = vsel %vm3201, %v3178, 0
  %v3257 = vsel %vm3201, %v3179, 0
  %v3260 = vsel %vm3201, %v3180, 0
  %v3263 = vsel %vm3201, %v3181, 0
  %v3266 = vsel %vm3201, %v3182, 0
  %v3269 = vsel %vm3201, %v3183, 0
  %v3272 = vsel %vm3201, %v3184, 0
  %v3275 = vsel %vm3201, %v3185, 0
  %v3278 = vsel %vm3201, %v3186, 0
  %v3281 = vsel %vm3201, %v3187, 0
  %v3284 = vsel %vm3201, %v3188, 0
  %v3287 = vsel %vm3201, %v3189, 0
  %v3290 = vsel %vm3201, %v3190, 0
  %v3293 = vsel %vm3201, %v3191, 0
  %v3296 = vsel %vm3201, %v3192, 0
  %3298 = vmatprep.subr.mxu0 %v3194
  %3299 = vmatpush1.msra.mxu0 %v3193
  %3300 = vmatprep.subr.mxu0 %v3196
  %3301 = vmatpush1.msra.mxu0 %v3195
  %3302 = vmatprep.subr.mxu0 %v3198
  %3303 = vmatpush1.msra.mxu0 %v3197
  %3304 = vmatprep.subr.mxu0 %v3200
  %3305 = vmatpush1.msra.mxu0 %v3199
  %3306 = vmatprep.subr.mxu0 0.0
  %3307 = vmatpush1.msra.mxu0 0.0
  %3308 = vmatprep.subr.mxu0 0.0
  %3309 = vmatpush1.msra.mxu0 0.0
  %3310 = vmatprep.subr.mxu0 0.0
  %3311 = vmatpush1.msra.mxu0 0.0
  %3312 = vmatprep.subr.mxu0 0.0
  %3313 = vmatpush1.msra.mxu0 0.0
  %3314 = vmatprep.subr.mxu0 0.0
  %3315 = vmatpush1.msra.mxu0 0.0
  %3316 = vmatprep.subr.mxu0 0.0
  %3317 = vmatpush1.msra.mxu0 0.0
  %3318 = vmatprep.subr.mxu0 0.0
  %3319 = vmatpush1.msra.mxu0 0.0
  %3320 = vmatprep.subr.mxu0 0.0
  %3321 = vmatpush1.msra.mxu0 0.0
  %3322 = vmatprep.subr.mxu0 0.0
  %3323 = vmatpush1.msra.mxu0 0.0
  %3324 = vmatprep.subr.mxu0 0.0
  %3325 = vmatpush1.msra.mxu0 0.0
  %3326 = vmatprep.subr.mxu0 0.0
  %3327 = vmatpush1.msra.mxu0 0.0
  %3328 = vmatprep.subr.mxu0 0.0
  %3329 = vmatpush1.msra.mxu0 0.0
  %3330 = vmatprep.subr.mxu0 0.0
  %3331 = vmatpush1.msra.mxu0 0.0
  %3332 = vmatprep.subr.mxu0 0.0
  %3333 = vmatpush1.msra.mxu0 0.0
  %3334 = vmatprep.subr.mxu0 0.0
  %3335 = vmatpush1.msra.mxu0 0.0
  %3336 = vmatprep.subr.mxu0 0.0
  %3337 = vmatpush1.msra.mxu0 0.0
  %3338 = vmatprep.subr.mxu0 0.0
  %3339 = vmatpush1.msra.mxu0 0.0
  %3340 = vmatprep.subr.mxu0 0.0
  %3341 = vmatpush1.msra.mxu0 0.0
  %3342 = vmatprep.subr.mxu0 0.0
  %3343 = vmatpush1.msra.mxu0 0.0
  %3344 = vmatprep.subr.mxu0 0.0
  %3345 = vmatpush1.msra.mxu0 0.0
  %3346 = vmatprep.subr.mxu0 0.0
  %3347 = vmatpush1.msra.mxu0 0.0
  %3348 = vmatprep.subr.mxu0 0.0
  %3349 = vmatpush1.msra.mxu0 0.0
  %3350 = vmatprep.subr.mxu0 0.0
  %3351 = vmatpush1.msra.mxu0 0.0
  %3352 = vmatprep.subr.mxu0 0.0
  %3353 = vmatpush1.msra.mxu0 0.0
  %3354 = vmatprep.subr.mxu0 0.0
  %3355 = vmatpush1.msra.mxu0 0.0
  %3356 = vmatprep.subr.mxu0 0.0
  %3357 = vmatpush1.msra.mxu0 0.0
  %3358 = vmatprep.subr.mxu0 0.0
  %3359 = vmatpush1.msra.mxu0 0.0
  %3360 = vmatprep.subr.mxu0 0.0
  %3361 = vmatpush1.msra.mxu0 0.0
  %3362 = vmatprep.mubr.f32.mxu0 0.0
  %3363 = vmatmul.mubr.f32.gmra.mrb[0].mxu0 %v3203
  %v3364 = vpop.f32.mrb[0].mxu0
  %v3365 = vadd.f32 0.0, %v3364
  %v3366 = vpop.f32.mrb[0].mxu0
  %v3367 = vadd.f32 0.0, %v3366
  %3368 = vmatprep.mubr.f32.mxu0 0.0
  %3369 = vmatmul.mubr.f32.gmra.mrb[0].mxu0 %v3206
  %v3370 = vpop.f32.mrb[0].mxu0
  %v3371 = vadd.f32 0.0, %v3370
  %v3372 = vpop.f32.mrb[0].mxu0
  %v3373 = vadd.f32 0.0, %v3372
  %3374 = vmatprep.mubr.f32.mxu0 0.0
  %3375 = vmatmul.mubr.f32.gmra.mrb[0].mxu0 %v3209
  %v3376 = vpop.f32.mrb[0].mxu0
  %v3377 = vadd.f32 0.0, %v3376
  %v3378 = vpop.f32.mrb[0].mxu0
  %v3379 = vadd.f32 0.0, %v3378
  %3380 = vmatprep.mubr.f32.mxu0 0.0
  %3381 = vmatmul.mubr.f32.gmra.mrb[0].mxu0 %v3212
  %v3382 = vpop.f32.mrb[0].mxu0
  %v3383 = vadd.f32 0.0, %v3382
  %v3384 = vpop.f32.mrb[0].mxu0
  %v3385 = vadd.f32 0.0, %v3384
  %3386 = vmatprep.mubr.f32.mxu0 0.0
  %3387 = vmatmul.mubr.f32.gmra.mrb[0].mxu0 %v3215
  %v3388 = vpop.f32.mrb[0].mxu0
  %v3389 = vadd.f32 0.0, %v3388
  %v3390 = vpop.f32.mrb[0].mxu0
  %v3391 = vadd.f32 0.0, %v3390
  %3392 = vmatprep.mubr.f32.mxu0 0.0
  %3393 = vmatmul.mubr.f32.gmra.mrb[0].mxu0 %v3218
  %v3394 = vpop.f32.mrb[0].mxu0
  %v3395 = vadd.f32 0.0, %v3394
  %v3396 = vpop.f32.mrb[0].mxu0
  %v3397 = vadd.f32 0.0, %v3396
  %3398 = vmatprep.mubr.f32.mxu0 0.0
  %3399 = vmatmul.mubr.f32.gmra.mrb[0].mxu0 %v3221
  %v3400 = vpop.f32.mrb[0].mxu0
  %v3401 = vadd.f32 0.0, %v3400
  %v3402 = vpop.f32.mrb[0].mxu0
  %v3403 = vadd.f32 0.0, %v3402
  %3404 = vmatprep.mubr.f32.mxu0 0.0
  %3405 = vmatmul.mubr.f32.gmra.mrb[0].mxu0 %v3224
  %v3406 = vpop.f32.mrb[0].mxu0
  %v3407 = vadd.f32 0.0, %v3406
  %v3408 = vpop.f32.mrb[0].mxu0
  %v3409 = vadd.f32 0.0, %v3408
  %3410 = vmatprep.mubr.f32.mxu0 0.0
  %3411 = vmatmul.mubr.f32.gmra.mrb[0].mxu0 %v3227
  %v3412 = vpop.f32.mrb[0].mxu0
  %v3413 = vadd.f32 0.0, %v3412
  %v3414 = vpop.f32.mrb[0].mxu0
  %v3415 = vadd.f32 0.0, %v3414
  %3416 = vmatprep.mubr.f32.mxu0 0.0
  %3417 = vmatmul.mubr.f32.gmra.mrb[0].mxu0 %v3230
  %v3418 = vpop.f32.mrb[0].mxu0
  %v3419 = vadd.f32 0.0, %v3418
  %v3420 = vpop.f32.mrb[0].mxu0
  %v3421 = vadd.f32 0.0, %v3420
  %3422 = vmatprep.mubr.f32.mxu0 0.0
  %3423 = vmatmul.mubr.f32.gmra.mrb[0].mxu0 %v3233
  %v3424 = vpop.f32.mrb[0].mxu0
  %v3425 = vadd.f32 0.0, %v3424
  %v3426 = vpop.f32.mrb[0].mxu0
  %v3427 = vadd.f32 0.0, %v3426
  %3428 = vmatprep.mubr.f32.mxu0 0.0
  %3429 = vmatmul.mubr.f32.gmra.mrb[0].mxu0 %v3236
  %v3430 = vpop.f32.mrb[0].mxu0
  %v3431 = vadd.f32 0.0, %v3430
  %v3432 = vpop.f32.mrb[0].mxu0
  %v3433 = vadd.f32 0.0, %v3432
  %3434 = vmatprep.mubr.f32.mxu0 0.0
  %3435 = vmatmul.mubr.f32.gmra.mrb[0].mxu0 %v3239
  %v3436 = vpop.f32.mrb[0].mxu0
  %v3437 = vadd.f32 0.0, %v3436
  %v3438 = vpop.f32.mrb[0].mxu0
  %v3439 = vadd.f32 0.0, %v3438
  %3440 = vmatprep.mubr.f32.mxu0 0.0
  %3441 = vmatmul.mubr.f32.gmra.mrb[0].mxu0 %v3242
  %v3442 = vpop.f32.mrb[0].mxu0
  %v3443 = vadd.f32 0.0, %v3442
  %v3444 = vpop.f32.mrb[0].mxu0
  %v3445 = vadd.f32 0.0, %v3444
  %3446 = vmatprep.mubr.f32.mxu0 0.0
  %3447 = vmatmul.mubr.f32.gmra.mrb[0].mxu0 %v3245
  %v3448 = vpop.f32.mrb[0].mxu0
  %v3449 = vadd.f32 0.0, %v3448
  %v3450 = vpop.f32.mrb[0].mxu0
  %v3451 = vadd.f32 0.0, %v3450
  %3452 = vmatprep.mubr.f32.mxu0 0.0
  %3453 = vmatmul.mubr.f32.gmra.mrb[0].mxu0 %v3248
  %v3454 = vpop.f32.mrb[0].mxu0
  %v3455 = vadd.f32 0.0, %v3454
  %v3456 = vpop.f32.mrb[0].mxu0
  %v3457 = vadd.f32 0.0, %v3456
  %3458 = vmatprep.mubr.f32.mxu0 0.0
  %3459 = vmatmul.mubr.f32.gmra.mrb[0].mxu0 %v3251
  %v3460 = vpop.f32.mrb[0].mxu0
  %v3461 = vadd.f32 0.0, %v3460
  %v3462 = vpop.f32.mrb[0].mxu0
  %v3463 = vadd.f32 0.0, %v3462
  %3464 = vmatprep.mubr.f32.mxu0 0.0
  %3465 = vmatmul.mubr.f32.gmra.mrb[0].mxu0 %v3254
  %v3466 = vpop.f32.mrb[0].mxu0
  %v3467 = vadd.f32 0.0, %v3466
  %v3468 = vpop.f32.mrb[0].mxu0
  %v3469 = vadd.f32 0.0, %v3468
  %3470 = vmatprep.mubr.f32.mxu0 0.0
  %3471 = vmatmul.mubr.f32.gmra.mrb[0].mxu0 %v3257
  %v3472 = vpop.f32.mrb[0].mxu0
  %v3473 = vadd.f32 0.0, %v3472
  %v3474 = vpop.f32.mrb[0].mxu0
  %v3475 = vadd.f32 0.0, %v3474
  %3476 = vmatprep.mubr.f32.mxu0 0.0
  %3477 = vmatmul.mubr.f32.gmra.mrb[0].mxu0 %v3260
  %v3478 = vpop.f32.mrb[0].mxu0
  %v3479 = vadd.f32 0.0, %v3478
  %v3480 = vpop.f32.mrb[0].mxu0
  %v3481 = vadd.f32 0.0, %v3480
  %3482 = vmatprep.mubr.f32.mxu0 0.0
  %3483 = vmatmul.mubr.f32.gmra.mrb[0].mxu0 %v3263
  %v3484 = vpop.f32.mrb[0].mxu0
  %v3485 = vadd.f32 0.0, %v3484
  %v3486 = vpop.f32.mrb[0].mxu0
  %v3487 = vadd.f32 0.0, %v3486
  %3488 = vmatprep.mubr.f32.mxu0 0.0
  %3489 = vmatmul.mubr.f32.gmra.mrb[0].mxu0 %v3266
  %v3490 = vpop.f32.mrb[0].mxu0
  %v3491 = vadd.f32 0.0, %v3490
  %v3492 = vpop.f32.mrb[0].mxu0
  %v3493 = vadd.f32 0.0, %v3492
  %3494 = vmatprep.mubr.f32.mxu0 0.0
  %3495 = vmatmul.mubr.f32.gmra.mrb[0].mxu0 %v3269
  %v3496 = vpop.f32.mrb[0].mxu0
  %v3497 = vadd.f32 0.0, %v3496
  %v3498 = vpop.f32.mrb[0].mxu0
  %v3499 = vadd.f32 0.0, %v3498
  %3500 = vmatprep.mubr.f32.mxu0 0.0
  %3501 = vmatmul.mubr.f32.gmra.mrb[0].mxu0 %v3272
  %v3502 = vpop.f32.mrb[0].mxu0
  %v3503 = vadd.f32 0.0, %v3502
  %v3504 = vpop.f32.mrb[0].mxu0
  %v3505 = vadd.f32 0.0, %v3504
  %3506 = vmatprep.mubr.f32.mxu0 0.0
  %3507 = vmatmul.mubr.f32.gmra.mrb[0].mxu0 %v3275
  %v3508 = vpop.f32.mrb[0].mxu0
  %v3509 = vadd.f32 0.0, %v3508
  %v3510 = vpop.f32.mrb[0].mxu0
  %v3511 = vadd.f32 0.0, %v3510
  %3512 = vmatprep.mubr.f32.mxu0 0.0
  %3513 = vmatmul.mubr.f32.gmra.mrb[0].mxu0 %v3278
  %v3514 = vpop.f32.mrb[0].mxu0
  %v3515 = vadd.f32 0.0, %v3514
  %v3516 = vpop.f32.mrb[0].mxu0
  %v3517 = vadd.f32 0.0, %v3516
  %3518 = vmatprep.mubr.f32.mxu0 0.0
  %3519 = vmatmul.mubr.f32.gmra.mrb[0].mxu0 %v3281
  %v3520 = vpop.f32.mrb[0].mxu0
  %v3521 = vadd.f32 0.0, %v3520
  %v3522 = vpop.f32.mrb[0].mxu0
  %v3523 = vadd.f32 0.0, %v3522
  %3524 = vmatprep.mubr.f32.mxu0 0.0
  %3525 = vmatmul.mubr.f32.gmra.mrb[0].mxu0 %v3284
  %v3526 = vpop.f32.mrb[0].mxu0
  %v3527 = vadd.f32 0.0, %v3526
  %v3528 = vpop.f32.mrb[0].mxu0
  %v3529 = vadd.f32 0.0, %v3528
  %3530 = vmatprep.mubr.f32.mxu0 0.0
  %3531 = vmatmul.mubr.f32.gmra.mrb[0].mxu0 %v3287
  %v3532 = vpop.f32.mrb[0].mxu0
  %v3533 = vadd.f32 0.0, %v3532
  %v3534 = vpop.f32.mrb[0].mxu0
  %v3535 = vadd.f32 0.0, %v3534
  %3536 = vmatprep.mubr.f32.mxu0 0.0
  %3537 = vmatmul.mubr.f32.gmra.mrb[0].mxu0 %v3290
  %v3538 = vpop.f32.mrb[0].mxu0
  %v3539 = vadd.f32 0.0, %v3538
  %v3540 = vpop.f32.mrb[0].mxu0
  %v3541 = vadd.f32 0.0, %v3540
  %3542 = vmatprep.mubr.f32.mxu0 0.0
  %3543 = vmatmul.mubr.f32.gmra.mrb[0].mxu0 %v3293
  %v3544 = vpop.f32.mrb[0].mxu0
  %v3545 = vadd.f32 0.0, %v3544
  %v3546 = vpop.f32.mrb[0].mxu0
  %v3547 = vadd.f32 0.0, %v3546
  %3548 = vmatprep.mubr.f32.mxu0 0.0
  %3549 = vmatmul.mubr.f32.gmra.mrb[0].mxu0 %v3296
  %v3550 = vpop.f32.mrb[0].mxu0
  %v3551 = vadd.f32 0.0, %v3550
  %v3552 = vpop.f32.mrb[0].mxu0
  %v3553 = vadd.f32 0.0, %v3552
  %3554 = vdwg.mxu0
  %v3555 = vld [vmem:[%s3] sm:$0xff]
  %v3556 = vld [vmem:[%s3 + $0x8] sm:$0xff]
  %v3557 = vld [vmem:[%s3 + $0x10] sm:$0xff]
  %v3558 = vld [vmem:[%s3 + $0x18] sm:$0xff]
  %v3559 = vmul.f32 %v3365, %v3555
  %v3560 = vmul.f32 %v3367, %v3556
  %v3561 = vmul.f32 %v3371, %v3557
  %v3562 = vmul.f32 %v3373, %v3558
  %v3563 = vmul.f32 %v3377, %v3555
  %v3564 = vmul.f32 %v3379, %v3556
  %v3565 = vmul.f32 %v3383, %v3557
  %v3566 = vmul.f32 %v3385, %v3558
  %v3567 = vmul.f32 %v3389, %v3555
  %v3568 = vmul.f32 %v3391, %v3556
  %v3569 = vmul.f32 %v3395, %v3557
  %v3570 = vmul.f32 %v3397, %v3558
  %v3571 = vmul.f32 %v3401, %v3555
  %v3572 = vmul.f32 %v3403, %v3556
  %v3573 = vmul.f32 %v3407, %v3557
  %v3574 = vmul.f32 %v3409, %v3558
  %v3575 = vmul.f32 %v3413, %v3555
  %v3576 = vmul.f32 %v3415, %v3556
  %v3577 = vmul.f32 %v3419, %v3557
  %v3578 = vmul.f32 %v3421, %v3558
  %v3579 = vmul.f32 %v3425, %v3555
  %v3580 = vmul.f32 %v3427, %v3556
  %v3581 = vmul.f32 %v3431, %v3557
  %v3582 = vmul.f32 %v3433, %v3558
  %v3583 = vmul.f32 %v3437, %v3555
  %v3584 = vmul.f32 %v3439, %v3556
  %v3585 = vmul.f32 %v3443, %v3557
  %v3586 = vmul.f32 %v3445, %v3558
  %v3587 = vmul.f32 %v3449, %v3555
  %v3588 = vmul.f32 %v3451, %v3556
  %v3589 = vmul.f32 %v3455, %v3557
  %v3590 = vmul.f32 %v3457, %v3558
  %v3591 = vmul.f32 %v3461, %v3555
  %v3592 = vmul.f32 %v3463, %v3556
  %v3593 = vmul.f32 %v3467, %v3557
  %v3594 = vmul.f32 %v3469, %v3558
  %v3595 = vmul.f32 %v3473, %v3555
  %v3596 = vmul.f32 %v3475, %v3556
  %v3597 = vmul.f32 %v3479, %v3557
  %v3598 = vmul.f32 %v3481, %v3558
  %v3599 = vmul.f32 %v3485, %v3555
  %v3600 = vmul.f32 %v3487, %v3556
  %v3601 = vmul.f32 %v3491, %v3557
  %v3602 = vmul.f32 %v3493, %v3558
  %v3603 = vmul.f32 %v3497, %v3555
  %v3604 = vmul.f32 %v3499, %v3556
  %v3605 = vmul.f32 %v3503, %v3557
  %v3606 = vmul.f32 %v3505, %v3558
  %v3607 = vmul.f32 %v3509, %v3555
  %v3608 = vmul.f32 %v3511, %v3556
  %v3609 = vmul.f32 %v3515, %v3557
  %v3610 = vmul.f32 %v3517, %v3558
  %v3611 = vmul.f32 %v3521, %v3555
  %v3612 = vmul.f32 %v3523, %v3556
  %v3613 = vmul.f32 %v3527, %v3557
  %v3614 = vmul.f32 %v3529, %v3558
  %v3615 = vmul.f32 %v3533, %v3555
  %v3616 = vmul.f32 %v3535, %v3556
  %v3617 = vmul.f32 %v3539, %v3557
  %v3618 = vmul.f32 %v3541, %v3558
  %v3619 = vmul.f32 %v3545, %v3555
  %v3620 = vmul.f32 %v3547, %v3556
  %v3621 = vmul.f32 %v3551, %v3557
  %v3622 = vmul.f32 %v3553, %v3558
  %v3623 = vld [vmem:[%s5] sm:$0xff]
  %v3624 = vld [vmem:[%s5 + $0x8] sm:$0xff]
  %v3625 = vld [vmem:[%s5 + $0x10] sm:$0xff]
  %v3626 = vld [vmem:[%s5 + $0x18] sm:$0xff]
  %v3627 = vld [vmem:[%s5 + $0x20] sm:$0xff]
  %v3628 = vld [vmem:[%s5 + $0x28] sm:$0xff]
  %v3629 = vld [vmem:[%s5 + $0x30] sm:$0xff]
  %v3630 = vld [vmem:[%s5 + $0x38] sm:$0xff]
  %v3631 = vld [vmem:[%s5 + $0x40] sm:$0xff]
  %v3632 = vld [vmem:[%s5 + $0x48] sm:$0xff]
  %v3633 = vld [vmem:[%s5 + $0x50] sm:$0xff]
  %v3634 = vld [vmem:[%s5 + $0x58] sm:$0xff]
  %v3635 = vld [vmem:[%s5 + $0x60] sm:$0xff]
  %v3636 = vld [vmem:[%s5 + $0x68] sm:$0xff]
  %v3637 = vld [vmem:[%s5 + $0x70] sm:$0xff]
  %v3638 = vld [vmem:[%s5 + $0x78] sm:$0xff]
  %v3639 = vld [vmem:[%s5 + $0x80] sm:$0xff]
  %v3640 = vld [vmem:[%s5 + $0x88] sm:$0xff]
  %v3641 = vld [vmem:[%s5 + $0x90] sm:$0xff]
  %v3642 = vld [vmem:[%s5 + $0x98] sm:$0xff]
  %v3643 = vld [vmem:[%s5 + $0xa0] sm:$0xff]
  %v3644 = vld [vmem:[%s5 + $0xa8] sm:$0xff]
  %v3645 = vld [vmem:[%s5 + $0xb0] sm:$0xff]
  %v3646 = vld [vmem:[%s5 + $0xb8] sm:$0xff]
  %v3647 = vld [vmem:[%s5 + $0xc0] sm:$0xff]
  %v3648 = vld [vmem:[%s5 + $0xc8] sm:$0xff]
  %v3649 = vld [vmem:[%s5 + $0xd0] sm:$0xff]
  %v3650 = vld [vmem:[%s5 + $0xd8] sm:$0xff]
  %v3651 = vld [vmem:[%s5 + $0xe0] sm:$0xff]
  %v3652 = vld [vmem:[%s5 + $0xe8] sm:$0xff]
  %v3653 = vld [vmem:[%s5 + $0xf0] sm:$0xff]
  %v3654 = vld [vmem:[%s5 + $0xf8] sm:$0xff]
  %v3655 = vld [vmem:[%s2] sm:$0xff]
  %v3656 = vld [vmem:[%s2 + $0x8] sm:$0xff]
  %v3657 = vld [vmem:[%s2 + $0x10] sm:$0xff]
  %v3658 = vld [vmem:[%s2 + $0x18] sm:$0xff]
  %v3659 = vld [vmem:[%s2 + $0x20] sm:$0xff]
  %v3660 = vld [vmem:[%s2 + $0x28] sm:$0xff]
  %v3661 = vld [vmem:[%s2 + $0x30] sm:$0xff]
  %v3662 = vld [vmem:[%s2 + $0x38] sm:$0xff]
  %3663 = vxpose.xlu0.b32.start [1/16] %v3623, 128
  %3664 = vxpose.xlu0.b32.cont [2/16] %v3624, 128
  %3665 = vxpose.xlu0.b32.cont [3/16] %v3625, 128
  %3666 = vxpose.xlu0.b32.cont [4/16] %v3626, 128
  %3667 = vxpose.xlu0.b32.cont [5/16] %v3627, 128
  %3668 = vxpose.xlu0.b32.cont [6/16] %v3628, 128
  %3669 = vxpose.xlu0.b32.cont [7/16] %v3629, 128
  %3670 = vxpose.xlu0.b32.cont [8/16] %v3630, 128
  %3671 = vxpose.xlu0.b32.cont [9/16] %v3631, 128
  %3672 = vxpose.xlu0.b32.cont [10/16] %v3632, 128
  %3673 = vxpose.xlu0.b32.cont [11/16] %v3633, 128
  %3674 = vxpose.xlu0.b32.cont [12/16] %v3634, 128
  %3675 = vxpose.xlu0.b32.cont [13/16] %v3635, 128
  %3676 = vxpose.xlu0.b32.cont [14/16] %v3636, 128
  %3677 = vxpose.xlu0.b32.cont [15/16] %v3637, 128
  %3678 = vxpose.xlu0.b32.end [16/16] %v3638, 128
  %v3679 = vpop.trf.xlu0
  %v3680 = vpop.trf.xlu0
  %v3681 = vpop.trf.xlu0
  %v3682 = vpop.trf.xlu0
  %v3683 = vpop.trf.xlu0
  %v3684 = vpop.trf.xlu0
  %v3685 = vpop.trf.xlu0
  %v3686 = vpop.trf.xlu0
  %v3687 = vpop.trf.xlu0
  %v3688 = vpop.trf.xlu0
  %v3689 = vpop.trf.xlu0
  %v3690 = vpop.trf.xlu0
  %v3691 = vpop.trf.xlu0
  %v3692 = vpop.trf.xlu0
  %v3693 = vpop.trf.xlu0
  %v3694 = vpop.trf.xlu0
  %3695 = vxpose.xlu0.b32.start [1/16] %v3639, 128
  %3696 = vxpose.xlu0.b32.cont [2/16] %v3640, 128
  %3697 = vxpose.xlu0.b32.cont [3/16] %v3641, 128
  %3698 = vxpose.xlu0.b32.cont [4/16] %v3642, 128
  %3699 = vxpose.xlu0.b32.cont [5/16] %v3643, 128
  %3700 = vxpose.xlu0.b32.cont [6/16] %v3644, 128
  %3701 = vxpose.xlu0.b32.cont [7/16] %v3645, 128
  %3702 = vxpose.xlu0.b32.cont [8/16] %v3646, 128
  %3703 = vxpose.xlu0.b32.cont [9/16] %v3647, 128
  %3704 = vxpose.xlu0.b32.cont [10/16] %v3648, 128
  %3705 = vxpose.xlu0.b32.cont [11/16] %v3649, 128
  %3706 = vxpose.xlu0.b32.cont [12/16] %v3650, 128
  %3707 = vxpose.xlu0.b32.cont [13/16] %v3651, 128
  %3708 = vxpose.xlu0.b32.cont [14/16] %v3652, 128
  %3709 = vxpose.xlu0.b32.cont [15/16] %v3653, 128
  %3710 = vxpose.xlu0.b32.end [16/16] %v3654, 128
  %v3711 = vpop.trf.xlu0
  %v3712 = vpop.trf.xlu0
  %v3713 = vpop.trf.xlu0
  %v3714 = vpop.trf.xlu0
  %v3715 = vpop.trf.xlu0
  %v3716 = vpop.trf.xlu0
  %v3717 = vpop.trf.xlu0
  %v3718 = vpop.trf.xlu0
  %v3719 = vpop.trf.xlu0
  %v3720 = vpop.trf.xlu0
  %v3721 = vpop.trf.xlu0
  %v3722 = vpop.trf.xlu0
  %v3723 = vpop.trf.xlu0
  %v3724 = vpop.trf.xlu0
  %v3725 = vpop.trf.xlu0
  %v3726 = vpop.trf.xlu0
  %3727 = vmatprep.subr.mxu0 %v3560
  %3728 = vmatpush1.xpose.msra.mxu0 %v3559
  %3729 = vmatprep.subr.mxu0 %v3562
  %3730 = vmatpush1.xpose.msra.mxu0 %v3561
  %3731 = vmatprep.subr.mxu0 %v3564
  %3732 = vmatpush1.xpose.msra.mxu0 %v3563
  %3733 = vmatprep.subr.mxu0 %v3566
  %3734 = vmatpush1.xpose.msra.mxu0 %v3565
  %3735 = vmatprep.subr.mxu0 %v3568
  %3736 = vmatpush1.xpose.msra.mxu0 %v3567
  %3737 = vmatprep.subr.mxu0 %v3570
  %3738 = vmatpush1.xpose.msra.mxu0 %v3569
  %3739 = vmatprep.subr.mxu0 %v3572
  %3740 = vmatpush1.xpose.msra.mxu0 %v3571
  %3741 = vmatprep.subr.mxu0 %v3574
  %3742 = vmatpush1.xpose.msra.mxu0 %v3573
  %3743 = vmatprep.subr.mxu0 %v3576
  %3744 = vmatpush1.xpose.msra.mxu0 %v3575
  %3745 = vmatprep.subr.mxu0 %v3578
  %3746 = vmatpush1.xpose.msra.mxu0 %v3577
  %3747 = vmatprep.subr.mxu0 %v3580
  %3748 = vmatpush1.xpose.msra.mxu0 %v3579
  %3749 = vmatprep.subr.mxu0 %v3582
  %3750 = vmatpush1.xpose.msra.mxu0 %v3581
  %3751 = vmatprep.subr.mxu0 %v3584
  %3752 = vmatpush1.xpose.msra.mxu0 %v3583
  %3753 = vmatprep.subr.mxu0 %v3586
  %3754 = vmatpush1.xpose.msra.mxu0 %v3585
  %3755 = vmatprep.subr.mxu0 %v3588
  %3756 = vmatpush1.xpose.msra.mxu0 %v3587
  %3757 = vmatprep.subr.mxu0 %v3590
  %3758 = vmatpush1.xpose.msra.mxu0 %v3589
  %3759 = vmatprep.subr.mxu0 %v3592
  %3760 = vmatpush1.xpose.msra.mxu0 %v3591
  %3761 = vmatprep.subr.mxu0 %v3594
  %3762 = vmatpush1.xpose.msra.mxu0 %v3593
  %3763 = vmatprep.subr.mxu0 %v3596
  %3764 = vmatpush1.xpose.msra.mxu0 %v3595
  %3765 = vmatprep.subr.mxu0 %v3598
  %3766 = vmatpush1.xpose.msra.mxu0 %v3597
  %3767 = vmatprep.subr.mxu0 %v3600
  %3768 = vmatpush1.xpose.msra.mxu0 %v3599
  %3769 = vmatprep.subr.mxu0 %v3602
  %3770 = vmatpush1.xpose.msra.mxu0 %v3601
  %3771 = vmatprep.subr.mxu0 %v3604
  %3772 = vmatpush1.xpose.msra.mxu0 %v3603
  %3773 = vmatprep.subr.mxu0 %v3606
  %3774 = vmatpush1.xpose.msra.mxu0 %v3605
  %3775 = vmatprep.subr.mxu0 %v3608
  %3776 = vmatpush1.xpose.msra.mxu0 %v3607
  %3777 = vmatprep.subr.mxu0 %v3610
  %3778 = vmatpush1.xpose.msra.mxu0 %v3609
  %3779 = vmatprep.subr.mxu0 %v3612
  %3780 = vmatpush1.xpose.msra.mxu0 %v3611
  %3781 = vmatprep.subr.mxu0 %v3614
  %3782 = vmatpush1.xpose.msra.mxu0 %v3613
  %3783 = vmatprep.subr.mxu0 %v3616
  %3784 = vmatpush1.xpose.msra.mxu0 %v3615
  %3785 = vmatprep.subr.mxu0 %v3618
  %3786 = vmatpush1.xpose.msra.mxu0 %v3617
  %3787 = vmatprep.subr.mxu0 %v3620
  %3788 = vmatpush1.xpose.msra.mxu0 %v3619
  %3789 = vmatprep.subr.mxu0 %v3622
  %3790 = vmatpush1.xpose.msra.mxu0 %v3621
  %3791 = vmatprep.mubr.f32.mxu0 %v3711
  %3792 = vmatmul.mubr.f32.gmra.mrb[0].mxu0 %v3679
  %v3793 = vpop.f32.mrb[0].mxu0
  %v3794 = vadd.f32 %v3655, %v3793
  %v3795 = vpop.f32.mrb[0].mxu0
  %v3796 = vadd.f32 %v3656, %v3795
  %3797 = vmatprep.mubr.f32.mxu0 %v3712
  %3798 = vmatmul.mubr.f32.gmra.mrb[0].mxu0 %v3680
  %v3799 = vpop.f32.mrb[0].mxu0
  %v3800 = vadd.f32 %v3657, %v3799
  %v3801 = vpop.f32.mrb[0].mxu0
  %v3802 = vadd.f32 %v3658, %v3801
  %3803 = vmatprep.mubr.f32.mxu0 %v3713
  %3804 = vmatmul.mubr.f32.gmra.mrb[0].mxu0 %v3681
  %v3805 = vpop.f32.mrb[0].mxu0
  %v3806 = vadd.f32 %v3659, %v3805
  %v3807 = vpop.f32.mrb[0].mxu0
  %v3808 = vadd.f32 %v3660, %v3807
  %3809 = vmatprep.mubr.f32.mxu0 %v3714
  %3810 = vmatmul.mubr.f32.gmra.mrb[0].mxu0 %v3682
  %v3811 = vpop.f32.mrb[0].mxu0
  %v3812 = vadd.f32 %v3661, %v3811
  %v3813 = vpop.f32.mrb[0].mxu0
  %v3814 = vadd.f32 %v3662, %v3813
  %3815 = vdwg.mxu0
  %vm3816 = vcmp.gt.f32.partialorder %v3794, 0.0
  %vm3817 = vcmp.gt.f32.partialorder %v3796, 0.0
  %vm3818 = vcmp.gt.f32.partialorder %v3800, 0.0
  %vm3819 = vcmp.gt.f32.partialorder %v3802, 0.0
  %vm3820 = vcmp.gt.f32.partialorder %v3806, 0.0
  %vm3821 = vcmp.gt.f32.partialorder %v3808, 0.0
  %vm3822 = vcmp.gt.f32.partialorder %v3812, 0.0
  %vm3823 = vcmp.gt.f32.partialorder %v3814, 0.0
  %v3824 = vmul.f32 %v3794, 0.01
  %v3825 = vmul.f32 %v3796, 0.01
  %v3826 = vmul.f32 %v3800, 0.01
  %v3827 = vmul.f32 %v3802, 0.01
  %v3828 = vmul.f32 %v3806, 0.01
  %v3829 = vmul.f32 %v3808, 0.01
  %v3830 = vmul.f32 %v3812, 0.01
  %v3831 = vmul.f32 %v3814, 0.01
  %v3832 = vsel %vm3816, %v3794, %v3824
  %v3833 = vsel %vm3817, %v3796, %v3825
  %v3834 = vsel %vm3818, %v3800, %v3826
  %v3835 = vsel %vm3819, %v3802, %v3827
  %v3836 = vsel %vm3820, %v3806, %v3828
  %v3837 = vsel %vm3821, %v3808, %v3829
  %v3838 = vsel %vm3822, %v3812, %v3830
  %v3839 = vsel %vm3823, %v3814, %v3831
  %3840 = vst [vmem:[%s6] sm:$0xff] %v3832
  %3841 = vst [vmem:[%s6 + $0x8] sm:$0xff] %v3833
  %3842 = vst [vmem:[%s6 + $0x10] sm:$0xff] %v3834
  %3843 = vst [vmem:[%s6 + $0x18] sm:$0xff] %v3835
  %3844 = vst [vmem:[%s6 + $0x20] sm:$0xff] %v3836
  %3845 = vst [vmem:[%s6 + $0x28] sm:$0xff] %v3837
  %3846 = vst [vmem:[%s6 + $0x30] sm:$0xff] %v3838
  %3847 = vst [vmem:[%s6 + $0x38] sm:$0xff] %v3839
  // Predicated region
  $region26: #{_forward_impl.1} parent=0 // pred_check
    _
  $region27: #{_forward_impl.1} parent=0 // pred_check_branch
    %3849 = sbr.rel (0) target = $region29
  $region28: #{_forward_impl.1} parent=0 // pred_region
    _
  $region29: #{_forward_impl.1} parent=0 // pred_fallthru
    _
  // Predicated region
  $region30: #{_forward_impl.1} parent=0 // pred_check
    _
  $region31: #{_forward_impl.1} parent=0 // pred_check_branch
    %3851 = sbr.rel (0) target = $region33
  $region32: #{_forward_impl.1} parent=0 // pred_region
    _
  $region33: #{_forward_impl.1} parent=0 // pred_fallthru
    _

</llo_original>
